<compile_context>
chip_gen: v5e
topology: v5e:2x2
jax: 0.10.0
libtpu: 0.0.40
codegen_flags: <defaults>
</compile_context>

<pallas_src>
import jax
import jax.numpy as jnp
from jax.experimental import pallas as pl
from jax.experimental.pallas import tpu as pltpu

EPS = 1e-5
TILE_CIN_PREF = 256          # preferred Cin reduction-tile size
MATMUL_IN_BF16 = False       # set True on v5e if ~1e-3 tolerance is acceptable


def _pick_cin_tile(cin):
    for t in (TILE_CIN_PREF, 128, 64, 32, 16, 8):
        if cin % t == 0:
            return t
    return cin


def _num_cout_blocks(cout):
    # Split Cout across the two TensorCores on v7x; single block elsewhere.
    try:
        kind = jax.devices()[0].device_kind.lower()
    except Exception:
        kind = ""
    if "v7" in kind and cout % 2 == 0 and (cout // 2) % 8 == 0:
        return 2
    return 1


# -----------------------------------------------------------------------------
# Kernel.  Grid = (cout_blocks, n_cin_tiles); semantics ("parallel","arbitrary").
#   x_ref, r_ref : (TILE_CIN, M)       input / residual slice, channels-major
#   w_ref        : (COUT_BLK, TILE_CIN) 1x1-conv weight slice
#   g1,b1        : (TILE_CIN, 1)        BN1 affine params for this Cin tile
#   g2,b2        : (COUT_BLK, 1)        BN2 affine params for this Cout block
#   o_ref        : (COUT_BLK, M)        output block, channels-major
#   acc_ref      : (COUT_BLK, M) f32    matmul accumulator (VMEM scratch)
# -----------------------------------------------------------------------------
def _fused_kernel(x_ref, r_ref, w_ref, g1_ref, b1_ref, g2_ref, b2_ref,
                  o_ref, acc_ref):
    k = pl.program_id(1)

    @pl.when(k == 0)
    def _():
        acc_ref[...] = jnp.zeros_like(acc_ref)

    x = x_ref[...]                                   # (TILE_CIN, M)
    m = x.shape[1]
    inv_m = 1.0 / m

    # ---- BatchNorm2d78: per-channel batch stats (local to this Cin tile) ----
    mean1 = jnp.sum(x, axis=1, keepdims=True) * inv_m              # (TILE_CIN,1)
    var1 = jnp.sum((x - mean1) * (x - mean1), axis=1, keepdims=True) * inv_m
    scale1 = jax.lax.rsqrt(var1 + EPS) * g1_ref[...]
    shift1 = b1_ref[...] - mean1 * scale1

    # ---- fused BN1 + residual add + ReLU (no centered tensor materialized) --
    a = jnp.maximum(x * scale1 + shift1 + r_ref[...], 0.0)         # (TILE_CIN,M)

    # ---- partial 1x1 conv (channel matmul on the MXU), f32 accumulation -----
    w = w_ref[...]
    if MATMUL_IN_BF16:
        a = a.astype(jnp.bfloat16)
        w = w.astype(jnp.bfloat16)
    acc_ref[...] += jnp.dot(w, a, preferred_element_type=jnp.float32)

    # ---- finalize: BatchNorm2d79 over the fully-accumulated y ---------------
    @pl.when(k == pl.num_programs(1) - 1)
    def _():
        y = acc_ref[...]                                           # (COUT_BLK,M)
        mean2 = jnp.sum(y, axis=1, keepdims=True) * inv_m
        var2 = jnp.sum((y - mean2) * (y - mean2), axis=1, keepdims=True) * inv_m
        scale2 = jax.lax.rsqrt(var2 + EPS) * g2_ref[...]
        shift2 = b2_ref[...] - mean2 * scale2
        o_ref[...] = y * scale2 + shift2


def _fused_call(x_cm, r_cm, w, g1, b1, g2, b2):
    cin, m = x_cm.shape
    cout = w.shape[0]

    tile_cin = _pick_cin_tile(cin)
    n_k = cin // tile_cin
    n_co = _num_cout_blocks(cout)
    cout_blk = cout // n_co

    grid_spec = pltpu.PrefetchScalarGridSpec(
        num_scalar_prefetch=0,
        grid=(n_co, n_k),
        in_specs=[
            pl.BlockSpec((tile_cin, m), lambda co, k: (k, 0)),        # x
            pl.BlockSpec((tile_cin, m), lambda co, k: (k, 0)),        # residual
            pl.BlockSpec((cout_blk, tile_cin), lambda co, k: (co, k)),  # weight
            pl.BlockSpec((tile_cin, 1), lambda co, k: (k, 0)),        # g1
            pl.BlockSpec((tile_cin, 1), lambda co, k: (k, 0)),        # b1
            pl.BlockSpec((cout_blk, 1), lambda co, k: (co, 0)),       # g2
            pl.BlockSpec((cout_blk, 1), lambda co, k: (co, 0)),       # b2
        ],
        out_specs=pl.BlockSpec((cout_blk, m), lambda co, k: (co, 0)),
        scratch_shapes=[pltpu.VMEM((cout_blk, m), jnp.float32)],
    )

    return pl.pallas_call(
        _fused_kernel,
        out_shape=jax.ShapeDtypeStruct((cout, m), jnp.float32),
        grid_spec=grid_spec,
        compiler_params=pltpu.CompilerParams(
            dimension_semantics=("parallel", "arbitrary"),
            vmem_limit_bytes=24 * 1024 * 1024),
    )(x_cm, r_cm, w, g1, b1, g2, b2)


# -----------------------------------------------------------------------------
# Full forward: NCHW in, NCHW out.
# -----------------------------------------------------------------------------
def model_forward(x259, x252, params):
    N, Cin, H, W = x259.shape
    Cout = params["w"].shape[0]
    M = N * H * W

    # Channels-major (C, tokens).  For N == 1 (the module's case) this is a
    # pure reshape of the NCHW buffer -> no transpose / extra HBM pass.
    if N == 1:
        x_cm = x259.reshape(Cin, M)
        r_cm = x252.reshape(Cin, M)
    else:
        x_cm = jnp.transpose(x259, (1, 0, 2, 3)).reshape(Cin, M)
        r_cm = jnp.transpose(x252, (1, 0, 2, 3)).reshape(Cin, M)

    g1 = params["g1"].reshape(Cin, 1)
    b1 = params["b1"].reshape(Cin, 1)
    g2 = params["g2"].reshape(Cout, 1)
    b2 = params["b2"].reshape(Cout, 1)

    out_cm = _fused_call(x_cm, r_cm, params["w"], g1, b1, g2, b2)  # (Cout, M)

    if N == 1:
        return out_cm.reshape(1, Cout, H, W)
    return out_cm.reshape(Cout, N, H, W).transpose(1, 0, 2, 3)


# -----------------------------------------------------------------------------
# Pure-JAX reference (training-mode BatchNorm with biased batch variance).
# -----------------------------------------------------------------------------
def reference_forward(x259, x252, params):
    def bn(x, g, b):
        mean = jnp.mean(x, axis=(0, 2, 3), keepdims=True)
        var = jnp.mean((x - mean) ** 2, axis=(0, 2, 3), keepdims=True)
        return (x - mean) * jax.lax.rsqrt(var + EPS) * g[None, :, None, None] \
            + b[None, :, None, None]

    x = bn(x259, params["g1"], params["b1"])
    x = jnp.maximum(x + x252, 0.0)
    x = jnp.einsum("nchw,oc->nohw", x, params["w"])   # 1x1 conv, no bias
    return bn(x, params["g2"], params["b2"])


if __name__ == "__main__":
    # Small shapes consistent with the module (orig: N=1, 1024->256, 28x28).
    # Cin=512 with TILE_CIN=256 exercises the multi-step accumulation path.
    N, C_IN, C_OUT, H, W = 1, 512, 128, 16, 16

    key = jax.random.PRNGKey(0)
    k1, k2, k3, k4, k5, k6, k7 = jax.random.split(key, 7)

    x259 = jax.random.normal(k1, (N, C_IN, H, W), dtype=jnp.float32)
    x252 = jax.random.normal(k2, (N, C_IN, H, W), dtype=jnp.float32)

    params = {
        "g1": 1.0 + 0.1 * jax.random.normal(k3, (C_IN,), dtype=jnp.float32),
        "b1": 0.1 * jax.random.normal(k4, (C_IN,), dtype=jnp.float32),
        "w": jax.random.normal(k5, (C_OUT, C_IN), dtype=jnp.float32)
             * (1.0 / jnp.sqrt(C_IN).astype(jnp.float32)),
        "g2": 1.0 + 0.1 * jax.random.normal(k6, (C_OUT,), dtype=jnp.float32),
        "b2": 0.1 * jax.random.normal(k7, (C_OUT,), dtype=jnp.float32),
    }

    out = model_forward(x259, x252, params)
    out = jax.block_until_ready(out)

    ref = reference_forward(x259, x252, params)
    assert out.shape == (N, C_OUT, H, W)
    assert jnp.allclose(out, ref, rtol=1e-4, atol=2e-4), "mismatch vs reference"

    print("KERNEL_OK")
</pallas_src>

<mosaic_0001>
module attributes {stable_mosaic.version = 11 : i64} {
  func.func @_fused_kernel(%arg0: i32, %arg1: i32, %arg2: memref<256x256xf32, #tpu.memory_space<vmem>>, %arg3: memref<256x256xf32, #tpu.memory_space<vmem>>, %arg4: memref<128x256xf32, #tpu.memory_space<vmem>>, %arg5: memref<256x1xf32, #tpu.memory_space<vmem>>, %arg6: memref<256x1xf32, #tpu.memory_space<vmem>>, %arg7: memref<128x1xf32, #tpu.memory_space<vmem>>, %arg8: memref<128x1xf32, #tpu.memory_space<vmem>>, %arg9: memref<128x256xf32, #tpu.memory_space<vmem>>, %arg10: memref<128x256xf32, #tpu.memory_space<vmem>>) attributes {dimension_semantics = [#tpu.dimension_semantics<parallel>, #tpu.dimension_semantics<arbitrary>], iteration_bounds = array<i64: 1, 2>, scalar_prefetch = 0 : i64, scratch_operands = 1 : i64, tpu.core_type = #tpu.core_type<tc>, window_params = [{transform_indices = @transform_0, window_bounds = array<i64: 256, 256>}, {transform_indices = @transform_1, window_bounds = array<i64: 256, 256>}, {transform_indices = @transform_2, window_bounds = array<i64: 128, 256>}, {transform_indices = @transform_3, window_bounds = array<i64: 256, 1>}, {transform_indices = @transform_4, window_bounds = array<i64: 256, 1>}, {transform_indices = @transform_5, window_bounds = array<i64: 128, 1>}, {transform_indices = @transform_6, window_bounds = array<i64: 128, 1>}, {transform_indices = @transform_7, window_bounds = array<i64: 128, 256>}]} {
    %c0_i32 = arith.constant 0 : i32
    %0 = arith.cmpi eq, %arg1, %c0_i32 : i32
    %1 = arith.extui %0 : i1 to i32
    %c0_i32_0 = arith.constant 0 : i32
    %2 = arith.cmpi ne, %1, %c0_i32_0 : i32
    scf.if %2 {
      %cst_21 = arith.constant 0.000000e+00 : f32
      %41 = vector.broadcast %cst_21 : f32 to vector<128x256xf32>
      %c0_22 = arith.constant 0 : index
      %c0_23 = arith.constant 0 : index
      %42 = vector.load %arg10[%c0_22, %c0_23] : memref<128x256xf32, #tpu.memory_space<vmem>>, vector<128x256xf32>
      tpu.vector_store %arg10[%c0_22, %c0_23], %41 {strides = array<i32>} : memref<128x256xf32, #tpu.memory_space<vmem>>, vector<128x256xf32>,
    } else {
    }
    %c0 = arith.constant 0 : index
    %c0_1 = arith.constant 0 : index
    %3 = vector.load %arg2[%c0, %c0_1] : memref<256x256xf32, #tpu.memory_space<vmem>>, vector<256x256xf32>
    %cst = arith.constant dense<0.000000e+00> : vector<256xf32>
    %4 = vector.multi_reduction <add>, %3, %cst [1] : vector<256x256xf32> to vector<256xf32>
    %5 = vector.shape_cast %4 : vector<256xf32> to vector<256x1xf32>
    %cst_2 = arith.constant 3.906250e-03 : f32
    %6 = vector.broadcast %cst_2 : f32 to vector<256x1xf32>
    %7 = arith.mulf %5, %6 : vector<256x1xf32>
    %8 = vector.broadcast %7 : vector<256x1xf32> to vector<256x256xf32>
    %9 = arith.subf %3, %8 : vector<256x256xf32>
    %10 = vector.broadcast %7 : vector<256x1xf32> to vector<256x256xf32>
    %11 = arith.subf %3, %10 : vector<256x256xf32>
    %12 = arith.mulf %9, %11 : vector<256x256xf32>
    %cst_3 = arith.constant dense<0.000000e+00> : vector<256xf32>
    %13 = vector.multi_reduction <add>, %12, %cst_3 [1] : vector<256x256xf32> to vector<256xf32>
    %14 = vector.shape_cast %13 : vector<256xf32> to vector<256x1xf32>
    %cst_4 = arith.constant 3.906250e-03 : f32
    %15 = vector.broadcast %cst_4 : f32 to vector<256x1xf32>
    %16 = arith.mulf %14, %15 : vector<256x1xf32>
    %cst_5 = arith.constant 9.99999974E-6 : f32
    %17 = vector.broadcast %cst_5 : f32 to vector<256x1xf32>
    %18 = arith.addf %16, %17 : vector<256x1xf32>
    %19 = math.rsqrt %18 : vector<256x1xf32>
    %c0_6 = arith.constant 0 : index
    %c0_7 = arith.constant 0 : index
    %20 = vector.load %arg5[%c0_6, %c0_7] : memref<256x1xf32, #tpu.memory_space<vmem>>, vector<256x1xf32>
    %21 = arith.mulf %19, %20 : vector<256x1xf32>
    %c0_8 = arith.constant 0 : index
    %c0_9 = arith.constant 0 : index
    %22 = vector.load %arg6[%c0_8, %c0_9] : memref<256x1xf32, #tpu.memory_space<vmem>>, vector<256x1xf32>
    %23 = arith.mulf %7, %21 : vector<256x1xf32>
    %24 = arith.subf %22, %23 : vector<256x1xf32>
    %25 = vector.broadcast %21 : vector<256x1xf32> to vector<256x256xf32>
    %26 = arith.mulf %3, %25 : vector<256x256xf32>
    %27 = vector.broadcast %24 : vector<256x1xf32> to vector<256x256xf32>
    %28 = arith.addf %26, %27 : vector<256x256xf32>
    %c0_10 = arith.constant 0 : index
    %c0_11 = arith.constant 0 : index
    %29 = vector.load %arg3[%c0_10, %c0_11] : memref<256x256xf32, #tpu.memory_space<vmem>>, vector<256x256xf32>
    %30 = arith.addf %28, %29 : vector<256x256xf32>
    %cst_12 = arith.constant 0.000000e+00 : f32
    %31 = vector.broadcast %cst_12 : f32 to vector<256x256xf32>
    %32 = arith.maximumf %30, %31 : vector<256x256xf32>
    %c0_13 = arith.constant 0 : index
    %c0_14 = arith.constant 0 : index
    %33 = vector.load %arg4[%c0_13, %c0_14] : memref<128x256xf32, #tpu.memory_space<vmem>>, vector<128x256xf32>
    %c0_15 = arith.constant 0 : index
    %c0_16 = arith.constant 0 : index
    %34 = vector.load %arg10[%c0_15, %c0_16] : memref<128x256xf32, #tpu.memory_space<vmem>>, vector<128x256xf32>
    %cst_17 = arith.constant dense<0.000000e+00> : vector<128x256xf32>
    %35 = tpu.matmul %33, %32, %cst_17 {dimension_numbers = #tpu.dot_dimension_numbers<[1], [0], [0], [1], [0, 0, 1, 1], [], []>} : vector<128x256xf32>, vector<256x256xf32>, vector<128x256xf32> -> vector<128x256xf32>
    %36 = arith.addf %34, %35 : vector<128x256xf32>
    %c0_18 = arith.constant 0 : index
    %c0_19 = arith.constant 0 : index
    %37 = vector.load %arg10[%c0_18, %c0_19] : memref<128x256xf32, #tpu.memory_space<vmem>>, vector<128x256xf32>
    tpu.vector_store %arg10[%c0_18, %c0_19], %36 {strides = array<i32>} : memref<128x256xf32, #tpu.memory_space<vmem>>, vector<128x256xf32>,
    %c1_i32 = arith.constant 1 : i32
    %38 = arith.cmpi eq, %arg1, %c1_i32 : i32
    %39 = arith.extui %38 : i1 to i32
    %c0_i32_20 = arith.constant 0 : i32
    %40 = arith.cmpi ne, %39, %c0_i32_20 : i32
    scf.if %40 {
      %c0_21 = arith.constant 0 : index
      %c0_22 = arith.constant 0 : index
      %41 = vector.load %arg10[%c0_21, %c0_22] : memref<128x256xf32, #tpu.memory_space<vmem>>, vector<128x256xf32>
      %cst_23 = arith.constant dense<0.000000e+00> : vector<128xf32>
      %42 = vector.multi_reduction <add>, %41, %cst_23 [1] : vector<128x256xf32> to vector<128xf32>
      %43 = vector.shape_cast %42 : vector<128xf32> to vector<128x1xf32>
      %cst_24 = arith.constant 3.906250e-03 : f32
      %44 = vector.broadcast %cst_24 : f32 to vector<128x1xf32>
      %45 = arith.mulf %43, %44 : vector<128x1xf32>
      %46 = vector.broadcast %45 : vector<128x1xf32> to vector<128x256xf32>
      %47 = arith.subf %41, %46 : vector<128x256xf32>
      %48 = vector.broadcast %45 : vector<128x1xf32> to vector<128x256xf32>
      %49 = arith.subf %41, %48 : vector<128x256xf32>
      %50 = arith.mulf %47, %49 : vector<128x256xf32>
      %cst_25 = arith.constant dense<0.000000e+00> : vector<128xf32>
      %51 = vector.multi_reduction <add>, %50, %cst_25 [1] : vector<128x256xf32> to vector<128xf32>
      %52 = vector.shape_cast %51 : vector<128xf32> to vector<128x1xf32>
      %cst_26 = arith.constant 3.906250e-03 : f32
      %53 = vector.broadcast %cst_26 : f32 to vector<128x1xf32>
      %54 = arith.mulf %52, %53 : vector<128x1xf32>
      %cst_27 = arith.constant 9.99999974E-6 : f32
      %55 = vector.broadcast %cst_27 : f32 to vector<128x1xf32>
      %56 = arith.addf %54, %55 : vector<128x1xf32>
      %57 = math.rsqrt %56 : vector<128x1xf32>
      %c0_28 = arith.constant 0 : index
      %c0_29 = arith.constant 0 : index
      %58 = vector.load %arg7[%c0_28, %c0_29] : memref<128x1xf32, #tpu.memory_space<vmem>>, vector<128x1xf32>
      %59 = arith.mulf %57, %58 : vector<128x1xf32>
      %c0_30 = arith.constant 0 : index
      %c0_31 = arith.constant 0 : index
      %60 = vector.load %arg8[%c0_30, %c0_31] : memref<128x1xf32, #tpu.memory_space<vmem>>, vector<128x1xf32>
      %61 = arith.mulf %45, %59 : vector<128x1xf32>
      %62 = arith.subf %60, %61 : vector<128x1xf32>
      %63 = vector.broadcast %59 : vector<128x1xf32> to vector<128x256xf32>
      %64 = arith.mulf %41, %63 : vector<128x256xf32>
      %65 = vector.broadcast %62 : vector<128x1xf32> to vector<128x256xf32>
      %66 = arith.addf %64, %65 : vector<128x256xf32>
      %c0_32 = arith.constant 0 : index
      %c0_33 = arith.constant 0 : index
      %67 = vector.load %arg9[%c0_32, %c0_33] : memref<128x256xf32, #tpu.memory_space<vmem>>, vector<128x256xf32>
      tpu.vector_store %arg9[%c0_32, %c0_33], %66 {strides = array<i32>} : memref<128x256xf32, #tpu.memory_space<vmem>>, vector<128x256xf32>,
    } else {
    }
    return
  }
  func.func @transform_0(%arg0: i32, %arg1: i32) -> (i32, i32) {
    %c0_i32 = arith.constant 0 : i32
    %c0_i32_0 = arith.constant 0 : i32
    return %arg1, %c0_i32 : i32, i32
  }
  func.func @transform_1(%arg0: i32, %arg1: i32) -> (i32, i32) {
    %c0_i32 = arith.constant 0 : i32
    %c0_i32_0 = arith.constant 0 : i32
    return %arg1, %c0_i32 : i32, i32
  }
  func.func @transform_2(%arg0: i32, %arg1: i32) -> (i32, i32) {
    %c0_i32 = arith.constant 0 : i32
    return %arg0, %arg1 : i32, i32
  }
  func.func @transform_3(%arg0: i32, %arg1: i32) -> (i32, i32) {
    %c0_i32 = arith.constant 0 : i32
    %c0_i32_0 = arith.constant 0 : i32
    return %arg1, %c0_i32 : i32, i32
  }
  func.func @transform_4(%arg0: i32, %arg1: i32) -> (i32, i32) {
    %c0_i32 = arith.constant 0 : i32
    %c0_i32_0 = arith.constant 0 : i32
    return %arg1, %c0_i32 : i32, i32
  }
  func.func @transform_5(%arg0: i32, %arg1: i32) -> (i32, i32) {
    %c0_i32 = arith.constant 0 : i32
    %c0_i32_0 = arith.constant 0 : i32
    return %arg0, %c0_i32 : i32, i32
  }
  func.func @transform_6(%arg0: i32, %arg1: i32) -> (i32, i32) {
    %c0_i32 = arith.constant 0 : i32
    %c0_i32_0 = arith.constant 0 : i32
    return %arg0, %c0_i32 : i32, i32
  }
  func.func @transform_7(%arg0: i32, %arg1: i32) -> (i32, i32) {
    %c0_i32 = arith.constant 0 : i32
    %c0_i32_0 = arith.constant 0 : i32
    return %arg0, %c0_i32 : i32, i32
  }
}

</mosaic_0001>

<llo_original>
// kernel: tpu_custom_call.1
$region0: #{tpu_custom_call.1}
  #allocation0 [shape = 'u32[]', space=smem, size = 0x4, offset = 0x4, fixed_abs, tag = 'smem constant byte address 0x4 - core index']
  #allocation1 [shape = 'u32[72,128]{1,0:T(1,128)}', space=vmem, size = 0x9000, scoped, tag = 'internal scratch']
  #allocation2 [shape = 'f32[128,256]{1,0:T(8,128)}', space=vmem, size = 0x20000, scoped, tag = 'scratch operand']
  %s0 = inlined_call_operand.vmem [shape: f32[512,256], index: 0, kind: input, shape index: {}]
  %s1 = inlined_call_operand.hbm [shape: f32[512,256], index: 1, kind: input, shape index: {}]
  %s2 = inlined_call_operand.hbm [shape: f32[128,512], index: 2, kind: input, shape index: {}]
  %s3 = inlined_call_operand.vmem [shape: f32[512,1], index: 3, kind: input, shape index: {}]
  %s4 = inlined_call_operand.vmem [shape: f32[512,1], index: 4, kind: input, shape index: {}]
  %s5 = inlined_call_operand.vmem [shape: f32[128,1], index: 5, kind: input, shape index: {}]
  %s6 = inlined_call_operand.vmem [shape: f32[128,1], index: 6, kind: input, shape index: {}]
  %s7 = inlined_call_operand.hbm [shape: f32[128,256], index: 7, kind: output, shape index: {}]
  %s8 = sld [smem:[#allocation0]]
  $region77: #{tpu_custom_call.1} parent=0
    _
  %s10 = ssub.s32 1, %s8
  %s11 = scalar_select 0, %s10, %s8
  $region1: #{tpu_custom_call.1} parent=0
    #allocation3 [shape = 'u8[524288]{0}', space=vmem, size = 0x80000, scoped, tag = 'input window, operand 1']
    #allocation4 [shape = 's32[2]{0}', space=sflag, size = 0x8, scoped, tag = 'scoped memory for tpu_custom_call.1']
    #allocation5 [shape = 's32[2]{0}', space=sflag, size = 0x8, scoped, tag = 'scoped memory for tpu_custom_call.1']
    #allocation6 [shape = 'u8[262144]{0}', space=vmem, size = 0x40000, scoped, tag = 'input window, operand 2']
    #allocation7 [shape = 's32[2]{0}', space=sflag, size = 0x8, scoped, tag = 'scoped memory for tpu_custom_call.1']
    #allocation8 [shape = 'u8[131072]{0}', space=vmem, size = 0x20000, scoped, tag = 'output window, operand 0, single buffered']
    %12 = vsyncpa [#allocation4], 0
    %s13 = scalar_lea.sflag [#allocation4], 1
    %14 = vsyncpa %s13, 0
    %15 = vsyncpa [#allocation7], 0
    %s16 = scalar_lea.sflag [#allocation7], 1
    %17 = vsyncpa %s16, 0
    %18 = vsyncpa [#allocation5], 0
    loop: start=0, step=1, limit=4
    $region2: #{tpu_custom_call.1} parent=1 // loop_pre_header
      _
    $region3: #{tpu_custom_call.1} parent=1 // loop_header
      %s20 = sphi 0, %s24
      %p21 = scmp.ge.s32.totalorder %s20, 4
      %s27 = sphi 0, %s39
      %s28 = sphi 0, %s35
      %s29 = sphi 0, %s27
      %s30 = sphi 0, %s28
      %s31 = sphi 0, %s29
      %s32 = sphi 0, %s30
      %s42 = sphi 0, %s44
      %s45 = sphi 0, %s42
      %s46 = sphi 0, %s45
      %s62 = sphi 0, %s46
      %s68 = sphi 0, %s70
      %s71 = sphi 0, %s68
      %s72 = sphi 0, %s71
      %s88 = sphi 0, %s72
      %s96 = sphi 0, %s98
      %s99 = sphi 0, %s96
      %s100 = sphi 0, %s99
      %s116 = sphi 0, %s100
      %s122 = sphi 0, %s124
      %s125 = sphi 0, %s122
      %s126 = sphi 0, %s125
      %s142 = sphi 0, %s126
      %s148 = sphi 0, %s150
      %s151 = sphi 0, %s148
      %s152 = sphi 0, %s151
      %s168 = sphi 0, %s152
      %s174 = sphi 0, %s176
      %s177 = sphi 0, %s174
      %s178 = sphi 0, %s177
      %s194 = sphi 0, %s178
      %s200 = sphi 0, %s202
      %s203 = sphi 0, %s200
      %s204 = sphi 0, %s203
      %s220 = sphi 0, %s204
      %s226 = sphi 0, %s228
      %s229 = sphi 0, %s226
      %s230 = sphi 0, %s229
      %s246 = sphi 0, %s230
    $region4: #{tpu_custom_call.1} parent=1 // loop_header_branch
      %23 = sbr.rel (%p21) target = $region8
    $region5: #{tpu_custom_call.1} parent=1 // loop_body
      %s25 = ssub.s32 %s20, 1
      %s26 = ssub.s32 %s20, 2
      %s33 = sadd.s32 1, %s28
      %p34 = scmp.ge.s32.totalorder %s33, 2
      %s35 = scalar_select %p34, 0, %s33
      %s36 = sadd.s32 1, %s27
      %s37 = scalar_select %p34, %s36, %s27
      %p38 = scmp.ge.s32.totalorder %s37, 1
      %s39 = scalar_select %p38, 0, %s37
      %s40 = ssub.s32 %s28, %s35
      %p41 = scmp.eq.s32.totalorder %s40, 0
      %s43 = sadd.s32 %s42, 1
      %s44 = scalar_select %p41, %s42, %s43
      %p47 = pneg %p41
      %p48 = scmp.eq.s32.totalorder %s20, 1
      %p49 = por %p47, %p48
      %p50 = scmp.ne.s32.totalorder %s42, %s45
      %p51 = scmp.eq.s32.totalorder %s20, 0
      %p52 = por %p50, %p51
      %p53 = scmp.ne.s32.totalorder %s42, %s45
      %p54 = scmp.eq.s32.totalorder %s25, 1
      %p55 = por %p53, %p54
      %p56 = scmp.ne.s32.totalorder %s45, %s46
      %p57 = scmp.eq.s32.totalorder %s25, 0
      %p58 = por %p56, %p57
      %p59 = scmp.ne.s32.totalorder %s45, %s46
      %p60 = scmp.eq.s32.totalorder %s26, 1
      %p61 = por %p59, %p60
      %p63 = scmp.ne.s32.totalorder %s46, %s62
      %p64 = scmp.eq.s32.totalorder %s26, 0
      %p65 = por %p63, %p64
      %s66 = ssub.s32 %s28, %s35
      %p67 = scmp.eq.s32.totalorder %s66, 0
      %s69 = sadd.s32 %s68, 1
      %s70 = scalar_select %p67, %s68, %s69
      %p73 = pneg %p67
      %p74 = scmp.eq.s32.totalorder %s20, 1
      %p75 = por %p73, %p74
      %p76 = scmp.ne.s32.totalorder %s68, %s71
      %p77 = scmp.eq.s32.totalorder %s20, 0
      %p78 = por %p76, %p77
      %p79 = scmp.ne.s32.totalorder %s68, %s71
      %p80 = scmp.eq.s32.totalorder %s25, 1
      %p81 = por %p79, %p80
      %p82 = scmp.ne.s32.totalorder %s71, %s72
      %p83 = scmp.eq.s32.totalorder %s25, 0
      %p84 = por %p82, %p83
      %p85 = scmp.ne.s32.totalorder %s71, %s72
      %p86 = scmp.eq.s32.totalorder %s26, 1
      %p87 = por %p85, %p86
      %p89 = scmp.ne.s32.totalorder %s72, %s88
      %p90 = scmp.eq.s32.totalorder %s26, 0
      %p91 = por %p89, %p90
      %s92 = ssub.s32 %s27, %s39
      %s93 = ssub.s32 %s28, %s35
      %s94 = sor.u32 %s92, %s93
      %p95 = scmp.eq.s32.totalorder %s94, 0
      %s97 = sadd.s32 %s96, 1
      %s98 = scalar_select %p95, %s96, %s97
      %p101 = pneg %p95
      %p102 = scmp.eq.s32.totalorder %s20, 1
      %p103 = por %p101, %p102
      %p104 = scmp.ne.s32.totalorder %s96, %s99
      %p105 = scmp.eq.s32.totalorder %s20, 0
      %p106 = por %p104, %p105
      %p107 = scmp.ne.s32.totalorder %s96, %s99
      %p108 = scmp.eq.s32.totalorder %s25, 1
      %p109 = por %p107, %p108
      %p110 = scmp.ne.s32.totalorder %s99, %s100
      %p111 = scmp.eq.s32.totalorder %s25, 0
      %p112 = por %p110, %p111
      %p113 = scmp.ne.s32.totalorder %s99, %s100
      %p114 = scmp.eq.s32.totalorder %s26, 1
      %p115 = por %p113, %p114
      %p117 = scmp.ne.s32.totalorder %s100, %s116
      %p118 = scmp.eq.s32.totalorder %s26, 0
      %p119 = por %p117, %p118
      %s120 = ssub.s32 %s28, %s35
      %p121 = scmp.eq.s32.totalorder %s120, 0
      %s123 = sadd.s32 %s122, 1
      %s124 = scalar_select %p121, %s122, %s123
      %p127 = pneg %p121
      %p128 = scmp.eq.s32.totalorder %s20, 1
      %p129 = por %p127, %p128
      %p130 = scmp.ne.s32.totalorder %s122, %s125
      %p131 = scmp.eq.s32.totalorder %s20, 0
      %p132 = por %p130, %p131
      %p133 = scmp.ne.s32.totalorder %s122, %s125
      %p134 = scmp.eq.s32.totalorder %s25, 1
      %p135 = por %p133, %p134
      %p136 = scmp.ne.s32.totalorder %s125, %s126
      %p137 = scmp.eq.s32.totalorder %s25, 0
      %p138 = por %p136, %p137
      %p139 = scmp.ne.s32.totalorder %s125, %s126
      %p140 = scmp.eq.s32.totalorder %s26, 1
      %p141 = por %p139, %p140
      %p143 = scmp.ne.s32.totalorder %s126, %s142
      %p144 = scmp.eq.s32.totalorder %s26, 0
      %p145 = por %p143, %p144
      %s146 = ssub.s32 %s28, %s35
      %p147 = scmp.eq.s32.totalorder %s146, 0
      %s149 = sadd.s32 %s148, 1
      %s150 = scalar_select %p147, %s148, %s149
      %p153 = pneg %p147
      %p154 = scmp.eq.s32.totalorder %s20, 1
      %p155 = por %p153, %p154
      %p156 = scmp.ne.s32.totalorder %s148, %s151
      %p157 = scmp.eq.s32.totalorder %s20, 0
      %p158 = por %p156, %p157
      %p159 = scmp.ne.s32.totalorder %s148, %s151
      %p160 = scmp.eq.s32.totalorder %s25, 1
      %p161 = por %p159, %p160
      %p162 = scmp.ne.s32.totalorder %s151, %s152
      %p163 = scmp.eq.s32.totalorder %s25, 0
      %p164 = por %p162, %p163
      %p165 = scmp.ne.s32.totalorder %s151, %s152
      %p166 = scmp.eq.s32.totalorder %s26, 1
      %p167 = por %p165, %p166
      %p169 = scmp.ne.s32.totalorder %s152, %s168
      %p170 = scmp.eq.s32.totalorder %s26, 0
      %p171 = por %p169, %p170
      %s172 = ssub.s32 %s27, %s39
      %p173 = scmp.eq.s32.totalorder %s172, 0
      %s175 = sadd.s32 %s174, 1
      %s176 = scalar_select %p173, %s174, %s175
      %p179 = pneg %p173
      %p180 = scmp.eq.s32.totalorder %s20, 1
      %p181 = por %p179, %p180
      %p182 = scmp.ne.s32.totalorder %s174, %s177
      %p183 = scmp.eq.s32.totalorder %s20, 0
      %p184 = por %p182, %p183
      %p185 = scmp.ne.s32.totalorder %s174, %s177
      %p186 = scmp.eq.s32.totalorder %s25, 1
      %p187 = por %p185, %p186
      %p188 = scmp.ne.s32.totalorder %s177, %s178
      %p189 = scmp.eq.s32.totalorder %s25, 0
      %p190 = por %p188, %p189
      %p191 = scmp.ne.s32.totalorder %s177, %s178
      %p192 = scmp.eq.s32.totalorder %s26, 1
      %p193 = por %p191, %p192
      %p195 = scmp.ne.s32.totalorder %s178, %s194
      %p196 = scmp.eq.s32.totalorder %s26, 0
      %p197 = por %p195, %p196
      %s198 = ssub.s32 %s27, %s39
      %p199 = scmp.eq.s32.totalorder %s198, 0
      %s201 = sadd.s32 %s200, 1
      %s202 = scalar_select %p199, %s200, %s201
      %p205 = pneg %p199
      %p206 = scmp.eq.s32.totalorder %s20, 1
      %p207 = por %p205, %p206
      %p208 = scmp.ne.s32.totalorder %s200, %s203
      %p209 = scmp.eq.s32.totalorder %s20, 0
      %p210 = por %p208, %p209
      %p211 = scmp.ne.s32.totalorder %s200, %s203
      %p212 = scmp.eq.s32.totalorder %s25, 1
      %p213 = por %p211, %p212
      %p214 = scmp.ne.s32.totalorder %s203, %s204
      %p215 = scmp.eq.s32.totalorder %s25, 0
      %p216 = por %p214, %p215
      %p217 = scmp.ne.s32.totalorder %s203, %s204
      %p218 = scmp.eq.s32.totalorder %s26, 1
      %p219 = por %p217, %p218
      %p221 = scmp.ne.s32.totalorder %s204, %s220
      %p222 = scmp.eq.s32.totalorder %s26, 0
      %p223 = por %p221, %p222
      %s224 = ssub.s32 %s27, %s39
      %p225 = scmp.eq.s32.totalorder %s224, 0
      %s227 = sadd.s32 %s226, 1
      %s228 = scalar_select %p225, %s226, %s227
      %p231 = pneg %p225
      %p232 = scmp.eq.s32.totalorder %s20, 1
      %p233 = por %p231, %p232
      %p234 = scmp.ne.s32.totalorder %s226, %s229
      %p235 = scmp.eq.s32.totalorder %s20, 0
      %p236 = por %p234, %p235
      %p237 = scmp.ne.s32.totalorder %s226, %s229
      %p238 = scmp.eq.s32.totalorder %s25, 1
      %p239 = por %p237, %p238
      %p240 = scmp.ne.s32.totalorder %s229, %s230
      %p241 = scmp.eq.s32.totalorder %s25, 0
      %p242 = por %p240, %p241
      %p243 = scmp.ne.s32.totalorder %s229, %s230
      %p244 = scmp.eq.s32.totalorder %s26, 1
      %p245 = por %p243, %p244
      %p247 = scmp.ne.s32.totalorder %s230, %s246
      %p248 = scmp.eq.s32.totalorder %s26, 0
      %p249 = por %p247, %p248
      %p250 = scmp.le.s32.totalorder 1, %s20
      %p251 = scmp.lt.s32.totalorder %s20, 3
      %p252 = pnand %p250, %p251
      %p253 = pneg %p252
      // Predicated region
      $region9: #{tpu_custom_call.1} parent=5 // pred_check
        _
      $region10: #{tpu_custom_call.1} parent=5 // pred_check_branch
        %255 = sbr.rel (%p252) target = $region12
      $region11: #{tpu_custom_call.1} parent=5 // pred_region
        %s256 = ssub.s32 %s20, 1
        // Predicated region
        $region13: #{tpu_custom_call.1} parent=11 // pred_check
          %p257 = pneg %p190
        $region14: #{tpu_custom_call.1} parent=11 // pred_check_branch
          %259 = sbr.rel (%p257) target = $region16
        $region15: #{tpu_custom_call.1} parent=11 // pred_region
          %s260 = smul.u32 16, %s29
          %p261 = scmp.lt.s32.totalorder %s260, 15
          %s262 = scalar_select %p261, %s260, 15
          %s263 = smul.addr %s262, 8
          %s264 = scalar_lea.vmem %s5, %s263
          %s265 = smul.u32 16, %s29
        $region16: #{tpu_custom_call.1} parent=11 // pred_fallthru
          _
        // Predicated region
        $region17: #{tpu_custom_call.1} parent=11 // pred_check
          %p266 = pneg %p216
        $region18: #{tpu_custom_call.1} parent=11 // pred_check_branch
          %268 = sbr.rel (%p266) target = $region20
        $region19: #{tpu_custom_call.1} parent=11 // pred_region
          %s269 = smul.u32 16, %s29
          %p270 = scmp.lt.s32.totalorder %s269, 15
          %s271 = scalar_select %p270, %s269, 15
          %s272 = smul.addr %s271, 8
          %s273 = scalar_lea.vmem %s6, %s272
          %s274 = smul.u32 16, %s29
        $region20: #{tpu_custom_call.1} parent=11 // pred_fallthru
          _
      $region12: #{tpu_custom_call.1} parent=5 // pred_fallthru
        _
      %p275 = scmp.lt.s32.totalorder %s20, 2
      // Predicated region
      $region21: #{tpu_custom_call.1} parent=5 // pred_check
        %p276 = pneg %p275
      $region22: #{tpu_custom_call.1} parent=5 // pred_check_branch
        %278 = sbr.rel (%p276) target = $region24
      $region23: #{tpu_custom_call.1} parent=5 // pred_region
        // Predicated region
        $region25: #{tpu_custom_call.1} parent=23 // pred_check
          %p279 = pneg %p52
        $region26: #{tpu_custom_call.1} parent=23 // pred_check_branch
          %281 = sbr.rel (%p279) target = $region28
        $region27: #{tpu_custom_call.1} parent=23 // pred_region
          %s282 = smul.u32 32, %s28
          %p283 = scmp.lt.s32.totalorder %s282, 63
          %s284 = scalar_select %p283, %s282, 63
          %s285 = smul.addr %s284, 2
          %s286 = smul.addr %s285, 8
          %s287 = scalar_lea.vmem %s0, %s286
          %s288 = smul.u32 32, %s28
        $region28: #{tpu_custom_call.1} parent=23 // pred_fallthru
          _
        // Predicated region
        $region29: #{tpu_custom_call.1} parent=23 // pred_check
          %p289 = pneg %p78
        $region30: #{tpu_custom_call.1} parent=23 // pred_check_branch
          %291 = sbr.rel (%p289) target = $region32
        $region31: #{tpu_custom_call.1} parent=23 // pred_region
          %s292 = sand.u32 %s68, 1
          %s293 = scalar_lea.sflag [#allocation4], %s292
          %s294 = sand.u32 %s68, 1
          %s295 = smul.addr %s294, 512
          %s296 = scalar_lea.vmem [#allocation3], %s295
          %s297 = smul.u32 32, %s28
          %299 = vsyncadd %s293, 0
          %s300 = smul.addr %s297, 2
          %s301 = smul.addr %s300, 8
          %s302 = scalar_lea.hbm %s1, %s301
          %s303 = sshll.u32 %s302, 4
          %s304 = int_to_ptr.hbm [resolvable:$true] %s303
          %s305 = sshll.u32 %s296, 4
          %s306 = int_to_ptr.vmem [resolvable:$true] %s305
          %311 = dma.hbm_to_vmem [thread:$0]  %s304, 8192, %s306, %s293, 256, 256, 16
        $region32: #{tpu_custom_call.1} parent=23 // pred_fallthru
          _
        // Predicated region
        $region33: #{tpu_custom_call.1} parent=23 // pred_check
          %p312 = pneg %p106
        $region34: #{tpu_custom_call.1} parent=23 // pred_check_branch
          %314 = sbr.rel (%p312) target = $region36
        $region35: #{tpu_custom_call.1} parent=23 // pred_region
          %s315 = sand.u32 %s96, 1
          %s316 = scalar_lea.sflag [#allocation7], %s315
          %s317 = sand.u32 %s96, 1
          %s318 = smul.addr %s317, 256
          %s319 = scalar_lea.vmem [#allocation6], %s318
          %s320 = smul.u32 16, %s27
          %s321 = smul.u32 2, %s28
          %323 = vsyncadd %s316, 0
          %s324 = smul.addr %s320, 4
          %s325 = sadd.s32 %s321, %s324
          %s326 = smul.addr %s325, 8
          %s327 = scalar_lea.hbm %s2, %s326
          %s328 = sshll.u32 %s327, 4
          %s329 = int_to_ptr.hbm [resolvable:$true] %s328
          %s330 = sshll.u32 %s319, 4
          %s331 = int_to_ptr.vmem [resolvable:$true] %s330
          %336 = dma.hbm_to_vmem [thread:$0]  %s329, 4096, %s331, %s316, 512, 256, 16
        $region36: #{tpu_custom_call.1} parent=23 // pred_fallthru
          _
        // Predicated region
        $region37: #{tpu_custom_call.1} parent=23 // pred_check
          %p337 = pneg %p132
        $region38: #{tpu_custom_call.1} parent=23 // pred_check_branch
          %339 = sbr.rel (%p337) target = $region40
        $region39: #{tpu_custom_call.1} parent=23 // pred_region
          %s340 = smul.u32 32, %s28
          %p341 = scmp.lt.s32.totalorder %s340, 63
          %s342 = scalar_select %p341, %s340, 63
          %s343 = smul.addr %s342, 8
          %s344 = scalar_lea.vmem %s3, %s343
          %s345 = smul.u32 32, %s28
        $region40: #{tpu_custom_call.1} parent=23 // pred_fallthru
          _
        // Predicated region
        $region41: #{tpu_custom_call.1} parent=23 // pred_check
          %p346 = pneg %p158
        $region42: #{tpu_custom_call.1} parent=23 // pred_check_branch
          %348 = sbr.rel (%p346) target = $region44
        $region43: #{tpu_custom_call.1} parent=23 // pred_region
          %s349 = smul.u32 32, %s28
          %p350 = scmp.lt.s32.totalorder %s349, 63
          %s351 = scalar_select %p350, %s349, 63
          %s352 = smul.addr %s351, 8
          %s353 = scalar_lea.vmem %s4, %s352
          %s354 = smul.u32 32, %s28
        $region44: #{tpu_custom_call.1} parent=23 // pred_fallthru
          _
      $region24: #{tpu_custom_call.1} parent=5 // pred_fallthru
        _
      %p355 = scmp.le.s32.totalorder 1, %s20
      %p356 = scmp.lt.s32.totalorder %s20, 3
      %p357 = pnand %p355, %p356
      %p358 = pneg %p357
      // Predicated region
      $region45: #{tpu_custom_call.1} parent=5 // pred_check
        _
      $region46: #{tpu_custom_call.1} parent=5 // pred_check_branch
        %360 = sbr.rel (%p357) target = $region48
      $region47: #{tpu_custom_call.1} parent=5 // pred_region
        %s361 = ssub.s32 %s20, 1
        %s362 = sand.u32 %s71, 1
        %s363 = scalar_lea.sflag [#allocation4], %s362
        %s364 = sand.u32 %s71, 1
        %s365 = smul.addr %s364, 512
        %s366 = scalar_lea.vmem [#allocation3], %s365
        // Predicated region
        $region49: #{tpu_custom_call.1} parent=47 // pred_check
          %p367 = pneg %p84
        $region50: #{tpu_custom_call.1} parent=47 // pred_check_branch
          %369 = sbr.rel (%p367) target = $region52
        $region51: #{tpu_custom_call.1} parent=47 // pred_region
          %371 = dma.done %s363, 8192
        $region52: #{tpu_custom_call.1} parent=47 // pred_fallthru
          _
        %s372 = sand.u32 %s99, 1
        %s373 = scalar_lea.sflag [#allocation7], %s372
        %s374 = sand.u32 %s99, 1
        %s375 = smul.addr %s374, 256
        %s376 = scalar_lea.vmem [#allocation6], %s375
        // Predicated region
        $region53: #{tpu_custom_call.1} parent=47 // pred_check
          %p377 = pneg %p112
        $region54: #{tpu_custom_call.1} parent=47 // pred_check_branch
          %379 = sbr.rel (%p377) target = $region56
        $region55: #{tpu_custom_call.1} parent=47 // pred_region
          %381 = dma.done %s373, 4096
        $region56: #{tpu_custom_call.1} parent=47 // pred_fallthru
          _
        %s382 = smul.u32 32, %s30
        %p383 = scmp.lt.s32.totalorder %s382, 63
        %s384 = scalar_select %p383, %s382, 63
        %s385 = smul.addr %s384, 2
        %s386 = smul.addr %s385, 8
        %s387 = scalar_lea.vmem %s0, %s386
        %p388 = pneg %p58
        %p389 = pneg %p55
        %s390 = sand.u32 %s71, 1
        %s391 = scalar_lea.sflag [#allocation4], %s390
        %s392 = sand.u32 %s71, 1
        %s393 = smul.addr %s392, 512
        %s394 = scalar_lea.vmem [#allocation3], %s393
        %p395 = pneg %p84
        %p396 = pneg %p81
        %s397 = sand.u32 %s99, 1
        %s398 = scalar_lea.sflag [#allocation7], %s397
        %s399 = sand.u32 %s99, 1
        %s400 = smul.addr %s399, 256
        %s401 = scalar_lea.vmem [#allocation6], %s400
        %p402 = pneg %p112
        %p403 = pneg %p109
        %s404 = smul.u32 32, %s30
        %p405 = scmp.lt.s32.totalorder %s404, 63
        %s406 = scalar_select %p405, %s404, 63
        %s407 = smul.addr %s406, 8
        %s408 = scalar_lea.vmem %s3, %s407
        %p409 = pneg %p138
        %p410 = pneg %p135
        %s411 = smul.u32 32, %s30
        %p412 = scmp.lt.s32.totalorder %s411, 63
        %s413 = scalar_select %p412, %s411, 63
        %s414 = smul.addr %s413, 8
        %s415 = scalar_lea.vmem %s4, %s414
        %p416 = pneg %p164
        %p417 = pneg %p161
        %s418 = smul.u32 16, %s29
        %p419 = scmp.lt.s32.totalorder %s418, 15
        %s420 = scalar_select %p419, %s418, 15
        %s421 = smul.addr %s420, 8
        %s422 = scalar_lea.vmem %s5, %s421
        %p423 = pneg %p190
        %p424 = pneg %p187
        %s425 = smul.u32 16, %s29
        %p426 = scmp.lt.s32.totalorder %s425, 15
        %s427 = scalar_select %p426, %s425, 15
        %s428 = smul.addr %s427, 8
        %s429 = scalar_lea.vmem %s6, %s428
        %p430 = pneg %p216
        %p431 = pneg %p213
        %p432 = pneg %p242
        %p433 = pneg %p239
        %s434 = smul.u32 32, %s30
        %p435 = scmp.lt.s32.totalorder %s434, 63
        %s436 = scalar_select %p435, %s434, 63
        %s437 = smul.addr %s436, 2
        %s438 = smul.addr %s437, 8
        %s439 = scalar_lea.vmem %s0, %s438
        %s440 = smul.u32 32, %s30
        %s441 = smul.u32 32, %s30
        %s442 = smul.u32 16, %s29
        %s443 = smul.u32 2, %s30
        %s444 = smul.u32 32, %s30
        %p445 = scmp.lt.s32.totalorder %s444, 63
        %s446 = scalar_select %p445, %s444, 63
        %s447 = smul.addr %s446, 8
        %s448 = scalar_lea.vmem %s3, %s447
        %s449 = smul.u32 32, %s30
        %s450 = smul.u32 32, %s30
        %p451 = scmp.lt.s32.totalorder %s450, 63
        %s452 = scalar_select %p451, %s450, 63
        %s453 = smul.addr %s452, 8
        %s454 = scalar_lea.vmem %s4, %s453
        %s455 = smul.u32 32, %s30
        %s456 = smul.u32 16, %s29
        %p457 = scmp.lt.s32.totalorder %s456, 15
        %s458 = scalar_select %p457, %s456, 15
        %s459 = smul.addr %s458, 8
        %s460 = scalar_lea.vmem %s5, %s459
        %s461 = smul.u32 16, %s29
        %s462 = smul.u32 16, %s29
        %p463 = scmp.lt.s32.totalorder %s462, 15
        %s464 = scalar_select %p463, %s462, 15
        %s465 = smul.addr %s464, 8
        %s466 = scalar_lea.vmem %s6, %s465
        %s467 = smul.u32 16, %s29
        %s468 = smul.u32 16, %s29
        %p469 = scmp.eq.s32.totalorder %s30, 0
        // Predicated region
        $region57: #{tpu_custom_call.1} parent=47 // pred_check
          %p470 = pneg %p469
        $region58: #{tpu_custom_call.1} parent=47 // pred_check_branch
          %472 = sbr.rel (%p470) target = $region60
        $region59: #{tpu_custom_call.1} parent=47 // pred_region
          %473 = vst [vmem:[#allocation2] sm:$0xff] 0.0
          %474 = vst [vmem:[#allocation2 + $0x8] sm:$0xff] 0.0
          %475 = vst [vmem:[#allocation2 + $0x10] sm:$0xff] 0.0
          %476 = vst [vmem:[#allocation2 + $0x18] sm:$0xff] 0.0
          %477 = vst [vmem:[#allocation2 + $0x20] sm:$0xff] 0.0
          %478 = vst [vmem:[#allocation2 + $0x28] sm:$0xff] 0.0
          %479 = vst [vmem:[#allocation2 + $0x30] sm:$0xff] 0.0
          %480 = vst [vmem:[#allocation2 + $0x38] sm:$0xff] 0.0
          %481 = vst [vmem:[#allocation2 + $0x40] sm:$0xff] 0.0
          %482 = vst [vmem:[#allocation2 + $0x48] sm:$0xff] 0.0
          %483 = vst [vmem:[#allocation2 + $0x50] sm:$0xff] 0.0
          %484 = vst [vmem:[#allocation2 + $0x58] sm:$0xff] 0.0
          %485 = vst [vmem:[#allocation2 + $0x60] sm:$0xff] 0.0
          %486 = vst [vmem:[#allocation2 + $0x68] sm:$0xff] 0.0
          %487 = vst [vmem:[#allocation2 + $0x70] sm:$0xff] 0.0
          %488 = vst [vmem:[#allocation2 + $0x78] sm:$0xff] 0.0
          %489 = vst [vmem:[#allocation2 + $0x80] sm:$0xff] 0.0
          %490 = vst [vmem:[#allocation2 + $0x88] sm:$0xff] 0.0
          %491 = vst [vmem:[#allocation2 + $0x90] sm:$0xff] 0.0
          %492 = vst [vmem:[#allocation2 + $0x98] sm:$0xff] 0.0
          %493 = vst [vmem:[#allocation2 + $0xa0] sm:$0xff] 0.0
          %494 = vst [vmem:[#allocation2 + $0xa8] sm:$0xff] 0.0
          %495 = vst [vmem:[#allocation2 + $0xb0] sm:$0xff] 0.0
          %496 = vst [vmem:[#allocation2 + $0xb8] sm:$0xff] 0.0
          %497 = vst [vmem:[#allocation2 + $0xc0] sm:$0xff] 0.0
          %498 = vst [vmem:[#allocation2 + $0xc8] sm:$0xff] 0.0
          %499 = vst [vmem:[#allocation2 + $0xd0] sm:$0xff] 0.0
          %500 = vst [vmem:[#allocation2 + $0xd8] sm:$0xff] 0.0
          %501 = vst [vmem:[#allocation2 + $0xe0] sm:$0xff] 0.0
          %502 = vst [vmem:[#allocation2 + $0xe8] sm:$0xff] 0.0
          %503 = vst [vmem:[#allocation2 + $0xf0] sm:$0xff] 0.0
          %504 = vst [vmem:[#allocation2 + $0xf8] sm:$0xff] 0.0
        $region60: #{tpu_custom_call.1} parent=47 // pred_fallthru
          _
        %v505 = vld [vmem:[%s439] sm:$0xff]
        %v506 = vld [vmem:[%s439 + $0x8] sm:$0xff]
        %v507 = vld [vmem:[%s439 + $0x10] sm:$0xff]
        %v508 = vld [vmem:[%s439 + $0x18] sm:$0xff]
        %v509 = vld [vmem:[%s439 + $0x20] sm:$0xff]
        %v510 = vld [vmem:[%s439 + $0x28] sm:$0xff]
        %v511 = vld [vmem:[%s439 + $0x30] sm:$0xff]
        %v512 = vld [vmem:[%s439 + $0x38] sm:$0xff]
        %v513 = vld [vmem:[%s439 + $0x40] sm:$0xff]
        %v514 = vld [vmem:[%s439 + $0x48] sm:$0xff]
        %v515 = vld [vmem:[%s439 + $0x50] sm:$0xff]
        %v516 = vld [vmem:[%s439 + $0x58] sm:$0xff]
        %v517 = vld [vmem:[%s439 + $0x60] sm:$0xff]
        %v518 = vld [vmem:[%s439 + $0x68] sm:$0xff]
        %v519 = vld [vmem:[%s439 + $0x70] sm:$0xff]
        %v520 = vld [vmem:[%s439 + $0x78] sm:$0xff]
        %v521 = vld [vmem:[%s439 + $0x80] sm:$0xff]
        %v522 = vld [vmem:[%s439 + $0x88] sm:$0xff]
        %v523 = vld [vmem:[%s439 + $0x90] sm:$0xff]
        %v524 = vld [vmem:[%s439 + $0x98] sm:$0xff]
        %v525 = vld [vmem:[%s439 + $0xa0] sm:$0xff]
        %v526 = vld [vmem:[%s439 + $0xa8] sm:$0xff]
        %v527 = vld [vmem:[%s439 + $0xb0] sm:$0xff]
        %v528 = vld [vmem:[%s439 + $0xb8] sm:$0xff]
        %v529 = vld [vmem:[%s439 + $0xc0] sm:$0xff]
        %v530 = vld [vmem:[%s439 + $0xc8] sm:$0xff]
        %v531 = vld [vmem:[%s439 + $0xd0] sm:$0xff]
        %v532 = vld [vmem:[%s439 + $0xd8] sm:$0xff]
        %v533 = vld [vmem:[%s439 + $0xe0] sm:$0xff]
        %v534 = vld [vmem:[%s439 + $0xe8] sm:$0xff]
        %v535 = vld [vmem:[%s439 + $0xf0] sm:$0xff]
        %v536 = vld [vmem:[%s439 + $0xf8] sm:$0xff]
        %v537 = vld [vmem:[%s439 + $0x100] sm:$0xff]
        %v538 = vld [vmem:[%s439 + $0x108] sm:$0xff]
        %v539 = vld [vmem:[%s439 + $0x110] sm:$0xff]
        %v540 = vld [vmem:[%s439 + $0x118] sm:$0xff]
        %v541 = vld [vmem:[%s439 + $0x120] sm:$0xff]
        %v542 = vld [vmem:[%s439 + $0x128] sm:$0xff]
        %v543 = vld [vmem:[%s439 + $0x130] sm:$0xff]
        %v544 = vld [vmem:[%s439 + $0x138] sm:$0xff]
        %v545 = vld [vmem:[%s439 + $0x140] sm:$0xff]
        %v546 = vld [vmem:[%s439 + $0x148] sm:$0xff]
        %v547 = vld [vmem:[%s439 + $0x150] sm:$0xff]
        %v548 = vld [vmem:[%s439 + $0x158] sm:$0xff]
        %v549 = vld [vmem:[%s439 + $0x160] sm:$0xff]
        %v550 = vld [vmem:[%s439 + $0x168] sm:$0xff]
        %v551 = vld [vmem:[%s439 + $0x170] sm:$0xff]
        %v552 = vld [vmem:[%s439 + $0x178] sm:$0xff]
        %v553 = vld [vmem:[%s439 + $0x180] sm:$0xff]
        %v554 = vld [vmem:[%s439 + $0x188] sm:$0xff]
        %v555 = vld [vmem:[%s439 + $0x190] sm:$0xff]
        %v556 = vld [vmem:[%s439 + $0x198] sm:$0xff]
        %v557 = vld [vmem:[%s439 + $0x1a0] sm:$0xff]
        %v558 = vld [vmem:[%s439 + $0x1a8] sm:$0xff]
        %v559 = vld [vmem:[%s439 + $0x1b0] sm:$0xff]
        %v560 = vld [vmem:[%s439 + $0x1b8] sm:$0xff]
        %v561 = vld [vmem:[%s439 + $0x1c0] sm:$0xff]
        %v562 = vld [vmem:[%s439 + $0x1c8] sm:$0xff]
        %v563 = vld [vmem:[%s439 + $0x1d0] sm:$0xff]
        %v564 = vld [vmem:[%s439 + $0x1d8] sm:$0xff]
        %v565 = vld [vmem:[%s439 + $0x1e0] sm:$0xff]
        %v566 = vld [vmem:[%s439 + $0x1e8] sm:$0xff]
        %v567 = vld [vmem:[%s439 + $0x1f0] sm:$0xff]
        %v568 = vld [vmem:[%s439 + $0x1f8] sm:$0xff]
        %v569 = vadd.f32 %v505, %v506
        %570 = vadd.xlane.f32.xlu0 %v569
        %v571 = vpop.xlane.xlu0 %570
        %v572 = vadd.f32 %v507, %v508
        %573 = vadd.xlane.f32.xlu0 %v572
        %v574 = vpop.xlane.xlu0 %573
        %v575 = vadd.f32 %v509, %v510
        %576 = vadd.xlane.f32.xlu0 %v575
        %v577 = vpop.xlane.xlu0 %576
        %v578 = vadd.f32 %v511, %v512
        %579 = vadd.xlane.f32.xlu0 %v578
        %v580 = vpop.xlane.xlu0 %579
        %v581 = vadd.f32 %v513, %v514
        %582 = vadd.xlane.f32.xlu0 %v581
        %v583 = vpop.xlane.xlu0 %582
        %v584 = vadd.f32 %v515, %v516
        %585 = vadd.xlane.f32.xlu0 %v584
        %v586 = vpop.xlane.xlu0 %585
        %v587 = vadd.f32 %v517, %v518
        %588 = vadd.xlane.f32.xlu0 %v587
        %v589 = vpop.xlane.xlu0 %588
        %v590 = vadd.f32 %v519, %v520
        %591 = vadd.xlane.f32.xlu0 %v590
        %v592 = vpop.xlane.xlu0 %591
        %v593 = vadd.f32 %v521, %v522
        %594 = vadd.xlane.f32.xlu0 %v593
        %v595 = vpop.xlane.xlu0 %594
        %v596 = vadd.f32 %v523, %v524
        %597 = vadd.xlane.f32.xlu0 %v596
        %v598 = vpop.xlane.xlu0 %597
        %v599 = vadd.f32 %v525, %v526
        %600 = vadd.xlane.f32.xlu0 %v599
        %v601 = vpop.xlane.xlu0 %600
        %v602 = vadd.f32 %v527, %v528
        %603 = vadd.xlane.f32.xlu0 %v602
        %v604 = vpop.xlane.xlu0 %603
        %v605 = vadd.f32 %v529, %v530
        %606 = vadd.xlane.f32.xlu0 %v605
        %v607 = vpop.xlane.xlu0 %606
        %v608 = vadd.f32 %v531, %v532
        %609 = vadd.xlane.f32.xlu0 %v608
        %v610 = vpop.xlane.xlu0 %609
        %v611 = vadd.f32 %v533, %v534
        %612 = vadd.xlane.f32.xlu0 %v611
        %v613 = vpop.xlane.xlu0 %612
        %v614 = vadd.f32 %v535, %v536
        %615 = vadd.xlane.f32.xlu0 %v614
        %v616 = vpop.xlane.xlu0 %615
        %v617 = vadd.f32 %v537, %v538
        %618 = vadd.xlane.f32.xlu0 %v617
        %v619 = vpop.xlane.xlu0 %618
        %v620 = vadd.f32 %v539, %v540
        %621 = vadd.xlane.f32.xlu0 %v620
        %v622 = vpop.xlane.xlu0 %621
        %v623 = vadd.f32 %v541, %v542
        %624 = vadd.xlane.f32.xlu0 %v623
        %v625 = vpop.xlane.xlu0 %624
        %v626 = vadd.f32 %v543, %v544
        %627 = vadd.xlane.f32.xlu0 %v626
        %v628 = vpop.xlane.xlu0 %627
        %v629 = vadd.f32 %v545, %v546
        %630 = vadd.xlane.f32.xlu0 %v629
        %v631 = vpop.xlane.xlu0 %630
        %v632 = vadd.f32 %v547, %v548
        %633 = vadd.xlane.f32.xlu0 %v632
        %v634 = vpop.xlane.xlu0 %633
        %v635 = vadd.f32 %v549, %v550
        %636 = vadd.xlane.f32.xlu0 %v635
        %v637 = vpop.xlane.xlu0 %636
        %v638 = vadd.f32 %v551, %v552
        %639 = vadd.xlane.f32.xlu0 %v638
        %v640 = vpop.xlane.xlu0 %639
        %v641 = vadd.f32 %v553, %v554
        %642 = vadd.xlane.f32.xlu0 %v641
        %v643 = vpop.xlane.xlu0 %642
        %v644 = vadd.f32 %v555, %v556
        %645 = vadd.xlane.f32.xlu0 %v644
        %v646 = vpop.xlane.xlu0 %645
        %v647 = vadd.f32 %v557, %v558
        %648 = vadd.xlane.f32.xlu0 %v647
        %v649 = vpop.xlane.xlu0 %648
        %v650 = vadd.f32 %v559, %v560
        %651 = vadd.xlane.f32.xlu0 %v650
        %v652 = vpop.xlane.xlu0 %651
        %v653 = vadd.f32 %v561, %v562
        %654 = vadd.xlane.f32.xlu0 %v653
        %v655 = vpop.xlane.xlu0 %654
        %v656 = vadd.f32 %v563, %v564
        %657 = vadd.xlane.f32.xlu0 %v656
        %v658 = vpop.xlane.xlu0 %657
        %v659 = vadd.f32 %v565, %v566
        %660 = vadd.xlane.f32.xlu0 %v659
        %v661 = vpop.xlane.xlu0 %660
        %v662 = vadd.f32 %v567, %v568
        %663 = vadd.xlane.f32.xlu0 %v662
        %v664 = vpop.xlane.xlu0 %663
        %v665 = vmul.f32 %v571, 0.00390625
        %v666 = vmul.f32 %v574, 0.00390625
        %v667 = vmul.f32 %v577, 0.00390625
        %v668 = vmul.f32 %v580, 0.00390625
        %v669 = vmul.f32 %v583, 0.00390625
        %v670 = vmul.f32 %v586, 0.00390625
        %v671 = vmul.f32 %v589, 0.00390625
        %v672 = vmul.f32 %v592, 0.00390625
        %v673 = vmul.f32 %v595, 0.00390625
        %v674 = vmul.f32 %v598, 0.00390625
        %v675 = vmul.f32 %v601, 0.00390625
        %v676 = vmul.f32 %v604, 0.00390625
        %v677 = vmul.f32 %v607, 0.00390625
        %v678 = vmul.f32 %v610, 0.00390625
        %v679 = vmul.f32 %v613, 0.00390625
        %v680 = vmul.f32 %v616, 0.00390625
        %v681 = vmul.f32 %v619, 0.00390625
        %v682 = vmul.f32 %v622, 0.00390625
        %v683 = vmul.f32 %v625, 0.00390625
        %v684 = vmul.f32 %v628, 0.00390625
        %v685 = vmul.f32 %v631, 0.00390625
        %v686 = vmul.f32 %v634, 0.00390625
        %v687 = vmul.f32 %v637, 0.00390625
        %v688 = vmul.f32 %v640, 0.00390625
        %v689 = vmul.f32 %v643, 0.00390625
        %v690 = vmul.f32 %v646, 0.00390625
        %v691 = vmul.f32 %v649, 0.00390625
        %v692 = vmul.f32 %v652, 0.00390625
        %v693 = vmul.f32 %v655, 0.00390625
        %v694 = vmul.f32 %v658, 0.00390625
        %v695 = vmul.f32 %v661, 0.00390625
        %v696 = vmul.f32 %v664, 0.00390625
        %v697 = vsub.f32 %v505, %v665
        %v698 = vsub.f32 %v506, %v665
        %v699 = vsub.f32 %v507, %v666
        %v700 = vsub.f32 %v508, %v666
        %v701 = vsub.f32 %v509, %v667
        %v702 = vsub.f32 %v510, %v667
        %v703 = vsub.f32 %v511, %v668
        %v704 = vsub.f32 %v512, %v668
        %v705 = vsub.f32 %v513, %v669
        %v706 = vsub.f32 %v514, %v669
        %v707 = vsub.f32 %v515, %v670
        %v708 = vsub.f32 %v516, %v670
        %v709 = vsub.f32 %v517, %v671
        %v710 = vsub.f32 %v518, %v671
        %v711 = vsub.f32 %v519, %v672
        %v712 = vsub.f32 %v520, %v672
        %v713 = vsub.f32 %v521, %v673
        %v714 = vsub.f32 %v522, %v673
        %v715 = vsub.f32 %v523, %v674
        %v716 = vsub.f32 %v524, %v674
        %v717 = vsub.f32 %v525, %v675
        %v718 = vsub.f32 %v526, %v675
        %v719 = vsub.f32 %v527, %v676
        %v720 = vsub.f32 %v528, %v676
        %v721 = vsub.f32 %v529, %v677
        %v722 = vsub.f32 %v530, %v677
        %v723 = vsub.f32 %v531, %v678
        %v724 = vsub.f32 %v532, %v678
        %v725 = vsub.f32 %v533, %v679
        %v726 = vsub.f32 %v534, %v679
        %v727 = vsub.f32 %v535, %v680
        %v728 = vsub.f32 %v536, %v680
        %v729 = vsub.f32 %v537, %v681
        %v730 = vsub.f32 %v538, %v681
        %v731 = vsub.f32 %v539, %v682
        %v732 = vsub.f32 %v540, %v682
        %v733 = vsub.f32 %v541, %v683
        %v734 = vsub.f32 %v542, %v683
        %v735 = vsub.f32 %v543, %v684
        %v736 = vsub.f32 %v544, %v684
        %v737 = vsub.f32 %v545, %v685
        %v738 = vsub.f32 %v546, %v685
        %v739 = vsub.f32 %v547, %v686
        %v740 = vsub.f32 %v548, %v686
        %v741 = vsub.f32 %v549, %v687
        %v742 = vsub.f32 %v550, %v687
        %v743 = vsub.f32 %v551, %v688
        %v744 = vsub.f32 %v552, %v688
        %v745 = vsub.f32 %v553, %v689
        %v746 = vsub.f32 %v554, %v689
        %v747 = vsub.f32 %v555, %v690
        %v748 = vsub.f32 %v556, %v690
        %v749 = vsub.f32 %v557, %v691
        %v750 = vsub.f32 %v558, %v691
        %v751 = vsub.f32 %v559, %v692
        %v752 = vsub.f32 %v560, %v692
        %v753 = vsub.f32 %v561, %v693
        %v754 = vsub.f32 %v562, %v693
        %v755 = vsub.f32 %v563, %v694
        %v756 = vsub.f32 %v564, %v694
        %v757 = vsub.f32 %v565, %v695
        %v758 = vsub.f32 %v566, %v695
        %v759 = vsub.f32 %v567, %v696
        %v760 = vsub.f32 %v568, %v696
        %v761 = vmul.f32 %v697, %v697
        %v762 = vmul.f32 %v698, %v698
        %v763 = vmul.f32 %v699, %v699
        %v764 = vmul.f32 %v700, %v700
        %v765 = vmul.f32 %v701, %v701
        %v766 = vmul.f32 %v702, %v702
        %v767 = vmul.f32 %v703, %v703
        %v768 = vmul.f32 %v704, %v704
        %v769 = vmul.f32 %v705, %v705
        %v770 = vmul.f32 %v706, %v706
        %v771 = vmul.f32 %v707, %v707
        %v772 = vmul.f32 %v708, %v708
        %v773 = vmul.f32 %v709, %v709
        %v774 = vmul.f32 %v710, %v710
        %v775 = vmul.f32 %v711, %v711
        %v776 = vmul.f32 %v712, %v712
        %v777 = vmul.f32 %v713, %v713
        %v778 = vmul.f32 %v714, %v714
        %v779 = vmul.f32 %v715, %v715
        %v780 = vmul.f32 %v716, %v716
        %v781 = vmul.f32 %v717, %v717
        %v782 = vmul.f32 %v718, %v718
        %v783 = vmul.f32 %v719, %v719
        %v784 = vmul.f32 %v720, %v720
        %v785 = vmul.f32 %v721, %v721
        %v786 = vmul.f32 %v722, %v722
        %v787 = vmul.f32 %v723, %v723
        %v788 = vmul.f32 %v724, %v724
        %v789 = vmul.f32 %v725, %v725
        %v790 = vmul.f32 %v726, %v726
        %v791 = vmul.f32 %v727, %v727
        %v792 = vmul.f32 %v728, %v728
        %v793 = vmul.f32 %v729, %v729
        %v794 = vmul.f32 %v730, %v730
        %v795 = vmul.f32 %v731, %v731
        %v796 = vmul.f32 %v732, %v732
        %v797 = vmul.f32 %v733, %v733
        %v798 = vmul.f32 %v734, %v734
        %v799 = vmul.f32 %v735, %v735
        %v800 = vmul.f32 %v736, %v736
        %v801 = vmul.f32 %v737, %v737
        %v802 = vmul.f32 %v738, %v738
        %v803 = vmul.f32 %v739, %v739
        %v804 = vmul.f32 %v740, %v740
        %v805 = vmul.f32 %v741, %v741
        %v806 = vmul.f32 %v742, %v742
        %v807 = vmul.f32 %v743, %v743
        %v808 = vmul.f32 %v744, %v744
        %v809 = vmul.f32 %v745, %v745
        %v810 = vmul.f32 %v746, %v746
        %v811 = vmul.f32 %v747, %v747
        %v812 = vmul.f32 %v748, %v748
        %v813 = vmul.f32 %v749, %v749
        %v814 = vmul.f32 %v750, %v750
        %v815 = vmul.f32 %v751, %v751
        %v816 = vmul.f32 %v752, %v752
        %v817 = vmul.f32 %v753, %v753
        %v818 = vmul.f32 %v754, %v754
        %v819 = vmul.f32 %v755, %v755
        %v820 = vmul.f32 %v756, %v756
        %v821 = vmul.f32 %v757, %v757
        %v822 = vmul.f32 %v758, %v758
        %v823 = vmul.f32 %v759, %v759
        %v824 = vmul.f32 %v760, %v760
        %v825 = vadd.f32 %v761, %v762
        %826 = vadd.xlane.f32.xlu0 %v825
        %v827 = vpop.xlane.xlu0 %826
        %v828 = vadd.f32 %v763, %v764
        %829 = vadd.xlane.f32.xlu0 %v828
        %v830 = vpop.xlane.xlu0 %829
        %v831 = vadd.f32 %v765, %v766
        %832 = vadd.xlane.f32.xlu0 %v831
        %v833 = vpop.xlane.xlu0 %832
        %v834 = vadd.f32 %v767, %v768
        %835 = vadd.xlane.f32.xlu0 %v834
        %v836 = vpop.xlane.xlu0 %835
        %v837 = vadd.f32 %v769, %v770
        %838 = vadd.xlane.f32.xlu0 %v837
        %v839 = vpop.xlane.xlu0 %838
        %v840 = vadd.f32 %v771, %v772
        %841 = vadd.xlane.f32.xlu0 %v840
        %v842 = vpop.xlane.xlu0 %841
        %v843 = vadd.f32 %v773, %v774
        %844 = vadd.xlane.f32.xlu0 %v843
        %v845 = vpop.xlane.xlu0 %844
        %v846 = vadd.f32 %v775, %v776
        %847 = vadd.xlane.f32.xlu0 %v846
        %v848 = vpop.xlane.xlu0 %847
        %v849 = vadd.f32 %v777, %v778
        %850 = vadd.xlane.f32.xlu0 %v849
        %v851 = vpop.xlane.xlu0 %850
        %v852 = vadd.f32 %v779, %v780
        %853 = vadd.xlane.f32.xlu0 %v852
        %v854 = vpop.xlane.xlu0 %853
        %v855 = vadd.f32 %v781, %v782
        %856 = vadd.xlane.f32.xlu0 %v855
        %v857 = vpop.xlane.xlu0 %856
        %v858 = vadd.f32 %v783, %v784
        %859 = vadd.xlane.f32.xlu0 %v858
        %v860 = vpop.xlane.xlu0 %859
        %v861 = vadd.f32 %v785, %v786
        %862 = vadd.xlane.f32.xlu0 %v861
        %v863 = vpop.xlane.xlu0 %862
        %v864 = vadd.f32 %v787, %v788
        %865 = vadd.xlane.f32.xlu0 %v864
        %v866 = vpop.xlane.xlu0 %865
        %v867 = vadd.f32 %v789, %v790
        %868 = vadd.xlane.f32.xlu0 %v867
        %v869 = vpop.xlane.xlu0 %868
        %v870 = vadd.f32 %v791, %v792
        %871 = vadd.xlane.f32.xlu0 %v870
        %v872 = vpop.xlane.xlu0 %871
        %v873 = vadd.f32 %v793, %v794
        %874 = vadd.xlane.f32.xlu0 %v873
        %v875 = vpop.xlane.xlu0 %874
        %v876 = vadd.f32 %v795, %v796
        %877 = vadd.xlane.f32.xlu0 %v876
        %v878 = vpop.xlane.xlu0 %877
        %v879 = vadd.f32 %v797, %v798
        %880 = vadd.xlane.f32.xlu0 %v879
        %v881 = vpop.xlane.xlu0 %880
        %v882 = vadd.f32 %v799, %v800
        %883 = vadd.xlane.f32.xlu0 %v882
        %v884 = vpop.xlane.xlu0 %883
        %v885 = vadd.f32 %v801, %v802
        %886 = vadd.xlane.f32.xlu0 %v885
        %v887 = vpop.xlane.xlu0 %886
        %v888 = vadd.f32 %v803, %v804
        %889 = vadd.xlane.f32.xlu0 %v888
        %v890 = vpop.xlane.xlu0 %889
        %v891 = vadd.f32 %v805, %v806
        %892 = vadd.xlane.f32.xlu0 %v891
        %v893 = vpop.xlane.xlu0 %892
        %v894 = vadd.f32 %v807, %v808
        %895 = vadd.xlane.f32.xlu0 %v894
        %v896 = vpop.xlane.xlu0 %895
        %v897 = vadd.f32 %v809, %v810
        %898 = vadd.xlane.f32.xlu0 %v897
        %v899 = vpop.xlane.xlu0 %898
        %v900 = vadd.f32 %v811, %v812
        %901 = vadd.xlane.f32.xlu0 %v900
        %v902 = vpop.xlane.xlu0 %901
        %v903 = vadd.f32 %v813, %v814
        %904 = vadd.xlane.f32.xlu0 %v903
        %v905 = vpop.xlane.xlu0 %904
        %v906 = vadd.f32 %v815, %v816
        %907 = vadd.xlane.f32.xlu0 %v906
        %v908 = vpop.xlane.xlu0 %907
        %v909 = vadd.f32 %v817, %v818
        %910 = vadd.xlane.f32.xlu0 %v909
        %v911 = vpop.xlane.xlu0 %910
        %v912 = vadd.f32 %v819, %v820
        %913 = vadd.xlane.f32.xlu0 %v912
        %v914 = vpop.xlane.xlu0 %913
        %v915 = vadd.f32 %v821, %v822
        %916 = vadd.xlane.f32.xlu0 %v915
        %v917 = vpop.xlane.xlu0 %916
        %v918 = vadd.f32 %v823, %v824
        %919 = vadd.xlane.f32.xlu0 %v918
        %v920 = vpop.xlane.xlu0 %919
        %v921 = vmul.f32 %v827, 0.00390625
        %v922 = vmul.f32 %v830, 0.00390625
        %v923 = vmul.f32 %v833, 0.00390625
        %v924 = vmul.f32 %v836, 0.00390625
        %v925 = vmul.f32 %v839, 0.00390625
        %v926 = vmul.f32 %v842, 0.00390625
        %v927 = vmul.f32 %v845, 0.00390625
        %v928 = vmul.f32 %v848, 0.00390625
        %v929 = vmul.f32 %v851, 0.00390625
        %v930 = vmul.f32 %v854, 0.00390625
        %v931 = vmul.f32 %v857, 0.00390625
        %v932 = vmul.f32 %v860, 0.00390625
        %v933 = vmul.f32 %v863, 0.00390625
        %v934 = vmul.f32 %v866, 0.00390625
        %v935 = vmul.f32 %v869, 0.00390625
        %v936 = vmul.f32 %v872, 0.00390625
        %v937 = vmul.f32 %v875, 0.00390625
        %v938 = vmul.f32 %v878, 0.00390625
        %v939 = vmul.f32 %v881, 0.00390625
        %v940 = vmul.f32 %v884, 0.00390625
        %v941 = vmul.f32 %v887, 0.00390625
        %v942 = vmul.f32 %v890, 0.00390625
        %v943 = vmul.f32 %v893, 0.00390625
        %v944 = vmul.f32 %v896, 0.00390625
        %v945 = vmul.f32 %v899, 0.00390625
        %v946 = vmul.f32 %v902, 0.00390625
        %v947 = vmul.f32 %v905, 0.00390625
        %v948 = vmul.f32 %v908, 0.00390625
        %v949 = vmul.f32 %v911, 0.00390625
        %v950 = vmul.f32 %v914, 0.00390625
        %v951 = vmul.f32 %v917, 0.00390625
        %v952 = vmul.f32 %v920, 0.00390625
        %v953 = vadd.f32 %v921, 1e-05
        %v954 = vadd.f32 %v922, 1e-05
        %v955 = vadd.f32 %v923, 1e-05
        %v956 = vadd.f32 %v924, 1e-05
        %v957 = vadd.f32 %v925, 1e-05
        %v958 = vadd.f32 %v926, 1e-05
        %v959 = vadd.f32 %v927, 1e-05
        %v960 = vadd.f32 %v928, 1e-05
        %v961 = vadd.f32 %v929, 1e-05
        %v962 = vadd.f32 %v930, 1e-05
        %v963 = vadd.f32 %v931, 1e-05
        %v964 = vadd.f32 %v932, 1e-05
        %v965 = vadd.f32 %v933, 1e-05
        %v966 = vadd.f32 %v934, 1e-05
        %v967 = vadd.f32 %v935, 1e-05
        %v968 = vadd.f32 %v936, 1e-05
        %v969 = vadd.f32 %v937, 1e-05
        %v970 = vadd.f32 %v938, 1e-05
        %v971 = vadd.f32 %v939, 1e-05
        %v972 = vadd.f32 %v940, 1e-05
        %v973 = vadd.f32 %v941, 1e-05
        %v974 = vadd.f32 %v942, 1e-05
        %v975 = vadd.f32 %v943, 1e-05
        %v976 = vadd.f32 %v944, 1e-05
        %v977 = vadd.f32 %v945, 1e-05
        %v978 = vadd.f32 %v946, 1e-05
        %v979 = vadd.f32 %v947, 1e-05
        %v980 = vadd.f32 %v948, 1e-05
        %v981 = vadd.f32 %v949, 1e-05
        %v982 = vadd.f32 %v950, 1e-05
        %v983 = vadd.f32 %v951, 1e-05
        %v984 = vadd.f32 %v952, 1e-05
        %v985 = vrsqrt.pop %v953
        %v986 = vmul.f32 %v985, %v953
        %v987 = vmul.f32 %v986, %v985
        %v988 = vmul.f32 0.5, %v987
        %v989 = vsub.f32 1.5, %v988
        %v990 = vmul.f32 %v985, %v989
        %vm991 = vweird.f32 %v953
        %vm992 = vweird.f32 %v985
        %vm993 = vmor %vm991, %vm992
        %v994 = vsel %vm993, %v985, %v990
        %v995 = vrsqrt.pop %v954
        %v996 = vmul.f32 %v995, %v954
        %v997 = vmul.f32 %v996, %v995
        %v998 = vmul.f32 0.5, %v997
        %v999 = vsub.f32 1.5, %v998
        %v1000 = vmul.f32 %v995, %v999
        %vm1001 = vweird.f32 %v954
        %vm1002 = vweird.f32 %v995
        %vm1003 = vmor %vm1001, %vm1002
        %v1004 = vsel %vm1003, %v995, %v1000
        %v1005 = vrsqrt.pop %v955
        %v1006 = vmul.f32 %v1005, %v955
        %v1007 = vmul.f32 %v1006, %v1005
        %v1008 = vmul.f32 0.5, %v1007
        %v1009 = vsub.f32 1.5, %v1008
        %v1010 = vmul.f32 %v1005, %v1009
        %vm1011 = vweird.f32 %v955
        %vm1012 = vweird.f32 %v1005
        %vm1013 = vmor %vm1011, %vm1012
        %v1014 = vsel %vm1013, %v1005, %v1010
        %v1015 = vrsqrt.pop %v956
        %v1016 = vmul.f32 %v1015, %v956
        %v1017 = vmul.f32 %v1016, %v1015
        %v1018 = vmul.f32 0.5, %v1017
        %v1019 = vsub.f32 1.5, %v1018
        %v1020 = vmul.f32 %v1015, %v1019
        %vm1021 = vweird.f32 %v956
        %vm1022 = vweird.f32 %v1015
        %vm1023 = vmor %vm1021, %vm1022
        %v1024 = vsel %vm1023, %v1015, %v1020
        %v1025 = vrsqrt.pop %v957
        %v1026 = vmul.f32 %v1025, %v957
        %v1027 = vmul.f32 %v1026, %v1025
        %v1028 = vmul.f32 0.5, %v1027
        %v1029 = vsub.f32 1.5, %v1028
        %v1030 = vmul.f32 %v1025, %v1029
        %vm1031 = vweird.f32 %v957
        %vm1032 = vweird.f32 %v1025
        %vm1033 = vmor %vm1031, %vm1032
        %v1034 = vsel %vm1033, %v1025, %v1030
        %v1035 = vrsqrt.pop %v958
        %v1036 = vmul.f32 %v1035, %v958
        %v1037 = vmul.f32 %v1036, %v1035
        %v1038 = vmul.f32 0.5, %v1037
        %v1039 = vsub.f32 1.5, %v1038
        %v1040 = vmul.f32 %v1035, %v1039
        %vm1041 = vweird.f32 %v958
        %vm1042 = vweird.f32 %v1035
        %vm1043 = vmor %vm1041, %vm1042
        %v1044 = vsel %vm1043, %v1035, %v1040
        %v1045 = vrsqrt.pop %v959
        %v1046 = vmul.f32 %v1045, %v959
        %v1047 = vmul.f32 %v1046, %v1045
        %v1048 = vmul.f32 0.5, %v1047
        %v1049 = vsub.f32 1.5, %v1048
        %v1050 = vmul.f32 %v1045, %v1049
        %vm1051 = vweird.f32 %v959
        %vm1052 = vweird.f32 %v1045
        %vm1053 = vmor %vm1051, %vm1052
        %v1054 = vsel %vm1053, %v1045, %v1050
        %v1055 = vrsqrt.pop %v960
        %v1056 = vmul.f32 %v1055, %v960
        %v1057 = vmul.f32 %v1056, %v1055
        %v1058 = vmul.f32 0.5, %v1057
        %v1059 = vsub.f32 1.5, %v1058
        %v1060 = vmul.f32 %v1055, %v1059
        %vm1061 = vweird.f32 %v960
        %vm1062 = vweird.f32 %v1055
        %vm1063 = vmor %vm1061, %vm1062
        %v1064 = vsel %vm1063, %v1055, %v1060
        %v1065 = vrsqrt.pop %v961
        %v1066 = vmul.f32 %v1065, %v961
        %v1067 = vmul.f32 %v1066, %v1065
        %v1068 = vmul.f32 0.5, %v1067
        %v1069 = vsub.f32 1.5, %v1068
        %v1070 = vmul.f32 %v1065, %v1069
        %vm1071 = vweird.f32 %v961
        %vm1072 = vweird.f32 %v1065
        %vm1073 = vmor %vm1071, %vm1072
        %v1074 = vsel %vm1073, %v1065, %v1070
        %v1075 = vrsqrt.pop %v962
        %v1076 = vmul.f32 %v1075, %v962
        %v1077 = vmul.f32 %v1076, %v1075
        %v1078 = vmul.f32 0.5, %v1077
        %v1079 = vsub.f32 1.5, %v1078
        %v1080 = vmul.f32 %v1075, %v1079
        %vm1081 = vweird.f32 %v962
        %vm1082 = vweird.f32 %v1075
        %vm1083 = vmor %vm1081, %vm1082
        %v1084 = vsel %vm1083, %v1075, %v1080
        %v1085 = vrsqrt.pop %v963
        %v1086 = vmul.f32 %v1085, %v963
        %v1087 = vmul.f32 %v1086, %v1085
        %v1088 = vmul.f32 0.5, %v1087
        %v1089 = vsub.f32 1.5, %v1088
        %v1090 = vmul.f32 %v1085, %v1089
        %vm1091 = vweird.f32 %v963
        %vm1092 = vweird.f32 %v1085
        %vm1093 = vmor %vm1091, %vm1092
        %v1094 = vsel %vm1093, %v1085, %v1090
        %v1095 = vrsqrt.pop %v964
        %v1096 = vmul.f32 %v1095, %v964
        %v1097 = vmul.f32 %v1096, %v1095
        %v1098 = vmul.f32 0.5, %v1097
        %v1099 = vsub.f32 1.5, %v1098
        %v1100 = vmul.f32 %v1095, %v1099
        %vm1101 = vweird.f32 %v964
        %vm1102 = vweird.f32 %v1095
        %vm1103 = vmor %vm1101, %vm1102
        %v1104 = vsel %vm1103, %v1095, %v1100
        %v1105 = vrsqrt.pop %v965
        %v1106 = vmul.f32 %v1105, %v965
        %v1107 = vmul.f32 %v1106, %v1105
        %v1108 = vmul.f32 0.5, %v1107
        %v1109 = vsub.f32 1.5, %v1108
        %v1110 = vmul.f32 %v1105, %v1109
        %vm1111 = vweird.f32 %v965
        %vm1112 = vweird.f32 %v1105
        %vm1113 = vmor %vm1111, %vm1112
        %v1114 = vsel %vm1113, %v1105, %v1110
        %v1115 = vrsqrt.pop %v966
        %v1116 = vmul.f32 %v1115, %v966
        %v1117 = vmul.f32 %v1116, %v1115
        %v1118 = vmul.f32 0.5, %v1117
        %v1119 = vsub.f32 1.5, %v1118
        %v1120 = vmul.f32 %v1115, %v1119
        %vm1121 = vweird.f32 %v966
        %vm1122 = vweird.f32 %v1115
        %vm1123 = vmor %vm1121, %vm1122
        %v1124 = vsel %vm1123, %v1115, %v1120
        %v1125 = vrsqrt.pop %v967
        %v1126 = vmul.f32 %v1125, %v967
        %v1127 = vmul.f32 %v1126, %v1125
        %v1128 = vmul.f32 0.5, %v1127
        %v1129 = vsub.f32 1.5, %v1128
        %v1130 = vmul.f32 %v1125, %v1129
        %vm1131 = vweird.f32 %v967
        %vm1132 = vweird.f32 %v1125
        %vm1133 = vmor %vm1131, %vm1132
        %v1134 = vsel %vm1133, %v1125, %v1130
        %v1135 = vrsqrt.pop %v968
        %v1136 = vmul.f32 %v1135, %v968
        %v1137 = vmul.f32 %v1136, %v1135
        %v1138 = vmul.f32 0.5, %v1137
        %v1139 = vsub.f32 1.5, %v1138
        %v1140 = vmul.f32 %v1135, %v1139
        %vm1141 = vweird.f32 %v968
        %vm1142 = vweird.f32 %v1135
        %vm1143 = vmor %vm1141, %vm1142
        %v1144 = vsel %vm1143, %v1135, %v1140
        %v1145 = vrsqrt.pop %v969
        %v1146 = vmul.f32 %v1145, %v969
        %v1147 = vmul.f32 %v1146, %v1145
        %v1148 = vmul.f32 0.5, %v1147
        %v1149 = vsub.f32 1.5, %v1148
        %v1150 = vmul.f32 %v1145, %v1149
        %vm1151 = vweird.f32 %v969
        %vm1152 = vweird.f32 %v1145
        %vm1153 = vmor %vm1151, %vm1152
        %v1154 = vsel %vm1153, %v1145, %v1150
        %v1155 = vrsqrt.pop %v970
        %v1156 = vmul.f32 %v1155, %v970
        %v1157 = vmul.f32 %v1156, %v1155
        %v1158 = vmul.f32 0.5, %v1157
        %v1159 = vsub.f32 1.5, %v1158
        %v1160 = vmul.f32 %v1155, %v1159
        %vm1161 = vweird.f32 %v970
        %vm1162 = vweird.f32 %v1155
        %vm1163 = vmor %vm1161, %vm1162
        %v1164 = vsel %vm1163, %v1155, %v1160
        %v1165 = vrsqrt.pop %v971
        %v1166 = vmul.f32 %v1165, %v971
        %v1167 = vmul.f32 %v1166, %v1165
        %v1168 = vmul.f32 0.5, %v1167
        %v1169 = vsub.f32 1.5, %v1168
        %v1170 = vmul.f32 %v1165, %v1169
        %vm1171 = vweird.f32 %v971
        %vm1172 = vweird.f32 %v1165
        %vm1173 = vmor %vm1171, %vm1172
        %v1174 = vsel %vm1173, %v1165, %v1170
        %v1175 = vrsqrt.pop %v972
        %v1176 = vmul.f32 %v1175, %v972
        %v1177 = vmul.f32 %v1176, %v1175
        %v1178 = vmul.f32 0.5, %v1177
        %v1179 = vsub.f32 1.5, %v1178
        %v1180 = vmul.f32 %v1175, %v1179
        %vm1181 = vweird.f32 %v972
        %vm1182 = vweird.f32 %v1175
        %vm1183 = vmor %vm1181, %vm1182
        %v1184 = vsel %vm1183, %v1175, %v1180
        %v1185 = vrsqrt.pop %v973
        %v1186 = vmul.f32 %v1185, %v973
        %v1187 = vmul.f32 %v1186, %v1185
        %v1188 = vmul.f32 0.5, %v1187
        %v1189 = vsub.f32 1.5, %v1188
        %v1190 = vmul.f32 %v1185, %v1189
        %vm1191 = vweird.f32 %v973
        %vm1192 = vweird.f32 %v1185
        %vm1193 = vmor %vm1191, %vm1192
        %v1194 = vsel %vm1193, %v1185, %v1190
        %v1195 = vrsqrt.pop %v974
        %v1196 = vmul.f32 %v1195, %v974
        %v1197 = vmul.f32 %v1196, %v1195
        %v1198 = vmul.f32 0.5, %v1197
        %v1199 = vsub.f32 1.5, %v1198
        %v1200 = vmul.f32 %v1195, %v1199
        %vm1201 = vweird.f32 %v974
        %vm1202 = vweird.f32 %v1195
        %vm1203 = vmor %vm1201, %vm1202
        %v1204 = vsel %vm1203, %v1195, %v1200
        %v1205 = vrsqrt.pop %v975
        %v1206 = vmul.f32 %v1205, %v975
        %v1207 = vmul.f32 %v1206, %v1205
        %v1208 = vmul.f32 0.5, %v1207
        %v1209 = vsub.f32 1.5, %v1208
        %v1210 = vmul.f32 %v1205, %v1209
        %vm1211 = vweird.f32 %v975
        %vm1212 = vweird.f32 %v1205
        %vm1213 = vmor %vm1211, %vm1212
        %v1214 = vsel %vm1213, %v1205, %v1210
        %v1215 = vrsqrt.pop %v976
        %v1216 = vmul.f32 %v1215, %v976
        %v1217 = vmul.f32 %v1216, %v1215
        %v1218 = vmul.f32 0.5, %v1217
        %v1219 = vsub.f32 1.5, %v1218
        %v1220 = vmul.f32 %v1215, %v1219
        %vm1221 = vweird.f32 %v976
        %vm1222 = vweird.f32 %v1215
        %vm1223 = vmor %vm1221, %vm1222
        %v1224 = vsel %vm1223, %v1215, %v1220
        %v1225 = vrsqrt.pop %v977
        %v1226 = vmul.f32 %v1225, %v977
        %v1227 = vmul.f32 %v1226, %v1225
        %v1228 = vmul.f32 0.5, %v1227
        %v1229 = vsub.f32 1.5, %v1228
        %v1230 = vmul.f32 %v1225, %v1229
        %vm1231 = vweird.f32 %v977
        %vm1232 = vweird.f32 %v1225
        %vm1233 = vmor %vm1231, %vm1232
        %v1234 = vsel %vm1233, %v1225, %v1230
        %v1235 = vrsqrt.pop %v978
        %v1236 = vmul.f32 %v1235, %v978
        %v1237 = vmul.f32 %v1236, %v1235
        %v1238 = vmul.f32 0.5, %v1237
        %v1239 = vsub.f32 1.5, %v1238
        %v1240 = vmul.f32 %v1235, %v1239
        %vm1241 = vweird.f32 %v978
        %vm1242 = vweird.f32 %v1235
        %vm1243 = vmor %vm1241, %vm1242
        %v1244 = vsel %vm1243, %v1235, %v1240
        %v1245 = vrsqrt.pop %v979
        %v1246 = vmul.f32 %v1245, %v979
        %v1247 = vmul.f32 %v1246, %v1245
        %v1248 = vmul.f32 0.5, %v1247
        %v1249 = vsub.f32 1.5, %v1248
        %v1250 = vmul.f32 %v1245, %v1249
        %vm1251 = vweird.f32 %v979
        %vm1252 = vweird.f32 %v1245
        %vm1253 = vmor %vm1251, %vm1252
        %v1254 = vsel %vm1253, %v1245, %v1250
        %v1255 = vrsqrt.pop %v980
        %v1256 = vmul.f32 %v1255, %v980
        %v1257 = vmul.f32 %v1256, %v1255
        %v1258 = vmul.f32 0.5, %v1257
        %v1259 = vsub.f32 1.5, %v1258
        %v1260 = vmul.f32 %v1255, %v1259
        %vm1261 = vweird.f32 %v980
        %vm1262 = vweird.f32 %v1255
        %vm1263 = vmor %vm1261, %vm1262
        %v1264 = vsel %vm1263, %v1255, %v1260
        %v1265 = vrsqrt.pop %v981
        %v1266 = vmul.f32 %v1265, %v981
        %v1267 = vmul.f32 %v1266, %v1265
        %v1268 = vmul.f32 0.5, %v1267
        %v1269 = vsub.f32 1.5, %v1268
        %v1270 = vmul.f32 %v1265, %v1269
        %vm1271 = vweird.f32 %v981
        %vm1272 = vweird.f32 %v1265
        %vm1273 = vmor %vm1271, %vm1272
        %v1274 = vsel %vm1273, %v1265, %v1270
        %v1275 = vrsqrt.pop %v982
        %v1276 = vmul.f32 %v1275, %v982
        %v1277 = vmul.f32 %v1276, %v1275
        %v1278 = vmul.f32 0.5, %v1277
        %v1279 = vsub.f32 1.5, %v1278
        %v1280 = vmul.f32 %v1275, %v1279
        %vm1281 = vweird.f32 %v982
        %vm1282 = vweird.f32 %v1275
        %vm1283 = vmor %vm1281, %vm1282
        %v1284 = vsel %vm1283, %v1275, %v1280
        %v1285 = vrsqrt.pop %v983
        %v1286 = vmul.f32 %v1285, %v983
        %v1287 = vmul.f32 %v1286, %v1285
        %v1288 = vmul.f32 0.5, %v1287
        %v1289 = vsub.f32 1.5, %v1288
        %v1290 = vmul.f32 %v1285, %v1289
        %vm1291 = vweird.f32 %v983
        %vm1292 = vweird.f32 %v1285
        %vm1293 = vmor %vm1291, %vm1292
        %v1294 = vsel %vm1293, %v1285, %v1290
        %v1295 = vrsqrt.pop %v984
        %v1296 = vmul.f32 %v1295, %v984
        %v1297 = vmul.f32 %v1296, %v1295
        %v1298 = vmul.f32 0.5, %v1297
        %v1299 = vsub.f32 1.5, %v1298
        %v1300 = vmul.f32 %v1295, %v1299
        %vm1301 = vweird.f32 %v984
        %vm1302 = vweird.f32 %v1295
        %vm1303 = vmor %vm1301, %vm1302
        %v1304 = vsel %vm1303, %v1295, %v1300
        %v1305 = vld [vmem:[%s448] sm:$0xff]
        %v1306 = vld [vmem:[%s448 + $0x8] sm:$0xff]
        %v1307 = vld [vmem:[%s448 + $0x10] sm:$0xff]
        %v1308 = vld [vmem:[%s448 + $0x18] sm:$0xff]
        %v1309 = vld [vmem:[%s448 + $0x20] sm:$0xff]
        %v1310 = vld [vmem:[%s448 + $0x28] sm:$0xff]
        %v1311 = vld [vmem:[%s448 + $0x30] sm:$0xff]
        %v1312 = vld [vmem:[%s448 + $0x38] sm:$0xff]
        %v1313 = vld [vmem:[%s448 + $0x40] sm:$0xff]
        %v1314 = vld [vmem:[%s448 + $0x48] sm:$0xff]
        %v1315 = vld [vmem:[%s448 + $0x50] sm:$0xff]
        %v1316 = vld [vmem:[%s448 + $0x58] sm:$0xff]
        %v1317 = vld [vmem:[%s448 + $0x60] sm:$0xff]
        %v1318 = vld [vmem:[%s448 + $0x68] sm:$0xff]
        %v1319 = vld [vmem:[%s448 + $0x70] sm:$0xff]
        %v1320 = vld [vmem:[%s448 + $0x78] sm:$0xff]
        %v1321 = vld [vmem:[%s448 + $0x80] sm:$0xff]
        %v1322 = vld [vmem:[%s448 + $0x88] sm:$0xff]
        %v1323 = vld [vmem:[%s448 + $0x90] sm:$0xff]
        %v1324 = vld [vmem:[%s448 + $0x98] sm:$0xff]
        %v1325 = vld [vmem:[%s448 + $0xa0] sm:$0xff]
        %v1326 = vld [vmem:[%s448 + $0xa8] sm:$0xff]
        %v1327 = vld [vmem:[%s448 + $0xb0] sm:$0xff]
        %v1328 = vld [vmem:[%s448 + $0xb8] sm:$0xff]
        %v1329 = vld [vmem:[%s448 + $0xc0] sm:$0xff]
        %v1330 = vld [vmem:[%s448 + $0xc8] sm:$0xff]
        %v1331 = vld [vmem:[%s448 + $0xd0] sm:$0xff]
        %v1332 = vld [vmem:[%s448 + $0xd8] sm:$0xff]
        %v1333 = vld [vmem:[%s448 + $0xe0] sm:$0xff]
        %v1334 = vld [vmem:[%s448 + $0xe8] sm:$0xff]
        %v1335 = vld [vmem:[%s448 + $0xf0] sm:$0xff]
        %v1336 = vld [vmem:[%s448 + $0xf8] sm:$0xff]
        %v1337 = vmul.f32 %v994, %v1305
        %v1338 = vmul.f32 %v1004, %v1306
        %v1339 = vmul.f32 %v1014, %v1307
        %v1340 = vmul.f32 %v1024, %v1308
        %v1341 = vmul.f32 %v1034, %v1309
        %v1342 = vmul.f32 %v1044, %v1310
        %v1343 = vmul.f32 %v1054, %v1311
        %v1344 = vmul.f32 %v1064, %v1312
        %v1345 = vmul.f32 %v1074, %v1313
        %v1346 = vmul.f32 %v1084, %v1314
        %v1347 = vmul.f32 %v1094, %v1315
        %v1348 = vmul.f32 %v1104, %v1316
        %v1349 = vmul.f32 %v1114, %v1317
        %v1350 = vmul.f32 %v1124, %v1318
        %v1351 = vmul.f32 %v1134, %v1319
        %v1352 = vmul.f32 %v1144, %v1320
        %v1353 = vmul.f32 %v1154, %v1321
        %v1354 = vmul.f32 %v1164, %v1322
        %v1355 = vmul.f32 %v1174, %v1323
        %v1356 = vmul.f32 %v1184, %v1324
        %v1357 = vmul.f32 %v1194, %v1325
        %v1358 = vmul.f32 %v1204, %v1326
        %v1359 = vmul.f32 %v1214, %v1327
        %v1360 = vmul.f32 %v1224, %v1328
        %v1361 = vmul.f32 %v1234, %v1329
        %v1362 = vmul.f32 %v1244, %v1330
        %v1363 = vmul.f32 %v1254, %v1331
        %v1364 = vmul.f32 %v1264, %v1332
        %v1365 = vmul.f32 %v1274, %v1333
        %v1366 = vmul.f32 %v1284, %v1334
        %v1367 = vmul.f32 %v1294, %v1335
        %v1368 = vmul.f32 %v1304, %v1336
        %v1369 = vld [vmem:[%s454] sm:$0xff]
        %v1370 = vld [vmem:[%s454 + $0x8] sm:$0xff]
        %v1371 = vld [vmem:[%s454 + $0x10] sm:$0xff]
        %v1372 = vld [vmem:[%s454 + $0x18] sm:$0xff]
        %v1373 = vld [vmem:[%s454 + $0x20] sm:$0xff]
        %v1374 = vld [vmem:[%s454 + $0x28] sm:$0xff]
        %v1375 = vld [vmem:[%s454 + $0x30] sm:$0xff]
        %v1376 = vld [vmem:[%s454 + $0x38] sm:$0xff]
        %v1377 = vld [vmem:[%s454 + $0x40] sm:$0xff]
        %v1378 = vld [vmem:[%s454 + $0x48] sm:$0xff]
        %v1379 = vld [vmem:[%s454 + $0x50] sm:$0xff]
        %v1380 = vld [vmem:[%s454 + $0x58] sm:$0xff]
        %v1381 = vld [vmem:[%s454 + $0x60] sm:$0xff]
        %v1382 = vld [vmem:[%s454 + $0x68] sm:$0xff]
        %v1383 = vld [vmem:[%s454 + $0x70] sm:$0xff]
        %v1384 = vld [vmem:[%s454 + $0x78] sm:$0xff]
        %v1385 = vld [vmem:[%s454 + $0x80] sm:$0xff]
        %v1386 = vld [vmem:[%s454 + $0x88] sm:$0xff]
        %v1387 = vld [vmem:[%s454 + $0x90] sm:$0xff]
        %v1388 = vld [vmem:[%s454 + $0x98] sm:$0xff]
        %v1389 = vld [vmem:[%s454 + $0xa0] sm:$0xff]
        %v1390 = vld [vmem:[%s454 + $0xa8] sm:$0xff]
        %v1391 = vld [vmem:[%s454 + $0xb0] sm:$0xff]
        %v1392 = vld [vmem:[%s454 + $0xb8] sm:$0xff]
        %v1393 = vld [vmem:[%s454 + $0xc0] sm:$0xff]
        %v1394 = vld [vmem:[%s454 + $0xc8] sm:$0xff]
        %v1395 = vld [vmem:[%s454 + $0xd0] sm:$0xff]
        %v1396 = vld [vmem:[%s454 + $0xd8] sm:$0xff]
        %v1397 = vld [vmem:[%s454 + $0xe0] sm:$0xff]
        %v1398 = vld [vmem:[%s454 + $0xe8] sm:$0xff]
        %v1399 = vld [vmem:[%s454 + $0xf0] sm:$0xff]
        %v1400 = vld [vmem:[%s454 + $0xf8] sm:$0xff]
        %v1401 = vmul.f32 %v665, %v1337
        %v1402 = vmul.f32 %v666, %v1338
        %v1403 = vmul.f32 %v667, %v1339
        %v1404 = vmul.f32 %v668, %v1340
        %v1405 = vmul.f32 %v669, %v1341
        %v1406 = vmul.f32 %v670, %v1342
        %v1407 = vmul.f32 %v671, %v1343
        %v1408 = vmul.f32 %v672, %v1344
        %v1409 = vmul.f32 %v673, %v1345
        %v1410 = vmul.f32 %v674, %v1346
        %v1411 = vmul.f32 %v675, %v1347
        %v1412 = vmul.f32 %v676, %v1348
        %v1413 = vmul.f32 %v677, %v1349
        %v1414 = vmul.f32 %v678, %v1350
        %v1415 = vmul.f32 %v679, %v1351
        %v1416 = vmul.f32 %v680, %v1352
        %v1417 = vmul.f32 %v681, %v1353
        %v1418 = vmul.f32 %v682, %v1354
        %v1419 = vmul.f32 %v683, %v1355
        %v1420 = vmul.f32 %v684, %v1356
        %v1421 = vmul.f32 %v685, %v1357
        %v1422 = vmul.f32 %v686, %v1358
        %v1423 = vmul.f32 %v687, %v1359
        %v1424 = vmul.f32 %v688, %v1360
        %v1425 = vmul.f32 %v689, %v1361
        %v1426 = vmul.f32 %v690, %v1362
        %v1427 = vmul.f32 %v691, %v1363
        %v1428 = vmul.f32 %v692, %v1364
        %v1429 = vmul.f32 %v693, %v1365
        %v1430 = vmul.f32 %v694, %v1366
        %v1431 = vmul.f32 %v695, %v1367
        %v1432 = vmul.f32 %v696, %v1368
        %v1433 = vsub.f32 %v1369, %v1401
        %v1434 = vsub.f32 %v1370, %v1402
        %v1435 = vsub.f32 %v1371, %v1403
        %v1436 = vsub.f32 %v1372, %v1404
        %v1437 = vsub.f32 %v1373, %v1405
        %v1438 = vsub.f32 %v1374, %v1406
        %v1439 = vsub.f32 %v1375, %v1407
        %v1440 = vsub.f32 %v1376, %v1408
        %v1441 = vsub.f32 %v1377, %v1409
        %v1442 = vsub.f32 %v1378, %v1410
        %v1443 = vsub.f32 %v1379, %v1411
        %v1444 = vsub.f32 %v1380, %v1412
        %v1445 = vsub.f32 %v1381, %v1413
        %v1446 = vsub.f32 %v1382, %v1414
        %v1447 = vsub.f32 %v1383, %v1415
        %v1448 = vsub.f32 %v1384, %v1416
        %v1449 = vsub.f32 %v1385, %v1417
        %v1450 = vsub.f32 %v1386, %v1418
        %v1451 = vsub.f32 %v1387, %v1419
        %v1452 = vsub.f32 %v1388, %v1420
        %v1453 = vsub.f32 %v1389, %v1421
        %v1454 = vsub.f32 %v1390, %v1422
        %v1455 = vsub.f32 %v1391, %v1423
        %v1456 = vsub.f32 %v1392, %v1424
        %v1457 = vsub.f32 %v1393, %v1425
        %v1458 = vsub.f32 %v1394, %v1426
        %v1459 = vsub.f32 %v1395, %v1427
        %v1460 = vsub.f32 %v1396, %v1428
        %v1461 = vsub.f32 %v1397, %v1429
        %v1462 = vsub.f32 %v1398, %v1430
        %v1463 = vsub.f32 %v1399, %v1431
        %v1464 = vsub.f32 %v1400, %v1432
        %1466 = vset.pattern.permute.xlu0 0
        %1467 = vperm.xlu0 %1466, %v1337
        %v1468 = vpop.permute.xlu0 %1467
        %1471 = vset.pattern.permute.xlu0 0
        %1472 = vperm.xlu0 %1471, %v1338
        %v1473 = vpop.permute.xlu0 %1472
        %1476 = vset.pattern.permute.xlu0 0
        %1477 = vperm.xlu0 %1476, %v1339
        %v1478 = vpop.permute.xlu0 %1477
        %1481 = vset.pattern.permute.xlu0 0
        %1482 = vperm.xlu0 %1481, %v1340
        %v1483 = vpop.permute.xlu0 %1482
        %1486 = vset.pattern.permute.xlu0 0
        %1487 = vperm.xlu0 %1486, %v1341
        %v1488 = vpop.permute.xlu0 %1487
        %1491 = vset.pattern.permute.xlu0 0
        %1492 = vperm.xlu0 %1491, %v1342
        %v1493 = vpop.permute.xlu0 %1492
        %1496 = vset.pattern.permute.xlu0 0
        %1497 = vperm.xlu0 %1496, %v1343
        %v1498 = vpop.permute.xlu0 %1497
        %1501 = vset.pattern.permute.xlu0 0
        %1502 = vperm.xlu0 %1501, %v1344
        %v1503 = vpop.permute.xlu0 %1502
        %1506 = vset.pattern.permute.xlu0 0
        %1507 = vperm.xlu0 %1506, %v1345
        %v1508 = vpop.permute.xlu0 %1507
        %1511 = vset.pattern.permute.xlu0 0
        %1512 = vperm.xlu0 %1511, %v1346
        %v1513 = vpop.permute.xlu0 %1512
        %1516 = vset.pattern.permute.xlu0 0
        %1517 = vperm.xlu0 %1516, %v1347
        %v1518 = vpop.permute.xlu0 %1517
        %1521 = vset.pattern.permute.xlu0 0
        %1522 = vperm.xlu0 %1521, %v1348
        %v1523 = vpop.permute.xlu0 %1522
        %1526 = vset.pattern.permute.xlu0 0
        %1527 = vperm.xlu0 %1526, %v1349
        %v1528 = vpop.permute.xlu0 %1527
        %1531 = vset.pattern.permute.xlu0 0
        %1532 = vperm.xlu0 %1531, %v1350
        %v1533 = vpop.permute.xlu0 %1532
        %1536 = vset.pattern.permute.xlu0 0
        %1537 = vperm.xlu0 %1536, %v1351
        %v1538 = vpop.permute.xlu0 %1537
        %1541 = vset.pattern.permute.xlu0 0
        %1542 = vperm.xlu0 %1541, %v1352
        %v1543 = vpop.permute.xlu0 %1542
        %1546 = vset.pattern.permute.xlu0 0
        %1547 = vperm.xlu0 %1546, %v1353
        %v1548 = vpop.permute.xlu0 %1547
        %1551 = vset.pattern.permute.xlu0 0
        %1552 = vperm.xlu0 %1551, %v1354
        %v1553 = vpop.permute.xlu0 %1552
        %1556 = vset.pattern.permute.xlu0 0
        %1557 = vperm.xlu0 %1556, %v1355
        %v1558 = vpop.permute.xlu0 %1557
        %1561 = vset.pattern.permute.xlu0 0
        %1562 = vperm.xlu0 %1561, %v1356
        %v1563 = vpop.permute.xlu0 %1562
        %1566 = vset.pattern.permute.xlu0 0
        %1567 = vperm.xlu0 %1566, %v1357
        %v1568 = vpop.permute.xlu0 %1567
        %1571 = vset.pattern.permute.xlu0 0
        %1572 = vperm.xlu0 %1571, %v1358
        %v1573 = vpop.permute.xlu0 %1572
        %1576 = vset.pattern.permute.xlu0 0
        %1577 = vperm.xlu0 %1576, %v1359
        %v1578 = vpop.permute.xlu0 %1577
        %1581 = vset.pattern.permute.xlu0 0
        %1582 = vperm.xlu0 %1581, %v1360
        %v1583 = vpop.permute.xlu0 %1582
        %1586 = vset.pattern.permute.xlu0 0
        %1587 = vperm.xlu0 %1586, %v1361
        %v1588 = vpop.permute.xlu0 %1587
        %1591 = vset.pattern.permute.xlu0 0
        %1592 = vperm.xlu0 %1591, %v1362
        %v1593 = vpop.permute.xlu0 %1592
        %1596 = vset.pattern.permute.xlu0 0
        %1597 = vperm.xlu0 %1596, %v1363
        %v1598 = vpop.permute.xlu0 %1597
        %1601 = vset.pattern.permute.xlu0 0
        %1602 = vperm.xlu0 %1601, %v1364
        %v1603 = vpop.permute.xlu0 %1602
        %1606 = vset.pattern.permute.xlu0 0
        %1607 = vperm.xlu0 %1606, %v1365
        %v1608 = vpop.permute.xlu0 %1607
        %1611 = vset.pattern.permute.xlu0 0
        %1612 = vperm.xlu0 %1611, %v1366
        %v1613 = vpop.permute.xlu0 %1612
        %1616 = vset.pattern.permute.xlu0 0
        %1617 = vperm.xlu0 %1616, %v1367
        %v1618 = vpop.permute.xlu0 %1617
        %1621 = vset.pattern.permute.xlu0 0
        %1622 = vperm.xlu0 %1621, %v1368
        %v1623 = vpop.permute.xlu0 %1622
        %v1625 = vmul.f32 %v505, %v1468
        %v1626 = vmul.f32 %v506, %v1468
        %v1627 = vmul.f32 %v507, %v1473
        %v1628 = vmul.f32 %v508, %v1473
        %v1629 = vmul.f32 %v509, %v1478
        %v1630 = vmul.f32 %v510, %v1478
        %v1631 = vmul.f32 %v511, %v1483
        %v1632 = vmul.f32 %v512, %v1483
        %v1633 = vmul.f32 %v513, %v1488
        %v1634 = vmul.f32 %v514, %v1488
        %v1635 = vmul.f32 %v515, %v1493
        %v1636 = vmul.f32 %v516, %v1493
        %v1637 = vmul.f32 %v517, %v1498
        %v1638 = vmul.f32 %v518, %v1498
        %v1639 = vmul.f32 %v519, %v1503
        %v1640 = vmul.f32 %v520, %v1503
        %v1641 = vmul.f32 %v521, %v1508
        %v1642 = vmul.f32 %v522, %v1508
        %v1643 = vmul.f32 %v523, %v1513
        %v1644 = vmul.f32 %v524, %v1513
        %v1645 = vmul.f32 %v525, %v1518
        %v1646 = vmul.f32 %v526, %v1518
        %v1647 = vmul.f32 %v527, %v1523
        %v1648 = vmul.f32 %v528, %v1523
        %v1649 = vmul.f32 %v529, %v1528
        %v1650 = vmul.f32 %v530, %v1528
        %v1651 = vmul.f32 %v531, %v1533
        %v1652 = vmul.f32 %v532, %v1533
        %v1653 = vmul.f32 %v533, %v1538
        %v1654 = vmul.f32 %v534, %v1538
        %v1655 = vmul.f32 %v535, %v1543
        %v1656 = vmul.f32 %v536, %v1543
        %v1657 = vmul.f32 %v537, %v1548
        %v1658 = vmul.f32 %v538, %v1548
        %v1659 = vmul.f32 %v539, %v1553
        %v1660 = vmul.f32 %v540, %v1553
        %v1661 = vmul.f32 %v541, %v1558
        %v1662 = vmul.f32 %v542, %v1558
        %v1663 = vmul.f32 %v543, %v1563
        %v1664 = vmul.f32 %v544, %v1563
        %v1665 = vmul.f32 %v545, %v1568
        %v1666 = vmul.f32 %v546, %v1568
        %v1667 = vmul.f32 %v547, %v1573
        %v1668 = vmul.f32 %v548, %v1573
        %v1669 = vmul.f32 %v549, %v1578
        %v1670 = vmul.f32 %v550, %v1578
        %v1671 = vmul.f32 %v551, %v1583
        %v1672 = vmul.f32 %v552, %v1583
        %v1673 = vmul.f32 %v553, %v1588
        %v1674 = vmul.f32 %v554, %v1588
        %v1675 = vmul.f32 %v555, %v1593
        %v1676 = vmul.f32 %v556, %v1593
        %v1677 = vmul.f32 %v557, %v1598
        %v1678 = vmul.f32 %v558, %v1598
        %v1679 = vmul.f32 %v559, %v1603
        %v1680 = vmul.f32 %v560, %v1603
        %v1681 = vmul.f32 %v561, %v1608
        %v1682 = vmul.f32 %v562, %v1608
        %v1683 = vmul.f32 %v563, %v1613
        %v1684 = vmul.f32 %v564, %v1613
        %v1685 = vmul.f32 %v565, %v1618
        %v1686 = vmul.f32 %v566, %v1618
        %v1687 = vmul.f32 %v567, %v1623
        %v1688 = vmul.f32 %v568, %v1623
        %1690 = vset.pattern.permute.xlu0 0
        %1691 = vperm.xlu0 %1690, %v1433
        %v1692 = vpop.permute.xlu0 %1691
        %1695 = vset.pattern.permute.xlu0 0
        %1696 = vperm.xlu0 %1695, %v1434
        %v1697 = vpop.permute.xlu0 %1696
        %1700 = vset.pattern.permute.xlu0 0
        %1701 = vperm.xlu0 %1700, %v1435
        %v1702 = vpop.permute.xlu0 %1701
        %1705 = vset.pattern.permute.xlu0 0
        %1706 = vperm.xlu0 %1705, %v1436
        %v1707 = vpop.permute.xlu0 %1706
        %1710 = vset.pattern.permute.xlu0 0
        %1711 = vperm.xlu0 %1710, %v1437
        %v1712 = vpop.permute.xlu0 %1711
        %1715 = vset.pattern.permute.xlu0 0
        %1716 = vperm.xlu0 %1715, %v1438
        %v1717 = vpop.permute.xlu0 %1716
        %1720 = vset.pattern.permute.xlu0 0
        %1721 = vperm.xlu0 %1720, %v1439
        %v1722 = vpop.permute.xlu0 %1721
        %1725 = vset.pattern.permute.xlu0 0
        %1726 = vperm.xlu0 %1725, %v1440
        %v1727 = vpop.permute.xlu0 %1726
        %1730 = vset.pattern.permute.xlu0 0
        %1731 = vperm.xlu0 %1730, %v1441
        %v1732 = vpop.permute.xlu0 %1731
        %1735 = vset.pattern.permute.xlu0 0
        %1736 = vperm.xlu0 %1735, %v1442
        %v1737 = vpop.permute.xlu0 %1736
        %1740 = vset.pattern.permute.xlu0 0
        %1741 = vperm.xlu0 %1740, %v1443
        %v1742 = vpop.permute.xlu0 %1741
        %1745 = vset.pattern.permute.xlu0 0
        %1746 = vperm.xlu0 %1745, %v1444
        %v1747 = vpop.permute.xlu0 %1746
        %1750 = vset.pattern.permute.xlu0 0
        %1751 = vperm.xlu0 %1750, %v1445
        %v1752 = vpop.permute.xlu0 %1751
        %1755 = vset.pattern.permute.xlu0 0
        %1756 = vperm.xlu0 %1755, %v1446
        %v1757 = vpop.permute.xlu0 %1756
        %1760 = vset.pattern.permute.xlu0 0
        %1761 = vperm.xlu0 %1760, %v1447
        %v1762 = vpop.permute.xlu0 %1761
        %1765 = vset.pattern.permute.xlu0 0
        %1766 = vperm.xlu0 %1765, %v1448
        %v1767 = vpop.permute.xlu0 %1766
        %1770 = vset.pattern.permute.xlu0 0
        %1771 = vperm.xlu0 %1770, %v1449
        %v1772 = vpop.permute.xlu0 %1771
        %1775 = vset.pattern.permute.xlu0 0
        %1776 = vperm.xlu0 %1775, %v1450
        %v1777 = vpop.permute.xlu0 %1776
        %1780 = vset.pattern.permute.xlu0 0
        %1781 = vperm.xlu0 %1780, %v1451
        %v1782 = vpop.permute.xlu0 %1781
        %1785 = vset.pattern.permute.xlu0 0
        %1786 = vperm.xlu0 %1785, %v1452
        %v1787 = vpop.permute.xlu0 %1786
        %1790 = vset.pattern.permute.xlu0 0
        %1791 = vperm.xlu0 %1790, %v1453
        %v1792 = vpop.permute.xlu0 %1791
        %1795 = vset.pattern.permute.xlu0 0
        %1796 = vperm.xlu0 %1795, %v1454
        %v1797 = vpop.permute.xlu0 %1796
        %1800 = vset.pattern.permute.xlu0 0
        %1801 = vperm.xlu0 %1800, %v1455
        %v1802 = vpop.permute.xlu0 %1801
        %1805 = vset.pattern.permute.xlu0 0
        %1806 = vperm.xlu0 %1805, %v1456
        %v1807 = vpop.permute.xlu0 %1806
        %1810 = vset.pattern.permute.xlu0 0
        %1811 = vperm.xlu0 %1810, %v1457
        %v1812 = vpop.permute.xlu0 %1811
        %1815 = vset.pattern.permute.xlu0 0
        %1816 = vperm.xlu0 %1815, %v1458
        %v1817 = vpop.permute.xlu0 %1816
        %1820 = vset.pattern.permute.xlu0 0
        %1821 = vperm.xlu0 %1820, %v1459
        %v1822 = vpop.permute.xlu0 %1821
        %1825 = vset.pattern.permute.xlu0 0
        %1826 = vperm.xlu0 %1825, %v1460
        %v1827 = vpop.permute.xlu0 %1826
        %1830 = vset.pattern.permute.xlu0 0
        %1831 = vperm.xlu0 %1830, %v1461
        %v1832 = vpop.permute.xlu0 %1831
        %1835 = vset.pattern.permute.xlu0 0
        %1836 = vperm.xlu0 %1835, %v1462
        %v1837 = vpop.permute.xlu0 %1836
        %1840 = vset.pattern.permute.xlu0 0
        %1841 = vperm.xlu0 %1840, %v1463
        %v1842 = vpop.permute.xlu0 %1841
        %1845 = vset.pattern.permute.xlu0 0
        %1846 = vperm.xlu0 %1845, %v1464
        %v1847 = vpop.permute.xlu0 %1846
        %v1849 = vadd.f32 %v1625, %v1692
        %v1850 = vadd.f32 %v1626, %v1692
        %v1851 = vadd.f32 %v1627, %v1697
        %v1852 = vadd.f32 %v1628, %v1697
        %v1853 = vadd.f32 %v1629, %v1702
        %v1854 = vadd.f32 %v1630, %v1702
        %v1855 = vadd.f32 %v1631, %v1707
        %v1856 = vadd.f32 %v1632, %v1707
        %v1857 = vadd.f32 %v1633, %v1712
        %v1858 = vadd.f32 %v1634, %v1712
        %v1859 = vadd.f32 %v1635, %v1717
        %v1860 = vadd.f32 %v1636, %v1717
        %v1861 = vadd.f32 %v1637, %v1722
        %v1862 = vadd.f32 %v1638, %v1722
        %v1863 = vadd.f32 %v1639, %v1727
        %v1864 = vadd.f32 %v1640, %v1727
        %v1865 = vadd.f32 %v1641, %v1732
        %v1866 = vadd.f32 %v1642, %v1732
        %v1867 = vadd.f32 %v1643, %v1737
        %v1868 = vadd.f32 %v1644, %v1737
        %v1869 = vadd.f32 %v1645, %v1742
        %v1870 = vadd.f32 %v1646, %v1742
        %v1871 = vadd.f32 %v1647, %v1747
        %v1872 = vadd.f32 %v1648, %v1747
        %v1873 = vadd.f32 %v1649, %v1752
        %v1874 = vadd.f32 %v1650, %v1752
        %v1875 = vadd.f32 %v1651, %v1757
        %v1876 = vadd.f32 %v1652, %v1757
        %v1877 = vadd.f32 %v1653, %v1762
        %v1878 = vadd.f32 %v1654, %v1762
        %v1879 = vadd.f32 %v1655, %v1767
        %v1880 = vadd.f32 %v1656, %v1767
        %v1881 = vadd.f32 %v1657, %v1772
        %v1882 = vadd.f32 %v1658, %v1772
        %v1883 = vadd.f32 %v1659, %v1777
        %v1884 = vadd.f32 %v1660, %v1777
        %v1885 = vadd.f32 %v1661, %v1782
        %v1886 = vadd.f32 %v1662, %v1782
        %v1887 = vadd.f32 %v1663, %v1787
        %v1888 = vadd.f32 %v1664, %v1787
        %v1889 = vadd.f32 %v1665, %v1792
        %v1890 = vadd.f32 %v1666, %v1792
        %v1891 = vadd.f32 %v1667, %v1797
        %v1892 = vadd.f32 %v1668, %v1797
        %v1893 = vadd.f32 %v1669, %v1802
        %v1894 = vadd.f32 %v1670, %v1802
        %v1895 = vadd.f32 %v1671, %v1807
        %v1896 = vadd.f32 %v1672, %v1807
        %v1897 = vadd.f32 %v1673, %v1812
        %v1898 = vadd.f32 %v1674, %v1812
        %v1899 = vadd.f32 %v1675, %v1817
        %v1900 = vadd.f32 %v1676, %v1817
        %v1901 = vadd.f32 %v1677, %v1822
        %v1902 = vadd.f32 %v1678, %v1822
        %v1903 = vadd.f32 %v1679, %v1827
        %v1904 = vadd.f32 %v1680, %v1827
        %v1905 = vadd.f32 %v1681, %v1832
        %v1906 = vadd.f32 %v1682, %v1832
        %v1907 = vadd.f32 %v1683, %v1837
        %v1908 = vadd.f32 %v1684, %v1837
        %v1909 = vadd.f32 %v1685, %v1842
        %v1910 = vadd.f32 %v1686, %v1842
        %v1911 = vadd.f32 %v1687, %v1847
        %v1912 = vadd.f32 %v1688, %v1847
        %v1913 = vld [vmem:[%s366] sm:$0xff]
        %v1914 = vld [vmem:[%s366 + $0x8] sm:$0xff]
        %v1915 = vld [vmem:[%s366 + $0x10] sm:$0xff]
        %v1916 = vld [vmem:[%s366 + $0x18] sm:$0xff]
        %v1917 = vld [vmem:[%s366 + $0x20] sm:$0xff]
        %v1918 = vld [vmem:[%s366 + $0x28] sm:$0xff]
        %v1919 = vld [vmem:[%s366 + $0x30] sm:$0xff]
        %v1920 = vld [vmem:[%s366 + $0x38] sm:$0xff]
        %v1921 = vld [vmem:[%s366 + $0x40] sm:$0xff]
        %v1922 = vld [vmem:[%s366 + $0x48] sm:$0xff]
        %v1923 = vld [vmem:[%s366 + $0x50] sm:$0xff]
        %v1924 = vld [vmem:[%s366 + $0x58] sm:$0xff]
        %v1925 = vld [vmem:[%s366 + $0x60] sm:$0xff]
        %v1926 = vld [vmem:[%s366 + $0x68] sm:$0xff]
        %v1927 = vld [vmem:[%s366 + $0x70] sm:$0xff]
        %v1928 = vld [vmem:[%s366 + $0x78] sm:$0xff]
        %v1929 = vld [vmem:[%s366 + $0x80] sm:$0xff]
        %v1930 = vld [vmem:[%s366 + $0x88] sm:$0xff]
        %v1931 = vld [vmem:[%s366 + $0x90] sm:$0xff]
        %v1932 = vld [vmem:[%s366 + $0x98] sm:$0xff]
        %v1933 = vld [vmem:[%s366 + $0xa0] sm:$0xff]
        %v1934 = vld [vmem:[%s366 + $0xa8] sm:$0xff]
        %v1935 = vld [vmem:[%s366 + $0xb0] sm:$0xff]
        %v1936 = vld [vmem:[%s366 + $0xb8] sm:$0xff]
        %v1937 = vld [vmem:[%s366 + $0xc0] sm:$0xff]
        %v1938 = vld [vmem:[%s366 + $0xc8] sm:$0xff]
        %v1939 = vld [vmem:[%s366 + $0xd0] sm:$0xff]
        %v1940 = vld [vmem:[%s366 + $0xd8] sm:$0xff]
        %v1941 = vld [vmem:[%s366 + $0xe0] sm:$0xff]
        %v1942 = vld [vmem:[%s366 + $0xe8] sm:$0xff]
        %v1943 = vld [vmem:[%s366 + $0xf0] sm:$0xff]
        %v1944 = vld [vmem:[%s366 + $0xf8] sm:$0xff]
        %v1945 = vld [vmem:[%s366 + $0x100] sm:$0xff]
        %v1946 = vld [vmem:[%s366 + $0x108] sm:$0xff]
        %v1947 = vld [vmem:[%s366 + $0x110] sm:$0xff]
        %v1948 = vld [vmem:[%s366 + $0x118] sm:$0xff]
        %v1949 = vld [vmem:[%s366 + $0x120] sm:$0xff]
        %v1950 = vld [vmem:[%s366 + $0x128] sm:$0xff]
        %v1951 = vld [vmem:[%s366 + $0x130] sm:$0xff]
        %v1952 = vld [vmem:[%s366 + $0x138] sm:$0xff]
        %v1953 = vld [vmem:[%s366 + $0x140] sm:$0xff]
        %v1954 = vld [vmem:[%s366 + $0x148] sm:$0xff]
        %v1955 = vld [vmem:[%s366 + $0x150] sm:$0xff]
        %v1956 = vld [vmem:[%s366 + $0x158] sm:$0xff]
        %v1957 = vld [vmem:[%s366 + $0x160] sm:$0xff]
        %v1958 = vld [vmem:[%s366 + $0x168] sm:$0xff]
        %v1959 = vld [vmem:[%s366 + $0x170] sm:$0xff]
        %v1960 = vld [vmem:[%s366 + $0x178] sm:$0xff]
        %v1961 = vld [vmem:[%s366 + $0x180] sm:$0xff]
        %v1962 = vld [vmem:[%s366 + $0x188] sm:$0xff]
        %v1963 = vld [vmem:[%s366 + $0x190] sm:$0xff]
        %v1964 = vld [vmem:[%s366 + $0x198] sm:$0xff]
        %v1965 = vld [vmem:[%s366 + $0x1a0] sm:$0xff]
        %v1966 = vld [vmem:[%s366 + $0x1a8] sm:$0xff]
        %v1967 = vld [vmem:[%s366 + $0x1b0] sm:$0xff]
        %v1968 = vld [vmem:[%s366 + $0x1b8] sm:$0xff]
        %v1969 = vld [vmem:[%s366 + $0x1c0] sm:$0xff]
        %v1970 = vld [vmem:[%s366 + $0x1c8] sm:$0xff]
        %v1971 = vld [vmem:[%s366 + $0x1d0] sm:$0xff]
        %v1972 = vld [vmem:[%s366 + $0x1d8] sm:$0xff]
        %v1973 = vld [vmem:[%s366 + $0x1e0] sm:$0xff]
        %v1974 = vld [vmem:[%s366 + $0x1e8] sm:$0xff]
        %v1975 = vld [vmem:[%s366 + $0x1f0] sm:$0xff]
        %v1976 = vld [vmem:[%s366 + $0x1f8] sm:$0xff]
        %v1977 = vadd.f32 %v1849, %v1913
        %v1978 = vadd.f32 %v1850, %v1914
        %v1979 = vadd.f32 %v1851, %v1915
        %v1980 = vadd.f32 %v1852, %v1916
        %v1981 = vadd.f32 %v1853, %v1917
        %v1982 = vadd.f32 %v1854, %v1918
        %v1983 = vadd.f32 %v1855, %v1919
        %v1984 = vadd.f32 %v1856, %v1920
        %v1985 = vadd.f32 %v1857, %v1921
        %v1986 = vadd.f32 %v1858, %v1922
        %v1987 = vadd.f32 %v1859, %v1923
        %v1988 = vadd.f32 %v1860, %v1924
        %v1989 = vadd.f32 %v1861, %v1925
        %v1990 = vadd.f32 %v1862, %v1926
        %v1991 = vadd.f32 %v1863, %v1927
        %v1992 = vadd.f32 %v1864, %v1928
        %v1993 = vadd.f32 %v1865, %v1929
        %v1994 = vadd.f32 %v1866, %v1930
        %v1995 = vadd.f32 %v1867, %v1931
        %v1996 = vadd.f32 %v1868, %v1932
        %v1997 = vadd.f32 %v1869, %v1933
        %v1998 = vadd.f32 %v1870, %v1934
        %v1999 = vadd.f32 %v1871, %v1935
        %v2000 = vadd.f32 %v1872, %v1936
        %v2001 = vadd.f32 %v1873, %v1937
        %v2002 = vadd.f32 %v1874, %v1938
        %v2003 = vadd.f32 %v1875, %v1939
        %v2004 = vadd.f32 %v1876, %v1940
        %v2005 = vadd.f32 %v1877, %v1941
        %v2006 = vadd.f32 %v1878, %v1942
        %v2007 = vadd.f32 %v1879, %v1943
        %v2008 = vadd.f32 %v1880, %v1944
        %v2009 = vadd.f32 %v1881, %v1945
        %v2010 = vadd.f32 %v1882, %v1946
        %v2011 = vadd.f32 %v1883, %v1947
        %v2012 = vadd.f32 %v1884, %v1948
        %v2013 = vadd.f32 %v1885, %v1949
        %v2014 = vadd.f32 %v1886, %v1950
        %v2015 = vadd.f32 %v1887, %v1951
        %v2016 = vadd.f32 %v1888, %v1952
        %v2017 = vadd.f32 %v1889, %v1953
        %v2018 = vadd.f32 %v1890, %v1954
        %v2019 = vadd.f32 %v1891, %v1955
        %v2020 = vadd.f32 %v1892, %v1956
        %v2021 = vadd.f32 %v1893, %v1957
        %v2022 = vadd.f32 %v1894, %v1958
        %v2023 = vadd.f32 %v1895, %v1959
        %v2024 = vadd.f32 %v1896, %v1960
        %v2025 = vadd.f32 %v1897, %v1961
        %v2026 = vadd.f32 %v1898, %v1962
        %v2027 = vadd.f32 %v1899, %v1963
        %v2028 = vadd.f32 %v1900, %v1964
        %v2029 = vadd.f32 %v1901, %v1965
        %v2030 = vadd.f32 %v1902, %v1966
        %v2031 = vadd.f32 %v1903, %v1967
        %v2032 = vadd.f32 %v1904, %v1968
        %v2033 = vadd.f32 %v1905, %v1969
        %v2034 = vadd.f32 %v1906, %v1970
        %v2035 = vadd.f32 %v1907, %v1971
        %v2036 = vadd.f32 %v1908, %v1972
        %v2037 = vadd.f32 %v1909, %v1973
        %v2038 = vadd.f32 %v1910, %v1974
        %v2039 = vadd.f32 %v1911, %v1975
        %v2040 = vadd.f32 %v1912, %v1976
        %v2041 = vmax.f32 %v1977, 0.0
        %v2042 = vmax.f32 %v1978, 0.0
        %v2043 = vmax.f32 %v1979, 0.0
        %v2044 = vmax.f32 %v1980, 0.0
        %v2045 = vmax.f32 %v1981, 0.0
        %v2046 = vmax.f32 %v1982, 0.0
        %v2047 = vmax.f32 %v1983, 0.0
        %v2048 = vmax.f32 %v1984, 0.0
        %v2049 = vmax.f32 %v1985, 0.0
        %v2050 = vmax.f32 %v1986, 0.0
        %v2051 = vmax.f32 %v1987, 0.0
        %v2052 = vmax.f32 %v1988, 0.0
        %v2053 = vmax.f32 %v1989, 0.0
        %v2054 = vmax.f32 %v1990, 0.0
        %v2055 = vmax.f32 %v1991, 0.0
        %v2056 = vmax.f32 %v1992, 0.0
        %v2057 = vmax.f32 %v1993, 0.0
        %v2058 = vmax.f32 %v1994, 0.0
        %v2059 = vmax.f32 %v1995, 0.0
        %v2060 = vmax.f32 %v1996, 0.0
        %v2061 = vmax.f32 %v1997, 0.0
        %v2062 = vmax.f32 %v1998, 0.0
        %v2063 = vmax.f32 %v1999, 0.0
        %v2064 = vmax.f32 %v2000, 0.0
        %v2065 = vmax.f32 %v2001, 0.0
        %v2066 = vmax.f32 %v2002, 0.0
        %v2067 = vmax.f32 %v2003, 0.0
        %v2068 = vmax.f32 %v2004, 0.0
        %v2069 = vmax.f32 %v2005, 0.0
        %v2070 = vmax.f32 %v2006, 0.0
        %v2071 = vmax.f32 %v2007, 0.0
        %v2072 = vmax.f32 %v2008, 0.0
        %v2073 = vmax.f32 %v2009, 0.0
        %v2074 = vmax.f32 %v2010, 0.0
        %v2075 = vmax.f32 %v2011, 0.0
        %v2076 = vmax.f32 %v2012, 0.0
        %v2077 = vmax.f32 %v2013, 0.0
        %v2078 = vmax.f32 %v2014, 0.0
        %v2079 = vmax.f32 %v2015, 0.0
        %v2080 = vmax.f32 %v2016, 0.0
        %v2081 = vmax.f32 %v2017, 0.0
        %v2082 = vmax.f32 %v2018, 0.0
        %v2083 = vmax.f32 %v2019, 0.0
        %v2084 = vmax.f32 %v2020, 0.0
        %v2085 = vmax.f32 %v2021, 0.0
        %v2086 = vmax.f32 %v2022, 0.0
        %v2087 = vmax.f32 %v2023, 0.0
        %v2088 = vmax.f32 %v2024, 0.0
        %v2089 = vmax.f32 %v2025, 0.0
        %v2090 = vmax.f32 %v2026, 0.0
        %v2091 = vmax.f32 %v2027, 0.0
        %v2092 = vmax.f32 %v2028, 0.0
        %v2093 = vmax.f32 %v2029, 0.0
        %v2094 = vmax.f32 %v2030, 0.0
        %v2095 = vmax.f32 %v2031, 0.0
        %v2096 = vmax.f32 %v2032, 0.0
        %v2097 = vmax.f32 %v2033, 0.0
        %v2098 = vmax.f32 %v2034, 0.0
        %v2099 = vmax.f32 %v2035, 0.0
        %v2100 = vmax.f32 %v2036, 0.0
        %v2101 = vmax.f32 %v2037, 0.0
        %v2102 = vmax.f32 %v2038, 0.0
        %v2103 = vmax.f32 %v2039, 0.0
        %v2104 = vmax.f32 %v2040, 0.0
        %v2105 = vld [vmem:[%s376] sm:$0xff]
        %v2106 = vld [vmem:[%s376 + $0x8] sm:$0xff]
        %v2107 = vld [vmem:[%s376 + $0x10] sm:$0xff]
        %v2108 = vld [vmem:[%s376 + $0x18] sm:$0xff]
        %v2109 = vld [vmem:[%s376 + $0x20] sm:$0xff]
        %v2110 = vld [vmem:[%s376 + $0x28] sm:$0xff]
        %v2111 = vld [vmem:[%s376 + $0x30] sm:$0xff]
        %v2112 = vld [vmem:[%s376 + $0x38] sm:$0xff]
        %v2113 = vld [vmem:[%s376 + $0x40] sm:$0xff]
        %v2114 = vld [vmem:[%s376 + $0x48] sm:$0xff]
        %v2115 = vld [vmem:[%s376 + $0x50] sm:$0xff]
        %v2116 = vld [vmem:[%s376 + $0x58] sm:$0xff]
        %v2117 = vld [vmem:[%s376 + $0x60] sm:$0xff]
        %v2118 = vld [vmem:[%s376 + $0x68] sm:$0xff]
        %v2119 = vld [vmem:[%s376 + $0x70] sm:$0xff]
        %v2120 = vld [vmem:[%s376 + $0x78] sm:$0xff]
        %v2121 = vld [vmem:[%s376 + $0x80] sm:$0xff]
        %v2122 = vld [vmem:[%s376 + $0x88] sm:$0xff]
        %v2123 = vld [vmem:[%s376 + $0x90] sm:$0xff]
        %v2124 = vld [vmem:[%s376 + $0x98] sm:$0xff]
        %v2125 = vld [vmem:[%s376 + $0xa0] sm:$0xff]
        %v2126 = vld [vmem:[%s376 + $0xa8] sm:$0xff]
        %v2127 = vld [vmem:[%s376 + $0xb0] sm:$0xff]
        %v2128 = vld [vmem:[%s376 + $0xb8] sm:$0xff]
        %v2129 = vld [vmem:[%s376 + $0xc0] sm:$0xff]
        %v2130 = vld [vmem:[%s376 + $0xc8] sm:$0xff]
        %v2131 = vld [vmem:[%s376 + $0xd0] sm:$0xff]
        %v2132 = vld [vmem:[%s376 + $0xd8] sm:$0xff]
        %v2133 = vld [vmem:[%s376 + $0xe0] sm:$0xff]
        %v2134 = vld [vmem:[%s376 + $0xe8] sm:$0xff]
        %v2135 = vld [vmem:[%s376 + $0xf0] sm:$0xff]
        %v2136 = vld [vmem:[%s376 + $0xf8] sm:$0xff]
        %v2137 = vld [vmem:[#allocation2] sm:$0xff]
        %v2138 = vld [vmem:[#allocation2 + $0x8] sm:$0xff]
        %v2139 = vld [vmem:[#allocation2 + $0x10] sm:$0xff]
        %v2140 = vld [vmem:[#allocation2 + $0x18] sm:$0xff]
        %v2141 = vld [vmem:[#allocation2 + $0x20] sm:$0xff]
        %v2142 = vld [vmem:[#allocation2 + $0x28] sm:$0xff]
        %v2143 = vld [vmem:[#allocation2 + $0x30] sm:$0xff]
        %v2144 = vld [vmem:[#allocation2 + $0x38] sm:$0xff]
        %v2145 = vld [vmem:[#allocation2 + $0x40] sm:$0xff]
        %v2146 = vld [vmem:[#allocation2 + $0x48] sm:$0xff]
        %v2147 = vld [vmem:[#allocation2 + $0x50] sm:$0xff]
        %v2148 = vld [vmem:[#allocation2 + $0x58] sm:$0xff]
        %v2149 = vld [vmem:[#allocation2 + $0x60] sm:$0xff]
        %v2150 = vld [vmem:[#allocation2 + $0x68] sm:$0xff]
        %v2151 = vld [vmem:[#allocation2 + $0x70] sm:$0xff]
        %v2152 = vld [vmem:[#allocation2 + $0x78] sm:$0xff]
        %v2153 = vld [vmem:[#allocation2 + $0x80] sm:$0xff]
        %v2154 = vld [vmem:[#allocation2 + $0x88] sm:$0xff]
        %v2155 = vld [vmem:[#allocation2 + $0x90] sm:$0xff]
        %v2156 = vld [vmem:[#allocation2 + $0x98] sm:$0xff]
        %v2157 = vld [vmem:[#allocation2 + $0xa0] sm:$0xff]
        %v2158 = vld [vmem:[#allocation2 + $0xa8] sm:$0xff]
        %v2159 = vld [vmem:[#allocation2 + $0xb0] sm:$0xff]
        %v2160 = vld [vmem:[#allocation2 + $0xb8] sm:$0xff]
        %v2161 = vld [vmem:[#allocation2 + $0xc0] sm:$0xff]
        %v2162 = vld [vmem:[#allocation2 + $0xc8] sm:$0xff]
        %v2163 = vld [vmem:[#allocation2 + $0xd0] sm:$0xff]
        %v2164 = vld [vmem:[#allocation2 + $0xd8] sm:$0xff]
        %v2165 = vld [vmem:[#allocation2 + $0xe0] sm:$0xff]
        %v2166 = vld [vmem:[#allocation2 + $0xe8] sm:$0xff]
        %v2167 = vld [vmem:[#allocation2 + $0xf0] sm:$0xff]
        %v2168 = vld [vmem:[#allocation2 + $0xf8] sm:$0xff]
        %2169 = vmatpush.msra.mxu0 %v2071
        %2170 = vmatpush.msra.mxu0 %v2069
        %2171 = vmatpush.msra.mxu0 %v2067
        %2172 = vmatpush.msra.mxu0 %v2065
        %2173 = vmatpush.msra.mxu0 %v2063
        %2174 = vmatpush.msra.mxu0 %v2061
        %2175 = vmatpush.msra.mxu0 %v2059
        %2176 = vmatpush.msra.mxu0 %v2057
        %2177 = vmatpush.msra.mxu0 %v2055
        %2178 = vmatpush.msra.mxu0 %v2053
        %2179 = vmatpush.msra.mxu0 %v2051
        %2180 = vmatpush.msra.mxu0 %v2049
        %2181 = vmatpush.msra.mxu0 %v2047
        %2182 = vmatpush.msra.mxu0 %v2045
        %2183 = vmatpush.msra.mxu0 %v2043
        %2184 = vmatpush.msra.mxu0 %v2041
        %2185 = vmatmul.f32.gmra.mxu0 %v2105
        %v2186 = vpop.f32.mrf.mxu0
        %v2187 = vadd.f32 0.0, %v2186
        %2188 = vmatmul.f32.gmra.mxu0 %v2107
        %v2189 = vpop.f32.mrf.mxu0
        %v2190 = vadd.f32 0.0, %v2189
        %2191 = vmatmul.f32.gmra.mxu0 %v2109
        %v2192 = vpop.f32.mrf.mxu0
        %v2193 = vadd.f32 0.0, %v2192
        %2194 = vmatmul.f32.gmra.mxu0 %v2111
        %v2195 = vpop.f32.mrf.mxu0
        %v2196 = vadd.f32 0.0, %v2195
        %2197 = vmatmul.f32.gmra.mxu0 %v2113
        %v2198 = vpop.f32.mrf.mxu0
        %v2199 = vadd.f32 0.0, %v2198
        %2200 = vmatmul.f32.gmra.mxu0 %v2115
        %v2201 = vpop.f32.mrf.mxu0
        %v2202 = vadd.f32 0.0, %v2201
        %2203 = vmatmul.f32.gmra.mxu0 %v2117
        %v2204 = vpop.f32.mrf.mxu0
        %v2205 = vadd.f32 0.0, %v2204
        %2206 = vmatmul.f32.gmra.mxu0 %v2119
        %v2207 = vpop.f32.mrf.mxu0
        %v2208 = vadd.f32 0.0, %v2207
        %2209 = vmatmul.f32.gmra.mxu0 %v2121
        %v2210 = vpop.f32.mrf.mxu0
        %v2211 = vadd.f32 0.0, %v2210
        %2212 = vmatmul.f32.gmra.mxu0 %v2123
        %v2213 = vpop.f32.mrf.mxu0
        %v2214 = vadd.f32 0.0, %v2213
        %2215 = vmatmul.f32.gmra.mxu0 %v2125
        %v2216 = vpop.f32.mrf.mxu0
        %v2217 = vadd.f32 0.0, %v2216
        %2218 = vmatmul.f32.gmra.mxu0 %v2127
        %v2219 = vpop.f32.mrf.mxu0
        %v2220 = vadd.f32 0.0, %v2219
        %2221 = vmatmul.f32.gmra.mxu0 %v2129
        %v2222 = vpop.f32.mrf.mxu0
        %v2223 = vadd.f32 0.0, %v2222
        %2224 = vmatmul.f32.gmra.mxu0 %v2131
        %v2225 = vpop.f32.mrf.mxu0
        %v2226 = vadd.f32 0.0, %v2225
        %2227 = vmatmul.f32.gmra.mxu0 %v2133
        %v2228 = vpop.f32.mrf.mxu0
        %v2229 = vadd.f32 0.0, %v2228
        %2230 = vmatmul.f32.gmra.mxu0 %v2135
        %v2231 = vpop.f32.mrf.mxu0
        %v2232 = vadd.f32 0.0, %v2231
        %2233 = vdwg.mxu0
        %2234 = vmatpush.msra.mxu0 %v2103
        %2235 = vmatpush.msra.mxu0 %v2101
        %2236 = vmatpush.msra.mxu0 %v2099
        %2237 = vmatpush.msra.mxu0 %v2097
        %2238 = vmatpush.msra.mxu0 %v2095
        %2239 = vmatpush.msra.mxu0 %v2093
        %2240 = vmatpush.msra.mxu0 %v2091
        %2241 = vmatpush.msra.mxu0 %v2089
        %2242 = vmatpush.msra.mxu0 %v2087
        %2243 = vmatpush.msra.mxu0 %v2085
        %2244 = vmatpush.msra.mxu0 %v2083
        %2245 = vmatpush.msra.mxu0 %v2081
        %2246 = vmatpush.msra.mxu0 %v2079
        %2247 = vmatpush.msra.mxu0 %v2077
        %2248 = vmatpush.msra.mxu0 %v2075
        %2249 = vmatpush.msra.mxu0 %v2073
        %2250 = vmatmul.f32.gmra.mxu0 %v2106
        %v2251 = vpop.f32.mrf.mxu0
        %v2252 = vadd.f32 %v2187, %v2251
        %2253 = vmatmul.f32.gmra.mxu0 %v2108
        %v2254 = vpop.f32.mrf.mxu0
        %v2255 = vadd.f32 %v2190, %v2254
        %2256 = vmatmul.f32.gmra.mxu0 %v2110
        %v2257 = vpop.f32.mrf.mxu0
        %v2258 = vadd.f32 %v2193, %v2257
        %2259 = vmatmul.f32.gmra.mxu0 %v2112
        %v2260 = vpop.f32.mrf.mxu0
        %v2261 = vadd.f32 %v2196, %v2260
        %2262 = vmatmul.f32.gmra.mxu0 %v2114
        %v2263 = vpop.f32.mrf.mxu0
        %v2264 = vadd.f32 %v2199, %v2263
        %2265 = vmatmul.f32.gmra.mxu0 %v2116
        %v2266 = vpop.f32.mrf.mxu0
        %v2267 = vadd.f32 %v2202, %v2266
        %2268 = vmatmul.f32.gmra.mxu0 %v2118
        %v2269 = vpop.f32.mrf.mxu0
        %v2270 = vadd.f32 %v2205, %v2269
        %2271 = vmatmul.f32.gmra.mxu0 %v2120
        %v2272 = vpop.f32.mrf.mxu0
        %v2273 = vadd.f32 %v2208, %v2272
        %2274 = vmatmul.f32.gmra.mxu0 %v2122
        %v2275 = vpop.f32.mrf.mxu0
        %v2276 = vadd.f32 %v2211, %v2275
        %2277 = vmatmul.f32.gmra.mxu0 %v2124
        %v2278 = vpop.f32.mrf.mxu0
        %v2279 = vadd.f32 %v2214, %v2278
        %2280 = vmatmul.f32.gmra.mxu0 %v2126
        %v2281 = vpop.f32.mrf.mxu0
        %v2282 = vadd.f32 %v2217, %v2281
        %2283 = vmatmul.f32.gmra.mxu0 %v2128
        %v2284 = vpop.f32.mrf.mxu0
        %v2285 = vadd.f32 %v2220, %v2284
        %2286 = vmatmul.f32.gmra.mxu0 %v2130
        %v2287 = vpop.f32.mrf.mxu0
        %v2288 = vadd.f32 %v2223, %v2287
        %2289 = vmatmul.f32.gmra.mxu0 %v2132
        %v2290 = vpop.f32.mrf.mxu0
        %v2291 = vadd.f32 %v2226, %v2290
        %2292 = vmatmul.f32.gmra.mxu0 %v2134
        %v2293 = vpop.f32.mrf.mxu0
        %v2294 = vadd.f32 %v2229, %v2293
        %2295 = vmatmul.f32.gmra.mxu0 %v2136
        %v2296 = vpop.f32.mrf.mxu0
        %v2297 = vadd.f32 %v2232, %v2296
        %2298 = vdwg.mxu0
        %2299 = vmatpush.msra.mxu0 %v2072
        %2300 = vmatpush.msra.mxu0 %v2070
        %2301 = vmatpush.msra.mxu0 %v2068
        %2302 = vmatpush.msra.mxu0 %v2066
        %2303 = vmatpush.msra.mxu0 %v2064
        %2304 = vmatpush.msra.mxu0 %v2062
        %2305 = vmatpush.msra.mxu0 %v2060
        %2306 = vmatpush.msra.mxu0 %v2058
        %2307 = vmatpush.msra.mxu0 %v2056
        %2308 = vmatpush.msra.mxu0 %v2054
        %2309 = vmatpush.msra.mxu0 %v2052
        %2310 = vmatpush.msra.mxu0 %v2050
        %2311 = vmatpush.msra.mxu0 %v2048
        %2312 = vmatpush.msra.mxu0 %v2046
        %2313 = vmatpush.msra.mxu0 %v2044
        %2314 = vmatpush.msra.mxu0 %v2042
        %2315 = vmatmul.f32.gmra.mxu0 %v2105
        %v2316 = vpop.f32.mrf.mxu0
        %v2317 = vadd.f32 0.0, %v2316
        %2318 = vmatmul.f32.gmra.mxu0 %v2107
        %v2319 = vpop.f32.mrf.mxu0
        %v2320 = vadd.f32 0.0, %v2319
        %2321 = vmatmul.f32.gmra.mxu0 %v2109
        %v2322 = vpop.f32.mrf.mxu0
        %v2323 = vadd.f32 0.0, %v2322
        %2324 = vmatmul.f32.gmra.mxu0 %v2111
        %v2325 = vpop.f32.mrf.mxu0
        %v2326 = vadd.f32 0.0, %v2325
        %2327 = vmatmul.f32.gmra.mxu0 %v2113
        %v2328 = vpop.f32.mrf.mxu0
        %v2329 = vadd.f32 0.0, %v2328
        %2330 = vmatmul.f32.gmra.mxu0 %v2115
        %v2331 = vpop.f32.mrf.mxu0
        %v2332 = vadd.f32 0.0, %v2331
        %2333 = vmatmul.f32.gmra.mxu0 %v2117
        %v2334 = vpop.f32.mrf.mxu0
        %v2335 = vadd.f32 0.0, %v2334
        %2336 = vmatmul.f32.gmra.mxu0 %v2119
        %v2337 = vpop.f32.mrf.mxu0
        %v2338 = vadd.f32 0.0, %v2337
        %2339 = vmatmul.f32.gmra.mxu0 %v2121
        %v2340 = vpop.f32.mrf.mxu0
        %v2341 = vadd.f32 0.0, %v2340
        %2342 = vmatmul.f32.gmra.mxu0 %v2123
        %v2343 = vpop.f32.mrf.mxu0
        %v2344 = vadd.f32 0.0, %v2343
        %2345 = vmatmul.f32.gmra.mxu0 %v2125
        %v2346 = vpop.f32.mrf.mxu0
        %v2347 = vadd.f32 0.0, %v2346
        %2348 = vmatmul.f32.gmra.mxu0 %v2127
        %v2349 = vpop.f32.mrf.mxu0
        %v2350 = vadd.f32 0.0, %v2349
        %2351 = vmatmul.f32.gmra.mxu0 %v2129
        %v2352 = vpop.f32.mrf.mxu0
        %v2353 = vadd.f32 0.0, %v2352
        %2354 = vmatmul.f32.gmra.mxu0 %v2131
        %v2355 = vpop.f32.mrf.mxu0
        %v2356 = vadd.f32 0.0, %v2355
        %2357 = vmatmul.f32.gmra.mxu0 %v2133
        %v2358 = vpop.f32.mrf.mxu0
        %v2359 = vadd.f32 0.0, %v2358
        %2360 = vmatmul.f32.gmra.mxu0 %v2135
        %v2361 = vpop.f32.mrf.mxu0
        %v2362 = vadd.f32 0.0, %v2361
        %2363 = vdwg.mxu0
        %2364 = vmatpush.msra.mxu0 %v2104
        %2365 = vmatpush.msra.mxu0 %v2102
        %2366 = vmatpush.msra.mxu0 %v2100
        %2367 = vmatpush.msra.mxu0 %v2098
        %2368 = vmatpush.msra.mxu0 %v2096
        %2369 = vmatpush.msra.mxu0 %v2094
        %2370 = vmatpush.msra.mxu0 %v2092
        %2371 = vmatpush.msra.mxu0 %v2090
        %2372 = vmatpush.msra.mxu0 %v2088
        %2373 = vmatpush.msra.mxu0 %v2086
        %2374 = vmatpush.msra.mxu0 %v2084
        %2375 = vmatpush.msra.mxu0 %v2082
        %2376 = vmatpush.msra.mxu0 %v2080
        %2377 = vmatpush.msra.mxu0 %v2078
        %2378 = vmatpush.msra.mxu0 %v2076
        %2379 = vmatpush.msra.mxu0 %v2074
        %2380 = vmatmul.f32.gmra.mxu0 %v2106
        %v2381 = vpop.f32.mrf.mxu0
        %v2382 = vadd.f32 %v2317, %v2381
        %2383 = vmatmul.f32.gmra.mxu0 %v2108
        %v2384 = vpop.f32.mrf.mxu0
        %v2385 = vadd.f32 %v2320, %v2384
        %2386 = vmatmul.f32.gmra.mxu0 %v2110
        %v2387 = vpop.f32.mrf.mxu0
        %v2388 = vadd.f32 %v2323, %v2387
        %2389 = vmatmul.f32.gmra.mxu0 %v2112
        %v2390 = vpop.f32.mrf.mxu0
        %v2391 = vadd.f32 %v2326, %v2390
        %2392 = vmatmul.f32.gmra.mxu0 %v2114
        %v2393 = vpop.f32.mrf.mxu0
        %v2394 = vadd.f32 %v2329, %v2393
        %2395 = vmatmul.f32.gmra.mxu0 %v2116
        %v2396 = vpop.f32.mrf.mxu0
        %v2397 = vadd.f32 %v2332, %v2396
        %2398 = vmatmul.f32.gmra.mxu0 %v2118
        %v2399 = vpop.f32.mrf.mxu0
        %v2400 = vadd.f32 %v2335, %v2399
        %2401 = vmatmul.f32.gmra.mxu0 %v2120
        %v2402 = vpop.f32.mrf.mxu0
        %v2403 = vadd.f32 %v2338, %v2402
        %2404 = vmatmul.f32.gmra.mxu0 %v2122
        %v2405 = vpop.f32.mrf.mxu0
        %v2406 = vadd.f32 %v2341, %v2405
        %2407 = vmatmul.f32.gmra.mxu0 %v2124
        %v2408 = vpop.f32.mrf.mxu0
        %v2409 = vadd.f32 %v2344, %v2408
        %2410 = vmatmul.f32.gmra.mxu0 %v2126
        %v2411 = vpop.f32.mrf.mxu0
        %v2412 = vadd.f32 %v2347, %v2411
        %2413 = vmatmul.f32.gmra.mxu0 %v2128
        %v2414 = vpop.f32.mrf.mxu0
        %v2415 = vadd.f32 %v2350, %v2414
        %2416 = vmatmul.f32.gmra.mxu0 %v2130
        %v2417 = vpop.f32.mrf.mxu0
        %v2418 = vadd.f32 %v2353, %v2417
        %2419 = vmatmul.f32.gmra.mxu0 %v2132
        %v2420 = vpop.f32.mrf.mxu0
        %v2421 = vadd.f32 %v2356, %v2420
        %2422 = vmatmul.f32.gmra.mxu0 %v2134
        %v2423 = vpop.f32.mrf.mxu0
        %v2424 = vadd.f32 %v2359, %v2423
        %2425 = vmatmul.f32.gmra.mxu0 %v2136
        %v2426 = vpop.f32.mrf.mxu0
        %v2427 = vadd.f32 %v2362, %v2426
        %2428 = vdwg.mxu0
        %v2429 = vadd.f32 %v2137, %v2252
        %v2430 = vadd.f32 %v2138, %v2382
        %v2431 = vadd.f32 %v2139, %v2255
        %v2432 = vadd.f32 %v2140, %v2385
        %v2433 = vadd.f32 %v2141, %v2258
        %v2434 = vadd.f32 %v2142, %v2388
        %v2435 = vadd.f32 %v2143, %v2261
        %v2436 = vadd.f32 %v2144, %v2391
        %v2437 = vadd.f32 %v2145, %v2264
        %v2438 = vadd.f32 %v2146, %v2394
        %v2439 = vadd.f32 %v2147, %v2267
        %v2440 = vadd.f32 %v2148, %v2397
        %v2441 = vadd.f32 %v2149, %v2270
        %v2442 = vadd.f32 %v2150, %v2400
        %v2443 = vadd.f32 %v2151, %v2273
        %v2444 = vadd.f32 %v2152, %v2403
        %v2445 = vadd.f32 %v2153, %v2276
        %v2446 = vadd.f32 %v2154, %v2406
        %v2447 = vadd.f32 %v2155, %v2279
        %v2448 = vadd.f32 %v2156, %v2409
        %v2449 = vadd.f32 %v2157, %v2282
        %v2450 = vadd.f32 %v2158, %v2412
        %v2451 = vadd.f32 %v2159, %v2285
        %v2452 = vadd.f32 %v2160, %v2415
        %v2453 = vadd.f32 %v2161, %v2288
        %v2454 = vadd.f32 %v2162, %v2418
        %v2455 = vadd.f32 %v2163, %v2291
        %v2456 = vadd.f32 %v2164, %v2421
        %v2457 = vadd.f32 %v2165, %v2294
        %v2458 = vadd.f32 %v2166, %v2424
        %v2459 = vadd.f32 %v2167, %v2297
        %v2460 = vadd.f32 %v2168, %v2427
        %2461 = vst [vmem:[#allocation2] sm:$0xff] %v2429
        %2462 = vst [vmem:[#allocation2 + $0x8] sm:$0xff] %v2430
        %2463 = vst [vmem:[#allocation2 + $0x10] sm:$0xff] %v2431
        %2464 = vst [vmem:[#allocation2 + $0x18] sm:$0xff] %v2432
        %2465 = vst [vmem:[#allocation2 + $0x20] sm:$0xff] %v2433
        %2466 = vst [vmem:[#allocation2 + $0x28] sm:$0xff] %v2434
        %2467 = vst [vmem:[#allocation2 + $0x30] sm:$0xff] %v2435
        %2468 = vst [vmem:[#allocation2 + $0x38] sm:$0xff] %v2436
        %2469 = vst [vmem:[#allocation2 + $0x40] sm:$0xff] %v2437
        %2470 = vst [vmem:[#allocation2 + $0x48] sm:$0xff] %v2438
        %2471 = vst [vmem:[#allocation2 + $0x50] sm:$0xff] %v2439
        %2472 = vst [vmem:[#allocation2 + $0x58] sm:$0xff] %v2440
        %2473 = vst [vmem:[#allocation2 + $0x60] sm:$0xff] %v2441
        %2474 = vst [vmem:[#allocation2 + $0x68] sm:$0xff] %v2442
        %2475 = vst [vmem:[#allocation2 + $0x70] sm:$0xff] %v2443
        %2476 = vst [vmem:[#allocation2 + $0x78] sm:$0xff] %v2444
        %2477 = vst [vmem:[#allocation2 + $0x80] sm:$0xff] %v2445
        %2478 = vst [vmem:[#allocation2 + $0x88] sm:$0xff] %v2446
        %2479 = vst [vmem:[#allocation2 + $0x90] sm:$0xff] %v2447
        %2480 = vst [vmem:[#allocation2 + $0x98] sm:$0xff] %v2448
        %2481 = vst [vmem:[#allocation2 + $0xa0] sm:$0xff] %v2449
        %2482 = vst [vmem:[#allocation2 + $0xa8] sm:$0xff] %v2450
        %2483 = vst [vmem:[#allocation2 + $0xb0] sm:$0xff] %v2451
        %2484 = vst [vmem:[#allocation2 + $0xb8] sm:$0xff] %v2452
        %2485 = vst [vmem:[#allocation2 + $0xc0] sm:$0xff] %v2453
        %2486 = vst [vmem:[#allocation2 + $0xc8] sm:$0xff] %v2454
        %2487 = vst [vmem:[#allocation2 + $0xd0] sm:$0xff] %v2455
        %2488 = vst [vmem:[#allocation2 + $0xd8] sm:$0xff] %v2456
        %2489 = vst [vmem:[#allocation2 + $0xe0] sm:$0xff] %v2457
        %2490 = vst [vmem:[#allocation2 + $0xe8] sm:$0xff] %v2458
        %2491 = vst [vmem:[#allocation2 + $0xf0] sm:$0xff] %v2459
        %2492 = vst [vmem:[#allocation2 + $0xf8] sm:$0xff] %v2460
        %p2493 = scmp.eq.s32.totalorder %s30, 1
        // Predicated region
        $region61: #{tpu_custom_call.1} parent=47 // pred_check
          %p2494 = pneg %p2493
        $region62: #{tpu_custom_call.1} parent=47 // pred_check_branch
          %2496 = sbr.rel (%p2494) target = $region64
        $region63: #{tpu_custom_call.1} parent=47 // pred_region
          %v2497 = vld [vmem:[#allocation2] sm:$0xff]
          %v2498 = vld [vmem:[#allocation2 + $0x8] sm:$0xff]
          %v2499 = vld [vmem:[#allocation2 + $0x10] sm:$0xff]
          %v2500 = vld [vmem:[#allocation2 + $0x18] sm:$0xff]
          %v2501 = vld [vmem:[#allocation2 + $0x20] sm:$0xff]
          %v2502 = vld [vmem:[#allocation2 + $0x28] sm:$0xff]
          %v2503 = vld [vmem:[#allocation2 + $0x30] sm:$0xff]
          %v2504 = vld [vmem:[#allocation2 + $0x38] sm:$0xff]
          %v2505 = vld [vmem:[#allocation2 + $0x40] sm:$0xff]
          %v2506 = vld [vmem:[#allocation2 + $0x48] sm:$0xff]
          %v2507 = vld [vmem:[#allocation2 + $0x50] sm:$0xff]
          %v2508 = vld [vmem:[#allocation2 + $0x58] sm:$0xff]
          %v2509 = vld [vmem:[#allocation2 + $0x60] sm:$0xff]
          %v2510 = vld [vmem:[#allocation2 + $0x68] sm:$0xff]
          %v2511 = vld [vmem:[#allocation2 + $0x70] sm:$0xff]
          %v2512 = vld [vmem:[#allocation2 + $0x78] sm:$0xff]
          %v2513 = vld [vmem:[#allocation2 + $0x80] sm:$0xff]
          %v2514 = vld [vmem:[#allocation2 + $0x88] sm:$0xff]
          %v2515 = vld [vmem:[#allocation2 + $0x90] sm:$0xff]
          %v2516 = vld [vmem:[#allocation2 + $0x98] sm:$0xff]
          %v2517 = vld [vmem:[#allocation2 + $0xa0] sm:$0xff]
          %v2518 = vld [vmem:[#allocation2 + $0xa8] sm:$0xff]
          %v2519 = vld [vmem:[#allocation2 + $0xb0] sm:$0xff]
          %v2520 = vld [vmem:[#allocation2 + $0xb8] sm:$0xff]
          %v2521 = vld [vmem:[#allocation2 + $0xc0] sm:$0xff]
          %v2522 = vld [vmem:[#allocation2 + $0xc8] sm:$0xff]
          %v2523 = vld [vmem:[#allocation2 + $0xd0] sm:$0xff]
          %v2524 = vld [vmem:[#allocation2 + $0xd8] sm:$0xff]
          %v2525 = vld [vmem:[#allocation2 + $0xe0] sm:$0xff]
          %v2526 = vld [vmem:[#allocation2 + $0xe8] sm:$0xff]
          %v2527 = vld [vmem:[#allocation2 + $0xf0] sm:$0xff]
          %v2528 = vld [vmem:[#allocation2 + $0xf8] sm:$0xff]
          %v2529 = vadd.f32 %v2497, %v2498
          %2530 = vadd.xlane.f32.xlu0 %v2529
          %v2531 = vpop.xlane.xlu0 %2530
          %v2532 = vadd.f32 %v2499, %v2500
          %2533 = vadd.xlane.f32.xlu0 %v2532
          %v2534 = vpop.xlane.xlu0 %2533
          %v2535 = vadd.f32 %v2501, %v2502
          %2536 = vadd.xlane.f32.xlu0 %v2535
          %v2537 = vpop.xlane.xlu0 %2536
          %v2538 = vadd.f32 %v2503, %v2504
          %2539 = vadd.xlane.f32.xlu0 %v2538
          %v2540 = vpop.xlane.xlu0 %2539
          %v2541 = vadd.f32 %v2505, %v2506
          %2542 = vadd.xlane.f32.xlu0 %v2541
          %v2543 = vpop.xlane.xlu0 %2542
          %v2544 = vadd.f32 %v2507, %v2508
          %2545 = vadd.xlane.f32.xlu0 %v2544
          %v2546 = vpop.xlane.xlu0 %2545
          %v2547 = vadd.f32 %v2509, %v2510
          %2548 = vadd.xlane.f32.xlu0 %v2547
          %v2549 = vpop.xlane.xlu0 %2548
          %v2550 = vadd.f32 %v2511, %v2512
          %2551 = vadd.xlane.f32.xlu0 %v2550
          %v2552 = vpop.xlane.xlu0 %2551
          %v2553 = vadd.f32 %v2513, %v2514
          %2554 = vadd.xlane.f32.xlu0 %v2553
          %v2555 = vpop.xlane.xlu0 %2554
          %v2556 = vadd.f32 %v2515, %v2516
          %2557 = vadd.xlane.f32.xlu0 %v2556
          %v2558 = vpop.xlane.xlu0 %2557
          %v2559 = vadd.f32 %v2517, %v2518
          %2560 = vadd.xlane.f32.xlu0 %v2559
          %v2561 = vpop.xlane.xlu0 %2560
          %v2562 = vadd.f32 %v2519, %v2520
          %2563 = vadd.xlane.f32.xlu0 %v2562
          %v2564 = vpop.xlane.xlu0 %2563
          %v2565 = vadd.f32 %v2521, %v2522
          %2566 = vadd.xlane.f32.xlu0 %v2565
          %v2567 = vpop.xlane.xlu0 %2566
          %v2568 = vadd.f32 %v2523, %v2524
          %2569 = vadd.xlane.f32.xlu0 %v2568
          %v2570 = vpop.xlane.xlu0 %2569
          %v2571 = vadd.f32 %v2525, %v2526
          %2572 = vadd.xlane.f32.xlu0 %v2571
          %v2573 = vpop.xlane.xlu0 %2572
          %v2574 = vadd.f32 %v2527, %v2528
          %2575 = vadd.xlane.f32.xlu0 %v2574
          %v2576 = vpop.xlane.xlu0 %2575
          %v2577 = vmul.f32 %v2531, 0.00390625
          %v2578 = vmul.f32 %v2534, 0.00390625
          %v2579 = vmul.f32 %v2537, 0.00390625
          %v2580 = vmul.f32 %v2540, 0.00390625
          %v2581 = vmul.f32 %v2543, 0.00390625
          %v2582 = vmul.f32 %v2546, 0.00390625
          %v2583 = vmul.f32 %v2549, 0.00390625
          %v2584 = vmul.f32 %v2552, 0.00390625
          %v2585 = vmul.f32 %v2555, 0.00390625
          %v2586 = vmul.f32 %v2558, 0.00390625
          %v2587 = vmul.f32 %v2561, 0.00390625
          %v2588 = vmul.f32 %v2564, 0.00390625
          %v2589 = vmul.f32 %v2567, 0.00390625
          %v2590 = vmul.f32 %v2570, 0.00390625
          %v2591 = vmul.f32 %v2573, 0.00390625
          %v2592 = vmul.f32 %v2576, 0.00390625
          %v2593 = vsub.f32 %v2497, %v2577
          %v2594 = vsub.f32 %v2498, %v2577
          %v2595 = vsub.f32 %v2499, %v2578
          %v2596 = vsub.f32 %v2500, %v2578
          %v2597 = vsub.f32 %v2501, %v2579
          %v2598 = vsub.f32 %v2502, %v2579
          %v2599 = vsub.f32 %v2503, %v2580
          %v2600 = vsub.f32 %v2504, %v2580
          %v2601 = vsub.f32 %v2505, %v2581
          %v2602 = vsub.f32 %v2506, %v2581
          %v2603 = vsub.f32 %v2507, %v2582
          %v2604 = vsub.f32 %v2508, %v2582
          %v2605 = vsub.f32 %v2509, %v2583
          %v2606 = vsub.f32 %v2510, %v2583
          %v2607 = vsub.f32 %v2511, %v2584
          %v2608 = vsub.f32 %v2512, %v2584
          %v2609 = vsub.f32 %v2513, %v2585
          %v2610 = vsub.f32 %v2514, %v2585
          %v2611 = vsub.f32 %v2515, %v2586
          %v2612 = vsub.f32 %v2516, %v2586
          %v2613 = vsub.f32 %v2517, %v2587
          %v2614 = vsub.f32 %v2518, %v2587
          %v2615 = vsub.f32 %v2519, %v2588
          %v2616 = vsub.f32 %v2520, %v2588
          %v2617 = vsub.f32 %v2521, %v2589
          %v2618 = vsub.f32 %v2522, %v2589
          %v2619 = vsub.f32 %v2523, %v2590
          %v2620 = vsub.f32 %v2524, %v2590
          %v2621 = vsub.f32 %v2525, %v2591
          %v2622 = vsub.f32 %v2526, %v2591
          %v2623 = vsub.f32 %v2527, %v2592
          %v2624 = vsub.f32 %v2528, %v2592
          %v2625 = vmul.f32 %v2593, %v2593
          %v2626 = vmul.f32 %v2594, %v2594
          %v2627 = vmul.f32 %v2595, %v2595
          %v2628 = vmul.f32 %v2596, %v2596
          %v2629 = vmul.f32 %v2597, %v2597
          %v2630 = vmul.f32 %v2598, %v2598
          %v2631 = vmul.f32 %v2599, %v2599
          %v2632 = vmul.f32 %v2600, %v2600
          %v2633 = vmul.f32 %v2601, %v2601
          %v2634 = vmul.f32 %v2602, %v2602
          %v2635 = vmul.f32 %v2603, %v2603
          %v2636 = vmul.f32 %v2604, %v2604
          %v2637 = vmul.f32 %v2605, %v2605
          %v2638 = vmul.f32 %v2606, %v2606
          %v2639 = vmul.f32 %v2607, %v2607
          %v2640 = vmul.f32 %v2608, %v2608
          %v2641 = vmul.f32 %v2609, %v2609
          %v2642 = vmul.f32 %v2610, %v2610
          %v2643 = vmul.f32 %v2611, %v2611
          %v2644 = vmul.f32 %v2612, %v2612
          %v2645 = vmul.f32 %v2613, %v2613
          %v2646 = vmul.f32 %v2614, %v2614
          %v2647 = vmul.f32 %v2615, %v2615
          %v2648 = vmul.f32 %v2616, %v2616
          %v2649 = vmul.f32 %v2617, %v2617
          %v2650 = vmul.f32 %v2618, %v2618
          %v2651 = vmul.f32 %v2619, %v2619
          %v2652 = vmul.f32 %v2620, %v2620
          %v2653 = vmul.f32 %v2621, %v2621
          %v2654 = vmul.f32 %v2622, %v2622
          %v2655 = vmul.f32 %v2623, %v2623
          %v2656 = vmul.f32 %v2624, %v2624
          %v2657 = vadd.f32 %v2625, %v2626
          %2658 = vadd.xlane.f32.xlu0 %v2657
          %v2659 = vpop.xlane.xlu0 %2658
          %v2660 = vadd.f32 %v2627, %v2628
          %2661 = vadd.xlane.f32.xlu0 %v2660
          %v2662 = vpop.xlane.xlu0 %2661
          %v2663 = vadd.f32 %v2629, %v2630
          %2664 = vadd.xlane.f32.xlu0 %v2663
          %v2665 = vpop.xlane.xlu0 %2664
          %v2666 = vadd.f32 %v2631, %v2632
          %2667 = vadd.xlane.f32.xlu0 %v2666
          %v2668 = vpop.xlane.xlu0 %2667
          %v2669 = vadd.f32 %v2633, %v2634
          %2670 = vadd.xlane.f32.xlu0 %v2669
          %v2671 = vpop.xlane.xlu0 %2670
          %v2672 = vadd.f32 %v2635, %v2636
          %2673 = vadd.xlane.f32.xlu0 %v2672
          %v2674 = vpop.xlane.xlu0 %2673
          %v2675 = vadd.f32 %v2637, %v2638
          %2676 = vadd.xlane.f32.xlu0 %v2675
          %v2677 = vpop.xlane.xlu0 %2676
          %v2678 = vadd.f32 %v2639, %v2640
          %2679 = vadd.xlane.f32.xlu0 %v2678
          %v2680 = vpop.xlane.xlu0 %2679
          %v2681 = vadd.f32 %v2641, %v2642
          %2682 = vadd.xlane.f32.xlu0 %v2681
          %v2683 = vpop.xlane.xlu0 %2682
          %v2684 = vadd.f32 %v2643, %v2644
          %2685 = vadd.xlane.f32.xlu0 %v2684
          %v2686 = vpop.xlane.xlu0 %2685
          %v2687 = vadd.f32 %v2645, %v2646
          %2688 = vadd.xlane.f32.xlu0 %v2687
          %v2689 = vpop.xlane.xlu0 %2688
          %v2690 = vadd.f32 %v2647, %v2648
          %2691 = vadd.xlane.f32.xlu0 %v2690
          %v2692 = vpop.xlane.xlu0 %2691
          %v2693 = vadd.f32 %v2649, %v2650
          %2694 = vadd.xlane.f32.xlu0 %v2693
          %v2695 = vpop.xlane.xlu0 %2694
          %v2696 = vadd.f32 %v2651, %v2652
          %2697 = vadd.xlane.f32.xlu0 %v2696
          %v2698 = vpop.xlane.xlu0 %2697
          %v2699 = vadd.f32 %v2653, %v2654
          %2700 = vadd.xlane.f32.xlu0 %v2699
          %v2701 = vpop.xlane.xlu0 %2700
          %v2702 = vadd.f32 %v2655, %v2656
          %2703 = vadd.xlane.f32.xlu0 %v2702
          %v2704 = vpop.xlane.xlu0 %2703
          %v2705 = vmul.f32 %v2659, 0.00390625
          %v2706 = vmul.f32 %v2662, 0.00390625
          %v2707 = vmul.f32 %v2665, 0.00390625
          %v2708 = vmul.f32 %v2668, 0.00390625
          %v2709 = vmul.f32 %v2671, 0.00390625
          %v2710 = vmul.f32 %v2674, 0.00390625
          %v2711 = vmul.f32 %v2677, 0.00390625
          %v2712 = vmul.f32 %v2680, 0.00390625
          %v2713 = vmul.f32 %v2683, 0.00390625
          %v2714 = vmul.f32 %v2686, 0.00390625
          %v2715 = vmul.f32 %v2689, 0.00390625
          %v2716 = vmul.f32 %v2692, 0.00390625
          %v2717 = vmul.f32 %v2695, 0.00390625
          %v2718 = vmul.f32 %v2698, 0.00390625
          %v2719 = vmul.f32 %v2701, 0.00390625
          %v2720 = vmul.f32 %v2704, 0.00390625
          %v2721 = vadd.f32 %v2705, 1e-05
          %v2722 = vadd.f32 %v2706, 1e-05
          %v2723 = vadd.f32 %v2707, 1e-05
          %v2724 = vadd.f32 %v2708, 1e-05
          %v2725 = vadd.f32 %v2709, 1e-05
          %v2726 = vadd.f32 %v2710, 1e-05
          %v2727 = vadd.f32 %v2711, 1e-05
          %v2728 = vadd.f32 %v2712, 1e-05
          %v2729 = vadd.f32 %v2713, 1e-05
          %v2730 = vadd.f32 %v2714, 1e-05
          %v2731 = vadd.f32 %v2715, 1e-05
          %v2732 = vadd.f32 %v2716, 1e-05
          %v2733 = vadd.f32 %v2717, 1e-05
          %v2734 = vadd.f32 %v2718, 1e-05
          %v2735 = vadd.f32 %v2719, 1e-05
          %v2736 = vadd.f32 %v2720, 1e-05
          %v2737 = vrsqrt.pop %v2721
          %v2738 = vmul.f32 %v2737, %v2721
          %v2739 = vmul.f32 %v2738, %v2737
          %v2740 = vmul.f32 0.5, %v2739
          %v2741 = vsub.f32 1.5, %v2740
          %v2742 = vmul.f32 %v2737, %v2741
          %vm2743 = vweird.f32 %v2721
          %vm2744 = vweird.f32 %v2737
          %vm2745 = vmor %vm2743, %vm2744
          %v2746 = vsel %vm2745, %v2737, %v2742
          %v2747 = vrsqrt.pop %v2722
          %v2748 = vmul.f32 %v2747, %v2722
          %v2749 = vmul.f32 %v2748, %v2747
          %v2750 = vmul.f32 0.5, %v2749
          %v2751 = vsub.f32 1.5, %v2750
          %v2752 = vmul.f32 %v2747, %v2751
          %vm2753 = vweird.f32 %v2722
          %vm2754 = vweird.f32 %v2747
          %vm2755 = vmor %vm2753, %vm2754
          %v2756 = vsel %vm2755, %v2747, %v2752
          %v2757 = vrsqrt.pop %v2723
          %v2758 = vmul.f32 %v2757, %v2723
          %v2759 = vmul.f32 %v2758, %v2757
          %v2760 = vmul.f32 0.5, %v2759
          %v2761 = vsub.f32 1.5, %v2760
          %v2762 = vmul.f32 %v2757, %v2761
          %vm2763 = vweird.f32 %v2723
          %vm2764 = vweird.f32 %v2757
          %vm2765 = vmor %vm2763, %vm2764
          %v2766 = vsel %vm2765, %v2757, %v2762
          %v2767 = vrsqrt.pop %v2724
          %v2768 = vmul.f32 %v2767, %v2724
          %v2769 = vmul.f32 %v2768, %v2767
          %v2770 = vmul.f32 0.5, %v2769
          %v2771 = vsub.f32 1.5, %v2770
          %v2772 = vmul.f32 %v2767, %v2771
          %vm2773 = vweird.f32 %v2724
          %vm2774 = vweird.f32 %v2767
          %vm2775 = vmor %vm2773, %vm2774
          %v2776 = vsel %vm2775, %v2767, %v2772
          %v2777 = vrsqrt.pop %v2725
          %v2778 = vmul.f32 %v2777, %v2725
          %v2779 = vmul.f32 %v2778, %v2777
          %v2780 = vmul.f32 0.5, %v2779
          %v2781 = vsub.f32 1.5, %v2780
          %v2782 = vmul.f32 %v2777, %v2781
          %vm2783 = vweird.f32 %v2725
          %vm2784 = vweird.f32 %v2777
          %vm2785 = vmor %vm2783, %vm2784
          %v2786 = vsel %vm2785, %v2777, %v2782
          %v2787 = vrsqrt.pop %v2726
          %v2788 = vmul.f32 %v2787, %v2726
          %v2789 = vmul.f32 %v2788, %v2787
          %v2790 = vmul.f32 0.5, %v2789
          %v2791 = vsub.f32 1.5, %v2790
          %v2792 = vmul.f32 %v2787, %v2791
          %vm2793 = vweird.f32 %v2726
          %vm2794 = vweird.f32 %v2787
          %vm2795 = vmor %vm2793, %vm2794
          %v2796 = vsel %vm2795, %v2787, %v2792
          %v2797 = vrsqrt.pop %v2727
          %v2798 = vmul.f32 %v2797, %v2727
          %v2799 = vmul.f32 %v2798, %v2797
          %v2800 = vmul.f32 0.5, %v2799
          %v2801 = vsub.f32 1.5, %v2800
          %v2802 = vmul.f32 %v2797, %v2801
          %vm2803 = vweird.f32 %v2727
          %vm2804 = vweird.f32 %v2797
          %vm2805 = vmor %vm2803, %vm2804
          %v2806 = vsel %vm2805, %v2797, %v2802
          %v2807 = vrsqrt.pop %v2728
          %v2808 = vmul.f32 %v2807, %v2728
          %v2809 = vmul.f32 %v2808, %v2807
          %v2810 = vmul.f32 0.5, %v2809
          %v2811 = vsub.f32 1.5, %v2810
          %v2812 = vmul.f32 %v2807, %v2811
          %vm2813 = vweird.f32 %v2728
          %vm2814 = vweird.f32 %v2807
          %vm2815 = vmor %vm2813, %vm2814
          %v2816 = vsel %vm2815, %v2807, %v2812
          %v2817 = vrsqrt.pop %v2729
          %v2818 = vmul.f32 %v2817, %v2729
          %v2819 = vmul.f32 %v2818, %v2817
          %v2820 = vmul.f32 0.5, %v2819
          %v2821 = vsub.f32 1.5, %v2820
          %v2822 = vmul.f32 %v2817, %v2821
          %vm2823 = vweird.f32 %v2729
          %vm2824 = vweird.f32 %v2817
          %vm2825 = vmor %vm2823, %vm2824
          %v2826 = vsel %vm2825, %v2817, %v2822
          %v2827 = vrsqrt.pop %v2730
          %v2828 = vmul.f32 %v2827, %v2730
          %v2829 = vmul.f32 %v2828, %v2827
          %v2830 = vmul.f32 0.5, %v2829
          %v2831 = vsub.f32 1.5, %v2830
          %v2832 = vmul.f32 %v2827, %v2831
          %vm2833 = vweird.f32 %v2730
          %vm2834 = vweird.f32 %v2827
          %vm2835 = vmor %vm2833, %vm2834
          %v2836 = vsel %vm2835, %v2827, %v2832
          %v2837 = vrsqrt.pop %v2731
          %v2838 = vmul.f32 %v2837, %v2731
          %v2839 = vmul.f32 %v2838, %v2837
          %v2840 = vmul.f32 0.5, %v2839
          %v2841 = vsub.f32 1.5, %v2840
          %v2842 = vmul.f32 %v2837, %v2841
          %vm2843 = vweird.f32 %v2731
          %vm2844 = vweird.f32 %v2837
          %vm2845 = vmor %vm2843, %vm2844
          %v2846 = vsel %vm2845, %v2837, %v2842
          %v2847 = vrsqrt.pop %v2732
          %v2848 = vmul.f32 %v2847, %v2732
          %v2849 = vmul.f32 %v2848, %v2847
          %v2850 = vmul.f32 0.5, %v2849
          %v2851 = vsub.f32 1.5, %v2850
          %v2852 = vmul.f32 %v2847, %v2851
          %vm2853 = vweird.f32 %v2732
          %vm2854 = vweird.f32 %v2847
          %vm2855 = vmor %vm2853, %vm2854
          %v2856 = vsel %vm2855, %v2847, %v2852
          %v2857 = vrsqrt.pop %v2733
          %v2858 = vmul.f32 %v2857, %v2733
          %v2859 = vmul.f32 %v2858, %v2857
          %v2860 = vmul.f32 0.5, %v2859
          %v2861 = vsub.f32 1.5, %v2860
          %v2862 = vmul.f32 %v2857, %v2861
          %vm2863 = vweird.f32 %v2733
          %vm2864 = vweird.f32 %v2857
          %vm2865 = vmor %vm2863, %vm2864
          %v2866 = vsel %vm2865, %v2857, %v2862
          %v2867 = vrsqrt.pop %v2734
          %v2868 = vmul.f32 %v2867, %v2734
          %v2869 = vmul.f32 %v2868, %v2867
          %v2870 = vmul.f32 0.5, %v2869
          %v2871 = vsub.f32 1.5, %v2870
          %v2872 = vmul.f32 %v2867, %v2871
          %vm2873 = vweird.f32 %v2734
          %vm2874 = vweird.f32 %v2867
          %vm2875 = vmor %vm2873, %vm2874
          %v2876 = vsel %vm2875, %v2867, %v2872
          %v2877 = vrsqrt.pop %v2735
          %v2878 = vmul.f32 %v2877, %v2735
          %v2879 = vmul.f32 %v2878, %v2877
          %v2880 = vmul.f32 0.5, %v2879
          %v2881 = vsub.f32 1.5, %v2880
          %v2882 = vmul.f32 %v2877, %v2881
          %vm2883 = vweird.f32 %v2735
          %vm2884 = vweird.f32 %v2877
          %vm2885 = vmor %vm2883, %vm2884
          %v2886 = vsel %vm2885, %v2877, %v2882
          %v2887 = vrsqrt.pop %v2736
          %v2888 = vmul.f32 %v2887, %v2736
          %v2889 = vmul.f32 %v2888, %v2887
          %v2890 = vmul.f32 0.5, %v2889
          %v2891 = vsub.f32 1.5, %v2890
          %v2892 = vmul.f32 %v2887, %v2891
          %vm2893 = vweird.f32 %v2736
          %vm2894 = vweird.f32 %v2887
          %vm2895 = vmor %vm2893, %vm2894
          %v2896 = vsel %vm2895, %v2887, %v2892
          %v2897 = vld [vmem:[%s460] sm:$0xff]
          %v2898 = vld [vmem:[%s460 + $0x8] sm:$0xff]
          %v2899 = vld [vmem:[%s460 + $0x10] sm:$0xff]
          %v2900 = vld [vmem:[%s460 + $0x18] sm:$0xff]
          %v2901 = vld [vmem:[%s460 + $0x20] sm:$0xff]
          %v2902 = vld [vmem:[%s460 + $0x28] sm:$0xff]
          %v2903 = vld [vmem:[%s460 + $0x30] sm:$0xff]
          %v2904 = vld [vmem:[%s460 + $0x38] sm:$0xff]
          %v2905 = vld [vmem:[%s460 + $0x40] sm:$0xff]
          %v2906 = vld [vmem:[%s460 + $0x48] sm:$0xff]
          %v2907 = vld [vmem:[%s460 + $0x50] sm:$0xff]
          %v2908 = vld [vmem:[%s460 + $0x58] sm:$0xff]
          %v2909 = vld [vmem:[%s460 + $0x60] sm:$0xff]
          %v2910 = vld [vmem:[%s460 + $0x68] sm:$0xff]
          %v2911 = vld [vmem:[%s460 + $0x70] sm:$0xff]
          %v2912 = vld [vmem:[%s460 + $0x78] sm:$0xff]
          %v2913 = vmul.f32 %v2746, %v2897
          %v2914 = vmul.f32 %v2756, %v2898
          %v2915 = vmul.f32 %v2766, %v2899
          %v2916 = vmul.f32 %v2776, %v2900
          %v2917 = vmul.f32 %v2786, %v2901
          %v2918 = vmul.f32 %v2796, %v2902
          %v2919 = vmul.f32 %v2806, %v2903
          %v2920 = vmul.f32 %v2816, %v2904
          %v2921 = vmul.f32 %v2826, %v2905
          %v2922 = vmul.f32 %v2836, %v2906
          %v2923 = vmul.f32 %v2846, %v2907
          %v2924 = vmul.f32 %v2856, %v2908
          %v2925 = vmul.f32 %v2866, %v2909
          %v2926 = vmul.f32 %v2876, %v2910
          %v2927 = vmul.f32 %v2886, %v2911
          %v2928 = vmul.f32 %v2896, %v2912
          %v2929 = vld [vmem:[%s466] sm:$0xff]
          %v2930 = vld [vmem:[%s466 + $0x8] sm:$0xff]
          %v2931 = vld [vmem:[%s466 + $0x10] sm:$0xff]
          %v2932 = vld [vmem:[%s466 + $0x18] sm:$0xff]
          %v2933 = vld [vmem:[%s466 + $0x20] sm:$0xff]
          %v2934 = vld [vmem:[%s466 + $0x28] sm:$0xff]
          %v2935 = vld [vmem:[%s466 + $0x30] sm:$0xff]
          %v2936 = vld [vmem:[%s466 + $0x38] sm:$0xff]
          %v2937 = vld [vmem:[%s466 + $0x40] sm:$0xff]
          %v2938 = vld [vmem:[%s466 + $0x48] sm:$0xff]
          %v2939 = vld [vmem:[%s466 + $0x50] sm:$0xff]
          %v2940 = vld [vmem:[%s466 + $0x58] sm:$0xff]
          %v2941 = vld [vmem:[%s466 + $0x60] sm:$0xff]
          %v2942 = vld [vmem:[%s466 + $0x68] sm:$0xff]
          %v2943 = vld [vmem:[%s466 + $0x70] sm:$0xff]
          %v2944 = vld [vmem:[%s466 + $0x78] sm:$0xff]
          %v2945 = vmul.f32 %v2577, %v2913
          %v2946 = vmul.f32 %v2578, %v2914
          %v2947 = vmul.f32 %v2579, %v2915
          %v2948 = vmul.f32 %v2580, %v2916
          %v2949 = vmul.f32 %v2581, %v2917
          %v2950 = vmul.f32 %v2582, %v2918
          %v2951 = vmul.f32 %v2583, %v2919
          %v2952 = vmul.f32 %v2584, %v2920
          %v2953 = vmul.f32 %v2585, %v2921
          %v2954 = vmul.f32 %v2586, %v2922
          %v2955 = vmul.f32 %v2587, %v2923
          %v2956 = vmul.f32 %v2588, %v2924
          %v2957 = vmul.f32 %v2589, %v2925
          %v2958 = vmul.f32 %v2590, %v2926
          %v2959 = vmul.f32 %v2591, %v2927
          %v2960 = vmul.f32 %v2592, %v2928
          %v2961 = vsub.f32 %v2929, %v2945
          %v2962 = vsub.f32 %v2930, %v2946
          %v2963 = vsub.f32 %v2931, %v2947
          %v2964 = vsub.f32 %v2932, %v2948
          %v2965 = vsub.f32 %v2933, %v2949
          %v2966 = vsub.f32 %v2934, %v2950
          %v2967 = vsub.f32 %v2935, %v2951
          %v2968 = vsub.f32 %v2936, %v2952
          %v2969 = vsub.f32 %v2937, %v2953
          %v2970 = vsub.f32 %v2938, %v2954
          %v2971 = vsub.f32 %v2939, %v2955
          %v2972 = vsub.f32 %v2940, %v2956
          %v2973 = vsub.f32 %v2941, %v2957
          %v2974 = vsub.f32 %v2942, %v2958
          %v2975 = vsub.f32 %v2943, %v2959
          %v2976 = vsub.f32 %v2944, %v2960
          %2978 = vset.pattern.permute.xlu0 0
          %2979 = vperm.xlu0 %2978, %v2913
          %v2980 = vpop.permute.xlu0 %2979
          %2983 = vset.pattern.permute.xlu0 0
          %2984 = vperm.xlu0 %2983, %v2914
          %v2985 = vpop.permute.xlu0 %2984
          %2988 = vset.pattern.permute.xlu0 0
          %2989 = vperm.xlu0 %2988, %v2915
          %v2990 = vpop.permute.xlu0 %2989
          %2993 = vset.pattern.permute.xlu0 0
          %2994 = vperm.xlu0 %2993, %v2916
          %v2995 = vpop.permute.xlu0 %2994
          %2998 = vset.pattern.permute.xlu0 0
          %2999 = vperm.xlu0 %2998, %v2917
          %v3000 = vpop.permute.xlu0 %2999
          %3003 = vset.pattern.permute.xlu0 0
          %3004 = vperm.xlu0 %3003, %v2918
          %v3005 = vpop.permute.xlu0 %3004
          %3008 = vset.pattern.permute.xlu0 0
          %3009 = vperm.xlu0 %3008, %v2919
          %v3010 = vpop.permute.xlu0 %3009
          %3013 = vset.pattern.permute.xlu0 0
          %3014 = vperm.xlu0 %3013, %v2920
          %v3015 = vpop.permute.xlu0 %3014
          %3018 = vset.pattern.permute.xlu0 0
          %3019 = vperm.xlu0 %3018, %v2921
          %v3020 = vpop.permute.xlu0 %3019
          %3023 = vset.pattern.permute.xlu0 0
          %3024 = vperm.xlu0 %3023, %v2922
          %v3025 = vpop.permute.xlu0 %3024
          %3028 = vset.pattern.permute.xlu0 0
          %3029 = vperm.xlu0 %3028, %v2923
          %v3030 = vpop.permute.xlu0 %3029
          %3033 = vset.pattern.permute.xlu0 0
          %3034 = vperm.xlu0 %3033, %v2924
          %v3035 = vpop.permute.xlu0 %3034
          %3038 = vset.pattern.permute.xlu0 0
          %3039 = vperm.xlu0 %3038, %v2925
          %v3040 = vpop.permute.xlu0 %3039
          %3043 = vset.pattern.permute.xlu0 0
          %3044 = vperm.xlu0 %3043, %v2926
          %v3045 = vpop.permute.xlu0 %3044
          %3048 = vset.pattern.permute.xlu0 0
          %3049 = vperm.xlu0 %3048, %v2927
          %v3050 = vpop.permute.xlu0 %3049
          %3053 = vset.pattern.permute.xlu0 0
          %3054 = vperm.xlu0 %3053, %v2928
          %v3055 = vpop.permute.xlu0 %3054
          %v3057 = vmul.f32 %v2497, %v2980
          %v3058 = vmul.f32 %v2498, %v2980
          %v3059 = vmul.f32 %v2499, %v2985
          %v3060 = vmul.f32 %v2500, %v2985
          %v3061 = vmul.f32 %v2501, %v2990
          %v3062 = vmul.f32 %v2502, %v2990
          %v3063 = vmul.f32 %v2503, %v2995
          %v3064 = vmul.f32 %v2504, %v2995
          %v3065 = vmul.f32 %v2505, %v3000
          %v3066 = vmul.f32 %v2506, %v3000
          %v3067 = vmul.f32 %v2507, %v3005
          %v3068 = vmul.f32 %v2508, %v3005
          %v3069 = vmul.f32 %v2509, %v3010
          %v3070 = vmul.f32 %v2510, %v3010
          %v3071 = vmul.f32 %v2511, %v3015
          %v3072 = vmul.f32 %v2512, %v3015
          %v3073 = vmul.f32 %v2513, %v3020
          %v3074 = vmul.f32 %v2514, %v3020
          %v3075 = vmul.f32 %v2515, %v3025
          %v3076 = vmul.f32 %v2516, %v3025
          %v3077 = vmul.f32 %v2517, %v3030
          %v3078 = vmul.f32 %v2518, %v3030
          %v3079 = vmul.f32 %v2519, %v3035
          %v3080 = vmul.f32 %v2520, %v3035
          %v3081 = vmul.f32 %v2521, %v3040
          %v3082 = vmul.f32 %v2522, %v3040
          %v3083 = vmul.f32 %v2523, %v3045
          %v3084 = vmul.f32 %v2524, %v3045
          %v3085 = vmul.f32 %v2525, %v3050
          %v3086 = vmul.f32 %v2526, %v3050
          %v3087 = vmul.f32 %v2527, %v3055
          %v3088 = vmul.f32 %v2528, %v3055
          %3090 = vset.pattern.permute.xlu0 0
          %3091 = vperm.xlu0 %3090, %v2961
          %v3092 = vpop.permute.xlu0 %3091
          %3095 = vset.pattern.permute.xlu0 0
          %3096 = vperm.xlu0 %3095, %v2962
          %v3097 = vpop.permute.xlu0 %3096
          %3100 = vset.pattern.permute.xlu0 0
          %3101 = vperm.xlu0 %3100, %v2963
          %v3102 = vpop.permute.xlu0 %3101
          %3105 = vset.pattern.permute.xlu0 0
          %3106 = vperm.xlu0 %3105, %v2964
          %v3107 = vpop.permute.xlu0 %3106
          %3110 = vset.pattern.permute.xlu0 0
          %3111 = vperm.xlu0 %3110, %v2965
          %v3112 = vpop.permute.xlu0 %3111
          %3115 = vset.pattern.permute.xlu0 0
          %3116 = vperm.xlu0 %3115, %v2966
          %v3117 = vpop.permute.xlu0 %3116
          %3120 = vset.pattern.permute.xlu0 0
          %3121 = vperm.xlu0 %3120, %v2967
          %v3122 = vpop.permute.xlu0 %3121
          %3125 = vset.pattern.permute.xlu0 0
          %3126 = vperm.xlu0 %3125, %v2968
          %v3127 = vpop.permute.xlu0 %3126
          %3130 = vset.pattern.permute.xlu0 0
          %3131 = vperm.xlu0 %3130, %v2969
          %v3132 = vpop.permute.xlu0 %3131
          %3135 = vset.pattern.permute.xlu0 0
          %3136 = vperm.xlu0 %3135, %v2970
          %v3137 = vpop.permute.xlu0 %3136
          %3140 = vset.pattern.permute.xlu0 0
          %3141 = vperm.xlu0 %3140, %v2971
          %v3142 = vpop.permute.xlu0 %3141
          %3145 = vset.pattern.permute.xlu0 0
          %3146 = vperm.xlu0 %3145, %v2972
          %v3147 = vpop.permute.xlu0 %3146
          %3150 = vset.pattern.permute.xlu0 0
          %3151 = vperm.xlu0 %3150, %v2973
          %v3152 = vpop.permute.xlu0 %3151
          %3155 = vset.pattern.permute.xlu0 0
          %3156 = vperm.xlu0 %3155, %v2974
          %v3157 = vpop.permute.xlu0 %3156
          %3160 = vset.pattern.permute.xlu0 0
          %3161 = vperm.xlu0 %3160, %v2975
          %v3162 = vpop.permute.xlu0 %3161
          %3165 = vset.pattern.permute.xlu0 0
          %3166 = vperm.xlu0 %3165, %v2976
          %v3167 = vpop.permute.xlu0 %3166
          %v3169 = vadd.f32 %v3057, %v3092
          %v3170 = vadd.f32 %v3058, %v3092
          %v3171 = vadd.f32 %v3059, %v3097
          %v3172 = vadd.f32 %v3060, %v3097
          %v3173 = vadd.f32 %v3061, %v3102
          %v3174 = vadd.f32 %v3062, %v3102
          %v3175 = vadd.f32 %v3063, %v3107
          %v3176 = vadd.f32 %v3064, %v3107
          %v3177 = vadd.f32 %v3065, %v3112
          %v3178 = vadd.f32 %v3066, %v3112
          %v3179 = vadd.f32 %v3067, %v3117
          %v3180 = vadd.f32 %v3068, %v3117
          %v3181 = vadd.f32 %v3069, %v3122
          %v3182 = vadd.f32 %v3070, %v3122
          %v3183 = vadd.f32 %v3071, %v3127
          %v3184 = vadd.f32 %v3072, %v3127
          %v3185 = vadd.f32 %v3073, %v3132
          %v3186 = vadd.f32 %v3074, %v3132
          %v3187 = vadd.f32 %v3075, %v3137
          %v3188 = vadd.f32 %v3076, %v3137
          %v3189 = vadd.f32 %v3077, %v3142
          %v3190 = vadd.f32 %v3078, %v3142
          %v3191 = vadd.f32 %v3079, %v3147
          %v3192 = vadd.f32 %v3080, %v3147
          %v3193 = vadd.f32 %v3081, %v3152
          %v3194 = vadd.f32 %v3082, %v3152
          %v3195 = vadd.f32 %v3083, %v3157
          %v3196 = vadd.f32 %v3084, %v3157
          %v3197 = vadd.f32 %v3085, %v3162
          %v3198 = vadd.f32 %v3086, %v3162
          %v3199 = vadd.f32 %v3087, %v3167
          %v3200 = vadd.f32 %v3088, %v3167
          %3201 = vst [vmem:[#allocation8] sm:$0xff] %v3169
          %3202 = vst [vmem:[#allocation8 + $0x8] sm:$0xff] %v3170
          %3203 = vst [vmem:[#allocation8 + $0x10] sm:$0xff] %v3171
          %3204 = vst [vmem:[#allocation8 + $0x18] sm:$0xff] %v3172
          %3205 = vst [vmem:[#allocation8 + $0x20] sm:$0xff] %v3173
          %3206 = vst [vmem:[#allocation8 + $0x28] sm:$0xff] %v3174
          %3207 = vst [vmem:[#allocation8 + $0x30] sm:$0xff] %v3175
          %3208 = vst [vmem:[#allocation8 + $0x38] sm:$0xff] %v3176
          %3209 = vst [vmem:[#allocation8 + $0x40] sm:$0xff] %v3177
          %3210 = vst [vmem:[#allocation8 + $0x48] sm:$0xff] %v3178
          %3211 = vst [vmem:[#allocation8 + $0x50] sm:$0xff] %v3179
          %3212 = vst [vmem:[#allocation8 + $0x58] sm:$0xff] %v3180
          %3213 = vst [vmem:[#allocation8 + $0x60] sm:$0xff] %v3181
          %3214 = vst [vmem:[#allocation8 + $0x68] sm:$0xff] %v3182
          %3215 = vst [vmem:[#allocation8 + $0x70] sm:$0xff] %v3183
          %3216 = vst [vmem:[#allocation8 + $0x78] sm:$0xff] %v3184
          %3217 = vst [vmem:[#allocation8 + $0x80] sm:$0xff] %v3185
          %3218 = vst [vmem:[#allocation8 + $0x88] sm:$0xff] %v3186
          %3219 = vst [vmem:[#allocation8 + $0x90] sm:$0xff] %v3187
          %3220 = vst [vmem:[#allocation8 + $0x98] sm:$0xff] %v3188
          %3221 = vst [vmem:[#allocation8 + $0xa0] sm:$0xff] %v3189
          %3222 = vst [vmem:[#allocation8 + $0xa8] sm:$0xff] %v3190
          %3223 = vst [vmem:[#allocation8 + $0xb0] sm:$0xff] %v3191
          %3224 = vst [vmem:[#allocation8 + $0xb8] sm:$0xff] %v3192
          %3225 = vst [vmem:[#allocation8 + $0xc0] sm:$0xff] %v3193
          %3226 = vst [vmem:[#allocation8 + $0xc8] sm:$0xff] %v3194
          %3227 = vst [vmem:[#allocation8 + $0xd0] sm:$0xff] %v3195
          %3228 = vst [vmem:[#allocation8 + $0xd8] sm:$0xff] %v3196
          %3229 = vst [vmem:[#allocation8 + $0xe0] sm:$0xff] %v3197
          %3230 = vst [vmem:[#allocation8 + $0xe8] sm:$0xff] %v3198
          %3231 = vst [vmem:[#allocation8 + $0xf0] sm:$0xff] %v3199
          %3232 = vst [vmem:[#allocation8 + $0xf8] sm:$0xff] %v3200
        $region64: #{tpu_custom_call.1} parent=47 // pred_fallthru
          _
        // Predicated region
        $region65: #{tpu_custom_call.1} parent=47 // pred_check
          %p3233 = pneg %p239
        $region66: #{tpu_custom_call.1} parent=47 // pred_check_branch
          %3235 = sbr.rel (%p3233) target = $region68
        $region67: #{tpu_custom_call.1} parent=47 // pred_region
          %s3236 = smul.u32 16, %s29
          %3238 = vsyncadd [#allocation5], 0
          %s3239 = smul.addr %s3236, 2
          %s3240 = smul.addr %s3239, 8
          %s3241 = scalar_lea.hbm %s7, %s3240
          %s3242 = sshll.u32 [#allocation8], 4
          %s3243 = int_to_ptr.vmem [resolvable:$true] %s3242
          %s3244 = sshll.u32 %s3241, 4
          %s3245 = int_to_ptr.hbm [resolvable:$true] %s3244
          %3250 = dma.vmem_to_hbm [thread:$0]  %s3243, 4096, %s3245, [#allocation5], 256, 256, 16
        $region68: #{tpu_custom_call.1} parent=47 // pred_fallthru
          _
        // Predicated region
        $region69: #{tpu_custom_call.1} parent=47 // pred_check
          %p3251 = pneg %p239
        $region70: #{tpu_custom_call.1} parent=47 // pred_check_branch
          %3253 = sbr.rel (%p3251) target = $region72
        $region71: #{tpu_custom_call.1} parent=47 // pred_region
          %3255 = dma.done [#allocation5], 4096
        $region72: #{tpu_custom_call.1} parent=47 // pred_fallthru
          _
      $region48: #{tpu_custom_call.1} parent=5 // pred_fallthru
        _
      %p3256 = scmp.le.s32.totalorder 2, %s20
      // Predicated region
      $region73: #{tpu_custom_call.1} parent=5 // pred_check
        %p3257 = pneg %p3256
      $region74: #{tpu_custom_call.1} parent=5 // pred_check_branch
        %3259 = sbr.rel (%p3257) target = $region76
      $region75: #{tpu_custom_call.1} parent=5 // pred_region
        %s3260 = ssub.s32 %s20, 2
      $region76: #{tpu_custom_call.1} parent=5 // pred_fallthru
        _
    $region6: #{tpu_custom_call.1} parent=1 // loop_footer
      %s24 = sadd.s32 1, %s20
    $region7: #{tpu_custom_call.1} parent=1 // loop_footer_branch
      %19 = sbr.rel target = $region3
    $region8: #{tpu_custom_call.1} parent=1 // loop_exit
      _
    %3261 = vsyncpa [#allocation4], 1
    %s3262 = scalar_lea.sflag [#allocation4], 1
    %3263 = vsyncpa %s3262, 1
    %3264 = vsyncpa [#allocation7], 1
    %s3265 = scalar_lea.sflag [#allocation7], 1
    %3266 = vsyncpa %s3265, 1
    %3267 = vsyncpa [#allocation5], 1
    %s3268 = scalar_lea.sflag [#allocation5], 1
    %3269 = vsyncpa %s3268, 1

</llo_original>
